<compile_context>
chip_gen: v5e
topology: v5e:2x2
jax: 0.10.0
libtpu: 0.0.40
codegen_flags: <defaults>
</compile_context>

<pallas_src>
import functools

import numpy as np

import jax
import jax.numpy as jnp
from jax.experimental import pallas as pl
from jax.experimental.pallas import tpu as pltpu

BN_EPS = 1e-5
SUB = 8  # channel (sublane) padding granularity


def _rup(x, m):
    return (x + m - 1) // m * m


def _level_geom(h, w):
    hp, wp = h + 2, w + 2
    r = hp * wp
    return hp, wp, r, _rup(r, 128)


# ============================================================================
# In-kernel compute: pure value math on (Cp, Rpad) tiles.
#   channels -> sublanes, flattened zero-padded (H+2)x(W+2) spatial -> lanes.
# ============================================================================
def _conv3x3(x, w_ref, wp, rp):
    """'same' 3x3 conv: 9 taps packed along K into a single MXU matmul.

    x      : (Cin_p, Rp) f32, spatial border rows/cols already zero.
    w_ref  : (Cout_p, 9*Cin_p) packed weights (tap-major along K).
    return : (Cout_p, Rp) f32, valid at interior positions only.
    """
    taps = []
    for kh in range(3):
        for kw in range(3):
            d = (kh - 1) * wp + (kw - 1)          # flat lane offset of this tap
            # out[q] needs x[q + d]  ->  roll by (-d) mod Rp (XLU lane rotation)
            taps.append(x if d == 0 else pltpu.roll(x, (-d) % rp, axis=1))
    xt = jnp.concatenate(taps, axis=0)            # (9*Cin_p, Rp)
    return jnp.dot(w_ref[...], xt, preferred_element_type=jnp.float32)


def _residual(bp, x, stride, geo_in, geo_out, sel_ref):
    """Fused Residual: relu(BN2(conv2(relu(BN1(conv1(x))))) + downsample(x))."""
    wp_in, rp_in, _ = geo_in
    wp_out, rp_out, mask_out = geo_out

    # conv1 (+ stride-2 realised as full conv followed by a 0/1 selection matmul)
    y1 = _conv3x3(x, bp["w1"], wp_in, rp_in)
    if stride == 2:
        y1 = jnp.dot(y1, sel_ref[...], preferred_element_type=jnp.float32)
    t = jnp.maximum(y1 * bp["s1"][...] + bp["b1"][...], 0.0) * mask_out

    # conv2 (stride 1)
    y2 = _conv3x3(t, bp["w2"], wp_out, rp_out)

    # downsample branch computed AFTER conv2 (review: minimise live values)
    if "wd" in bp:                                # 1x1 conv + BN
        d = jnp.dot(bp["wd"][...], x, preferred_element_type=jnp.float32)
        if stride == 2:
            d = jnp.dot(d, sel_ref[...], preferred_element_type=jnp.float32)
        d = d * bp["sd"][...] + bp["bd"][...]
    else:                                         # identity
        d = x

    # BN2(+conv2 bias) + residual + ReLU; mask keeps the padding border at zero.
    return jnp.maximum(y2 * bp["s2"][...] + bp["b2"][...] + d, 0.0) * mask_out


def _res_layer(layer, x, stride_first, geo_in, geo_out, sel_ref):
    x = _residual(layer[0], x, stride_first, geo_in, geo_out, sel_ref)
    for bp in layer[1:]:
        x = _residual(bp, x, 1, geo_out, geo_out, None)
    return x


def _hourglass(kp, aux, dims, lvl, x):
    wp0, rp0 = dims[lvl]
    wp1, rp1 = dims[lvl + 1]
    m0 = aux["masks"][lvl][...]
    m1 = aux["masks"][lvl + 1][...]
    geo0 = (wp0, rp0, m0)
    geo1 = (wp1, rp1, m1)

    up1 = _res_layer(kp["layer1"], x, 1, geo0, geo0, None)
    y = _res_layer(kp["layer2"], x, 2, geo0, geo1, aux["sel"][lvl])
    if "layer3_hg" in kp:                         # nesting encoded in pytree keys
        y = _hourglass(kp["layer3_hg"], aux, dims, lvl + 1, y)
    else:
        y = _res_layer(kp["layer3_res"], y, 1, geo1, geo1, None)
    y = _res_layer(kp["layer4"], y, 1, geo1, geo1, None)
    # nearest-neighbour 2x upsample as a 0/1 matmul, fused with the final add
    up2 = jnp.dot(y, aux["up"][lvl][...], preferred_element_type=jnp.float32)
    return up1 + up2


def _hg_kernel(treedef, dims, x_ref, *rest):
    o_ref = rest[-1]
    kp, aux = jax.tree_util.tree_unflatten(treedef, list(rest[:-1]))
    x = x_ref[0].astype(jnp.float32)              # (Cp, Rp)
    o_ref[0] = _hourglass(kp, aux, dims, 0, x).astype(o_ref.dtype)


# ============================================================================
# Wrapper: parameter packing + constant masks / selection matrices + pallas_call
# ============================================================================
def _fold_bn(bn, coutp, conv_bias=None):
    gamma, beta, mean, var = bn
    scale = gamma * jax.lax.rsqrt(var + BN_EPS)
    bias = beta - mean * scale
    if conv_bias is not None:
        bias = bias + conv_bias * scale
    c = gamma.shape[0]
    s = jnp.zeros((coutp, 1), jnp.float32).at[:c, 0].set(scale)
    b = jnp.zeros((coutp, 1), jnp.float32).at[:c, 0].set(bias)
    return s, b


def _pack_w3(w, cinp, coutp):
    """(cout, cin, 3, 3) torch-layout -> (coutp, 9*cinp); tap t = kh*3+kw."""
    cout, cin = w.shape[0], w.shape[1]
    wt = jnp.transpose(w, (2, 3, 1, 0)).reshape(9, cin, cout)
    full = jnp.zeros((9, cinp, coutp), jnp.float32).at[:, :cin, :cout].set(wt)
    return jnp.transpose(full, (2, 0, 1)).reshape(coutp, 9 * cinp)


def _pack_w1(w, cinp, coutp):
    cout, cin = w.shape[0], w.shape[1]
    return jnp.zeros((coutp, cinp), jnp.float32).at[:cout, :cin].set(w[:, :, 0, 0])


def _pack_block(p):
    cout, cin = p["w1"].shape[0], p["w1"].shape[1]
    cinp, coutp = _rup(cin, SUB), _rup(cout, SUB)
    s1, b1 = _fold_bn(p["bn1"], coutp)
    s2, b2 = _fold_bn(p["bn2"], coutp, p["b2"])
    bp = {"w1": _pack_w3(p["w1"], cinp, coutp), "s1": s1, "b1": b1,
          "w2": _pack_w3(p["w2"], coutp, coutp), "s2": s2, "b2": b2}
    if "down" in p:
        sd, bd = _fold_bn(p["down"]["bn"], coutp)
        bp["wd"] = _pack_w1(p["down"]["w"], cinp, coutp)
        bp["sd"], bp["bd"] = sd, bd
    return bp


def _pack_hg(p):
    kp = {"layer1": [_pack_block(b) for b in p["layer1"]],
          "layer2": [_pack_block(b) for b in p["layer2"]],
          "layer4": [_pack_block(b) for b in p["layer4"]]}
    if "layer3_hg" in p:
        kp["layer3_hg"] = _pack_hg(p["layer3_hg"])
    else:
        kp["layer3_res"] = [_pack_block(b) for b in p["layer3_res"]]
    return kp


def _depth(p):
    return 1 + (_depth(p["layer3_hg"]) if "layer3_hg" in p else 0)


def _make_mask(h, w):
    """(1, Rp) interior mask: 1 at real pixels, 0 on the pad border / pad lanes."""
    _, wp, _, rp = _level_geom(h, w)
    m = np.zeros((1, rp), np.float32)
    for i in range(1, h + 1):
        m[0, i * wp + 1:i * wp + 1 + w] = 1.0
    return jnp.asarray(m)


def _make_updown(h, w):
    """0/1 matrices mapping level (h,w) <-> level (h//2,w//2) flat layouts."""
    h2, w2 = h // 2, w // 2
    _, wp, _, rp = _level_geom(h, w)
    _, wp2, _, rp2 = _level_geom(h2, w2)
    sel = np.zeros((rp, rp2), np.float32)      # stride-2 subsample (full -> half)
    up = np.zeros((rp2, rp), np.float32)       # 2x nearest upsample (half -> full)
    for a in range(h2):
        for b in range(w2):
            sel[(2 * a + 1) * wp + (2 * b + 1), (a + 1) * wp2 + (b + 1)] = 1.0
    for a in range(h):
        for b in range(w):
            up[(a // 2 + 1) * wp2 + (b // 2 + 1), (a + 1) * wp + (b + 1)] = 1.0
    return jnp.asarray(sel), jnp.asarray(up)


def hourglass_forward(params, x_nchw):
    """Full HourGlass forward in one fused Pallas TPU kernel. NCHW in / NCHW out."""
    n, c0, h0, w0 = x_nchw.shape
    levels = _depth(params)
    assert h0 % (1 << levels) == 0 and w0 % (1 << levels) == 0, \
        "spatial dims must be divisible by 2**levels"

    sizes = [(h0 >> l, w0 >> l) for l in range(levels + 1)]
    dims = tuple((_level_geom(h, w)[1], _level_geom(h, w)[3]) for h, w in sizes)
    aux = {"masks": [_make_mask(h, w) for h, w in sizes], "sel": [], "up": []}
    for h, w in sizes[:-1]:
        s, u = _make_updown(h, w)
        aux["sel"].append(s)
        aux["up"].append(u)

    kp = _pack_hg(params)

    # input -> (N, Cp, Rpad) channels-on-sublanes, flattened padded spatial on lanes
    cp0 = _rup(c0, SUB)
    hp0, wp0, r0, rp0 = _level_geom(h0, w0)
    xf = jnp.pad(x_nchw.astype(jnp.float32),
                 ((0, 0), (0, cp0 - c0), (1, 1), (1, 1)))
    xf = xf.reshape(n, cp0, r0)
    xf = jnp.pad(xf, ((0, 0), (0, 0), (0, rp0 - r0)))

    leaves, treedef = jax.tree_util.tree_flatten((kp, aux))
    assert all(l.ndim == 2 for l in leaves)

    kernel = functools.partial(_hg_kernel, treedef, dims)
    out = pl.pallas_call(
        kernel,
        grid=(n,),
        out_shape=jax.ShapeDtypeStruct((n, cp0, rp0), jnp.float32),
        in_specs=[pl.BlockSpec((1, cp0, rp0), lambda i: (i, 0, 0))]
                 + [pl.BlockSpec(l.shape, lambda i: (0, 0)) for l in leaves],
        out_specs=pl.BlockSpec((1, cp0, rp0), lambda i: (i, 0, 0)),
        compiler_params=pltpu.CompilerParams(
            dimension_semantics=("parallel",),       # batch across TensorCores
            vmem_limit_bytes=32 * 1024 * 1024),
    )(xf, *leaves)

    # strip lane / spatial / channel padding, back to NCHW
    out = out[:, :c0, :r0].reshape(n, c0, hp0, wp0)
    return out[:, :, 1:h0 + 1, 1:w0 + 1]


# ============================================================================
# Deterministic parameter init (PyTorch weight layout) + pure-JAX reference
# ============================================================================
def _init_bn(key, c):
    k1, k2, k3 = jax.random.split(key, 3)
    return (1.0 + 0.1 * jax.random.normal(k1, (c,), jnp.float32),
            0.1 * jax.random.normal(k2, (c,), jnp.float32),
            0.1 * jax.random.normal(k3, (c,), jnp.float32),
            jnp.ones((c,), jnp.float32))


def _init_residual(key, cin, cout, stride):
    ks = jax.random.split(key, 7)
    p = {"w1": 0.2 * jax.random.normal(ks[0], (cout, cin, 3, 3), jnp.float32),
         "bn1": _init_bn(ks[1], cout),
         "w2": 0.2 * jax.random.normal(ks[2], (cout, cout, 3, 3), jnp.float32),
         "b2": 0.1 * jax.random.normal(ks[3], (cout,), jnp.float32),
         "bn2": _init_bn(ks[4], cout)}
    if stride != 1 or cin != cout:
        p["down"] = {"w": 0.2 * jax.random.normal(ks[5], (cout, cin, 1, 1), jnp.float32),
                     "bn": _init_bn(ks[6], cout)}
    return p


def _init_res_layer(key, cin, cout, modules, stride=1):
    ks = jax.random.split(key, modules)
    layers = [_init_residual(ks[0], cin, cout, stride)]
    for i in range(1, modules):
        layers.append(_init_residual(ks[i], cout, cout, 1))
    return layers


def init_hourglass(key, channels, modules):
    assert len(channels) == len(modules)
    n = len(channels) - 1
    cin, cout = channels[0], channels[1]
    ks = jax.random.split(key, 4)
    p = {"layer1": _init_res_layer(ks[0], cin, cin, modules[0]),
         "layer2": _init_res_layer(ks[1], cin, cout, modules[0], stride=2),
         "layer4": _init_res_layer(ks[3], cout, cin, modules[0])}
    if n == 1:
        p["layer3_res"] = _init_res_layer(ks[2], cout, cout, modules[1])
    else:
        p["layer3_hg"] = init_hourglass(ks[2], channels[1:], modules[1:])
    return p


def _conv2d_ref(x, w, stride, bias=None):
    k = w.shape[-1]
    pad = (k - 1) // 2
    y = jax.lax.conv_general_dilated(
        x, w, window_strides=(stride, stride), padding=[(pad, pad), (pad, pad)],
        dimension_numbers=("NCHW", "OIHW", "NCHW"),
        precision=jax.lax.Precision.HIGHEST)
    if bias is not None:
        y = y + bias[None, :, None, None]
    return y


def _bn_ref(x, bn):
    g, b, m, v = bn
    s = g * jax.lax.rsqrt(v + BN_EPS)
    return x * s[None, :, None, None] + (b - m * s)[None, :, None, None]


def _residual_ref(p, x, stride):
    t = jax.nn.relu(_bn_ref(_conv2d_ref(x, p["w1"], stride), p["bn1"]))
    y = _bn_ref(_conv2d_ref(t, p["w2"], 1, p["b2"]), p["bn2"])
    d = _bn_ref(_conv2d_ref(x, p["down"]["w"], stride), p["down"]["bn"]) \
        if "down" in p else x
    return jax.nn.relu(y + d)


def _res_layer_ref(layers, x, stride_first=1):
    x = _residual_ref(layers[0], x, stride_first)
    for p in layers[1:]:
        x = _residual_ref(p, x, 1)
    return x


def hourglass_reference(p, x):
    up1 = _res_layer_ref(p["layer1"], x, 1)
    y = _res_layer_ref(p["layer2"], x, 2)
    if "layer3_hg" in p:
        y = hourglass_reference(p["layer3_hg"], y)
    else:
        y = _res_layer_ref(p["layer3_res"], y, 1)
    y = _res_layer_ref(p["layer4"], y, 1)
    up2 = jnp.repeat(jnp.repeat(y, 2, axis=2), 2, axis=3)   # nearest 2x upsample
    return up1 + up2


# ============================================================================
if __name__ == "__main__":
    channels = [4, 8]        # HourGlass(channels=[4, 8], modules=[1, 1])
    modules = [1, 1]

    key = jax.random.PRNGKey(0)
    k_param, k_in = jax.random.split(key)
    params = init_hourglass(k_param, channels, modules)

    # PyTorch input layout NCHW: (batch=2, channels=4, H=16, W=16)
    x = jax.random.normal(k_in, (2, channels[0], 16, 16), jnp.float32)

    out = jax.jit(hourglass_forward)(params, x)
    jax.block_until_ready(out)
    assert out.shape == x.shape
    assert bool(jnp.all(jnp.isfinite(out)))

    # self-check against a pure-JAX/XLA implementation of the PyTorch module
    ref = jax.jit(hourglass_reference)(params, x)
    rel = float(jnp.max(jnp.abs(out - ref)) / (jnp.max(jnp.abs(ref)) + 1e-6))
    assert rel < 5e-2, f"kernel/reference mismatch: rel={rel}"

    print("KERNEL_OK")
</pallas_src>

<mosaic_0001>
module attributes {stable_mosaic.version = 11 : i64} {
  func.func @_hg_kernel(%arg0: i32, %arg1: memref<1x8x384xf32, #tpu.memory_space<vmem>>, %arg2: memref<8x1xf32, #tpu.memory_space<vmem>>, %arg3: memref<8x1xf32, #tpu.memory_space<vmem>>, %arg4: memref<8x1xf32, #tpu.memory_space<vmem>>, %arg5: memref<8x1xf32, #tpu.memory_space<vmem>>, %arg6: memref<8x72xf32, #tpu.memory_space<vmem>>, %arg7: memref<8x72xf32, #tpu.memory_space<vmem>>, %arg8: memref<8x1xf32, #tpu.memory_space<vmem>>, %arg9: memref<8x1xf32, #tpu.memory_space<vmem>>, %arg10: memref<8x1xf32, #tpu.memory_space<vmem>>, %arg11: memref<8x1xf32, #tpu.memory_space<vmem>>, %arg12: memref<8x1xf32, #tpu.memory_space<vmem>>, %arg13: memref<8x1xf32, #tpu.memory_space<vmem>>, %arg14: memref<8x72xf32, #tpu.memory_space<vmem>>, %arg15: memref<8x72xf32, #tpu.memory_space<vmem>>, %arg16: memref<8x8xf32, #tpu.memory_space<vmem>>, %arg17: memref<8x1xf32, #tpu.memory_space<vmem>>, %arg18: memref<8x1xf32, #tpu.memory_space<vmem>>, %arg19: memref<8x1xf32, #tpu.memory_space<vmem>>, %arg20: memref<8x1xf32, #tpu.memory_space<vmem>>, %arg21: memref<8x72xf32, #tpu.memory_space<vmem>>, %arg22: memref<8x72xf32, #tpu.memory_space<vmem>>, %arg23: memref<8x1xf32, #tpu.memory_space<vmem>>, %arg24: memref<8x1xf32, #tpu.memory_space<vmem>>, %arg25: memref<8x1xf32, #tpu.memory_space<vmem>>, %arg26: memref<8x1xf32, #tpu.memory_space<vmem>>, %arg27: memref<8x1xf32, #tpu.memory_space<vmem>>, %arg28: memref<8x1xf32, #tpu.memory_space<vmem>>, %arg29: memref<8x72xf32, #tpu.memory_space<vmem>>, %arg30: memref<8x72xf32, #tpu.memory_space<vmem>>, %arg31: memref<8x8xf32, #tpu.memory_space<vmem>>, %arg32: memref<1x384xf32, #tpu.memory_space<vmem>>, %arg33: memref<1x128xf32, #tpu.memory_space<vmem>>, %arg34: memref<384x128xf32, #tpu.memory_space<vmem>>, %arg35: memref<128x384xf32, #tpu.memory_space<vmem>>, %arg36: memref<1x8x384xf32, #tpu.memory_space<vmem>>) attributes {dimension_semantics = [#tpu.dimension_semantics<parallel>], iteration_bounds = array<i64: 2>, scalar_prefetch = 0 : i64, scratch_operands = 0 : i64, tpu.core_type = #tpu.core_type<tc>, window_params = [{transform_indices = @transform_0, window_bounds = array<i64: 1, 8, 384>}, {pipeline_mode = #tpu.pipeline_mode<synchronous>, transform_indices = @transform_1, window_bounds = array<i64: 8, 1>}, {pipeline_mode = #tpu.pipeline_mode<synchronous>, transform_indices = @transform_2, window_bounds = array<i64: 8, 1>}, {pipeline_mode = #tpu.pipeline_mode<synchronous>, transform_indices = @transform_3, window_bounds = array<i64: 8, 1>}, {pipeline_mode = #tpu.pipeline_mode<synchronous>, transform_indices = @transform_4, window_bounds = array<i64: 8, 1>}, {pipeline_mode = #tpu.pipeline_mode<synchronous>, transform_indices = @transform_5, window_bounds = array<i64: 8, 72>}, {pipeline_mode = #tpu.pipeline_mode<synchronous>, transform_indices = @transform_6, window_bounds = array<i64: 8, 72>}, {pipeline_mode = #tpu.pipeline_mode<synchronous>, transform_indices = @transform_7, window_bounds = array<i64: 8, 1>}, {pipeline_mode = #tpu.pipeline_mode<synchronous>, transform_indices = @transform_8, window_bounds = array<i64: 8, 1>}, {pipeline_mode = #tpu.pipeline_mode<synchronous>, transform_indices = @transform_9, window_bounds = array<i64: 8, 1>}, {pipeline_mode = #tpu.pipeline_mode<synchronous>, transform_indices = @transform_10, window_bounds = array<i64: 8, 1>}, {pipeline_mode = #tpu.pipeline_mode<synchronous>, transform_indices = @transform_11, window_bounds = array<i64: 8, 1>}, {pipeline_mode = #tpu.pipeline_mode<synchronous>, transform_indices = @transform_12, window_bounds = array<i64: 8, 1>}, {pipeline_mode = #tpu.pipeline_mode<synchronous>, transform_indices = @transform_13, window_bounds = array<i64: 8, 72>}, {pipeline_mode = #tpu.pipeline_mode<synchronous>, transform_indices = @transform_14, window_bounds = array<i64: 8, 72>}, {pipeline_mode = #tpu.pipeline_mode<synchronous>, transform_indices = @transform_15, window_bounds = array<i64: 8, 8>}, {pipeline_mode = #tpu.pipeline_mode<synchronous>, transform_indices = @transform_16, window_bounds = array<i64: 8, 1>}, {pipeline_mode = #tpu.pipeline_mode<synchronous>, transform_indices = @transform_17, window_bounds = array<i64: 8, 1>}, {pipeline_mode = #tpu.pipeline_mode<synchronous>, transform_indices = @transform_18, window_bounds = array<i64: 8, 1>}, {pipeline_mode = #tpu.pipeline_mode<synchronous>, transform_indices = @transform_19, window_bounds = array<i64: 8, 1>}, {pipeline_mode = #tpu.pipeline_mode<synchronous>, transform_indices = @transform_20, window_bounds = array<i64: 8, 72>}, {pipeline_mode = #tpu.pipeline_mode<synchronous>, transform_indices = @transform_21, window_bounds = array<i64: 8, 72>}, {pipeline_mode = #tpu.pipeline_mode<synchronous>, transform_indices = @transform_22, window_bounds = array<i64: 8, 1>}, {pipeline_mode = #tpu.pipeline_mode<synchronous>, transform_indices = @transform_23, window_bounds = array<i64: 8, 1>}, {pipeline_mode = #tpu.pipeline_mode<synchronous>, transform_indices = @transform_24, window_bounds = array<i64: 8, 1>}, {pipeline_mode = #tpu.pipeline_mode<synchronous>, transform_indices = @transform_25, window_bounds = array<i64: 8, 1>}, {pipeline_mode = #tpu.pipeline_mode<synchronous>, transform_indices = @transform_26, window_bounds = array<i64: 8, 1>}, {pipeline_mode = #tpu.pipeline_mode<synchronous>, transform_indices = @transform_27, window_bounds = array<i64: 8, 1>}, {pipeline_mode = #tpu.pipeline_mode<synchronous>, transform_indices = @transform_28, window_bounds = array<i64: 8, 72>}, {pipeline_mode = #tpu.pipeline_mode<synchronous>, transform_indices = @transform_29, window_bounds = array<i64: 8, 72>}, {pipeline_mode = #tpu.pipeline_mode<synchronous>, transform_indices = @transform_30, window_bounds = array<i64: 8, 8>}, {pipeline_mode = #tpu.pipeline_mode<synchronous>, transform_indices = @transform_31, window_bounds = array<i64: 1, 384>}, {pipeline_mode = #tpu.pipeline_mode<synchronous>, transform_indices = @transform_32, window_bounds = array<i64: 1, 128>}, {pipeline_mode = #tpu.pipeline_mode<synchronous>, transform_indices = @transform_33, window_bounds = array<i64: 384, 128>}, {pipeline_mode = #tpu.pipeline_mode<synchronous>, transform_indices = @transform_34, window_bounds = array<i64: 128, 384>}, {transform_indices = @transform_35, window_bounds = array<i64: 1, 8, 384>}]} {
    %c0 = arith.constant 0 : index
    %c0_0 = arith.constant 0 : index
    %c0_1 = arith.constant 0 : index
    %0 = vector.load %arg1[%c0, %c0_0, %c0_1] : memref<1x8x384xf32, #tpu.memory_space<vmem>>, vector<1x8x384xf32>
    %1 = vector.shape_cast %0 : vector<1x8x384xf32> to vector<8x384xf32>
    %c0_2 = arith.constant 0 : index
    %c0_3 = arith.constant 0 : index
    %2 = vector.load %arg32[%c0_2, %c0_3] : memref<1x384xf32, #tpu.memory_space<vmem>>, vector<1x384xf32>
    %c0_4 = arith.constant 0 : index
    %c0_5 = arith.constant 0 : index
    %3 = vector.load %arg33[%c0_4, %c0_5] : memref<1x128xf32, #tpu.memory_space<vmem>>, vector<1x128xf32>
    %c19_i32 = arith.constant 19 : i32
    %4 = tpu.dynamic_rotate %1 by %c19_i32 dim 1 : vector<8x384xf32>, i32 -> vector<8x384xf32>
    %c18_i32 = arith.constant 18 : i32
    %5 = tpu.dynamic_rotate %1 by %c18_i32 dim 1 : vector<8x384xf32>, i32 -> vector<8x384xf32>
    %c17_i32 = arith.constant 17 : i32
    %6 = tpu.dynamic_rotate %1 by %c17_i32 dim 1 : vector<8x384xf32>, i32 -> vector<8x384xf32>
    %c1_i32 = arith.constant 1 : i32
    %7 = tpu.dynamic_rotate %1 by %c1_i32 dim 1 : vector<8x384xf32>, i32 -> vector<8x384xf32>
    %c383_i32 = arith.constant 383 : i32
    %8 = tpu.dynamic_rotate %1 by %c383_i32 dim 1 : vector<8x384xf32>, i32 -> vector<8x384xf32>
    %c367_i32 = arith.constant 367 : i32
    %9 = tpu.dynamic_rotate %1 by %c367_i32 dim 1 : vector<8x384xf32>, i32 -> vector<8x384xf32>
    %c366_i32 = arith.constant 366 : i32
    %10 = tpu.dynamic_rotate %1 by %c366_i32 dim 1 : vector<8x384xf32>, i32 -> vector<8x384xf32>
    %c365_i32 = arith.constant 365 : i32
    %11 = tpu.dynamic_rotate %1 by %c365_i32 dim 1 : vector<8x384xf32>, i32 -> vector<8x384xf32>
    %12 = tpu.concatenate %4, %5, %6, %7, %1, %8, %9, %10, %11 in 0 : vector<8x384xf32>, vector<8x384xf32>, vector<8x384xf32>, vector<8x384xf32>, vector<8x384xf32>, vector<8x384xf32>, vector<8x384xf32>, vector<8x384xf32>, vector<8x384xf32> -> vector<72x384xf32>
    %c0_6 = arith.constant 0 : index
    %c0_7 = arith.constant 0 : index
    %13 = vector.load %arg6[%c0_6, %c0_7] : memref<8x72xf32, #tpu.memory_space<vmem>>, vector<8x72xf32>
    %cst = arith.constant dense<0.000000e+00> : vector<8x384xf32>
    %14 = tpu.matmul %13, %12, %cst {dimension_numbers = #tpu.dot_dimension_numbers<[1], [0], [0], [1], [0, 0, 1, 1], [], []>} : vector<8x72xf32>, vector<72x384xf32>, vector<8x384xf32> -> vector<8x384xf32>
    %c0_8 = arith.constant 0 : index
    %c0_9 = arith.constant 0 : index
    %15 = vector.load %arg4[%c0_8, %c0_9] : memref<8x1xf32, #tpu.memory_space<vmem>>, vector<8x1xf32>
    %16 = vector.broadcast %15 : vector<8x1xf32> to vector<8x384xf32>
    %17 = arith.mulf %14, %16 : vector<8x384xf32>
    %c0_10 = arith.constant 0 : index
    %c0_11 = arith.constant 0 : index
    %18 = vector.load %arg2[%c0_10, %c0_11] : memref<8x1xf32, #tpu.memory_space<vmem>>, vector<8x1xf32>
    %19 = vector.broadcast %18 : vector<8x1xf32> to vector<8x384xf32>
    %20 = arith.addf %17, %19 : vector<8x384xf32>
    %cst_12 = arith.constant 0.000000e+00 : f32
    %21 = vector.broadcast %cst_12 : f32 to vector<8x384xf32>
    %22 = arith.maximumf %20, %21 : vector<8x384xf32>
    %23 = vector.broadcast %2 : vector<1x384xf32> to vector<8x384xf32>
    %24 = arith.mulf %22, %23 : vector<8x384xf32>
    %c19_i32_13 = arith.constant 19 : i32
    %25 = tpu.dynamic_rotate %24 by %c19_i32_13 dim 1 : vector<8x384xf32>, i32 -> vector<8x384xf32>
    %c18_i32_14 = arith.constant 18 : i32
    %26 = tpu.dynamic_rotate %24 by %c18_i32_14 dim 1 : vector<8x384xf32>, i32 -> vector<8x384xf32>
    %c17_i32_15 = arith.constant 17 : i32
    %27 = tpu.dynamic_rotate %24 by %c17_i32_15 dim 1 : vector<8x384xf32>, i32 -> vector<8x384xf32>
    %c1_i32_16 = arith.constant 1 : i32
    %28 = tpu.dynamic_rotate %24 by %c1_i32_16 dim 1 : vector<8x384xf32>, i32 -> vector<8x384xf32>
    %c383_i32_17 = arith.constant 383 : i32
    %29 = tpu.dynamic_rotate %24 by %c383_i32_17 dim 1 : vector<8x384xf32>, i32 -> vector<8x384xf32>
    %c367_i32_18 = arith.constant 367 : i32
    %30 = tpu.dynamic_rotate %24 by %c367_i32_18 dim 1 : vector<8x384xf32>, i32 -> vector<8x384xf32>
    %c366_i32_19 = arith.constant 366 : i32
    %31 = tpu.dynamic_rotate %24 by %c366_i32_19 dim 1 : vector<8x384xf32>, i32 -> vector<8x384xf32>
    %c365_i32_20 = arith.constant 365 : i32
    %32 = tpu.dynamic_rotate %24 by %c365_i32_20 dim 1 : vector<8x384xf32>, i32 -> vector<8x384xf32>
    %33 = tpu.concatenate %25, %26, %27, %28, %24, %29, %30, %31, %32 in 0 : vector<8x384xf32>, vector<8x384xf32>, vector<8x384xf32>, vector<8x384xf32>, vector<8x384xf32>, vector<8x384xf32>, vector<8x384xf32>, vector<8x384xf32>, vector<8x384xf32> -> vector<72x384xf32>
    %c0_21 = arith.constant 0 : index
    %c0_22 = arith.constant 0 : index
    %34 = vector.load %arg7[%c0_21, %c0_22] : memref<8x72xf32, #tpu.memory_space<vmem>>, vector<8x72xf32>
    %cst_23 = arith.constant dense<0.000000e+00> : vector<8x384xf32>
    %35 = tpu.matmul %34, %33, %cst_23 {dimension_numbers = #tpu.dot_dimension_numbers<[1], [0], [0], [1], [0, 0, 1, 1], [], []>} : vector<8x72xf32>, vector<72x384xf32>, vector<8x384xf32> -> vector<8x384xf32>
    %c0_24 = arith.constant 0 : index
    %c0_25 = arith.constant 0 : index
    %36 = vector.load %arg5[%c0_24, %c0_25] : memref<8x1xf32, #tpu.memory_space<vmem>>, vector<8x1xf32>
    %37 = vector.broadcast %36 : vector<8x1xf32> to vector<8x384xf32>
    %38 = arith.mulf %35, %37 : vector<8x384xf32>
    %c0_26 = arith.constant 0 : index
    %c0_27 = arith.constant 0 : index
    %39 = vector.load %arg3[%c0_26, %c0_27] : memref<8x1xf32, #tpu.memory_space<vmem>>, vector<8x1xf32>
    %40 = vector.broadcast %39 : vector<8x1xf32> to vector<8x384xf32>
    %41 = arith.addf %38, %40 : vector<8x384xf32>
    %42 = arith.addf %41, %1 : vector<8x384xf32>
    %cst_28 = arith.constant 0.000000e+00 : f32
    %43 = vector.broadcast %cst_28 : f32 to vector<8x384xf32>
    %44 = arith.maximumf %42, %43 : vector<8x384xf32>
    %45 = vector.broadcast %2 : vector<1x384xf32> to vector<8x384xf32>
    %46 = arith.mulf %44, %45 : vector<8x384xf32>
    %c19_i32_29 = arith.constant 19 : i32
    %47 = tpu.dynamic_rotate %1 by %c19_i32_29 dim 1 : vector<8x384xf32>, i32 -> vector<8x384xf32>
    %c18_i32_30 = arith.constant 18 : i32
    %48 = tpu.dynamic_rotate %1 by %c18_i32_30 dim 1 : vector<8x384xf32>, i32 -> vector<8x384xf32>
    %c17_i32_31 = arith.constant 17 : i32
    %49 = tpu.dynamic_rotate %1 by %c17_i32_31 dim 1 : vector<8x384xf32>, i32 -> vector<8x384xf32>
    %c1_i32_32 = arith.constant 1 : i32
    %50 = tpu.dynamic_rotate %1 by %c1_i32_32 dim 1 : vector<8x384xf32>, i32 -> vector<8x384xf32>
    %c383_i32_33 = arith.constant 383 : i32
    %51 = tpu.dynamic_rotate %1 by %c383_i32_33 dim 1 : vector<8x384xf32>, i32 -> vector<8x384xf32>
    %c367_i32_34 = arith.constant 367 : i32
    %52 = tpu.dynamic_rotate %1 by %c367_i32_34 dim 1 : vector<8x384xf32>, i32 -> vector<8x384xf32>
    %c366_i32_35 = arith.constant 366 : i32
    %53 = tpu.dynamic_rotate %1 by %c366_i32_35 dim 1 : vector<8x384xf32>, i32 -> vector<8x384xf32>
    %c365_i32_36 = arith.constant 365 : i32
    %54 = tpu.dynamic_rotate %1 by %c365_i32_36 dim 1 : vector<8x384xf32>, i32 -> vector<8x384xf32>
    %55 = tpu.concatenate %47, %48, %49, %50, %1, %51, %52, %53, %54 in 0 : vector<8x384xf32>, vector<8x384xf32>, vector<8x384xf32>, vector<8x384xf32>, vector<8x384xf32>, vector<8x384xf32>, vector<8x384xf32>, vector<8x384xf32>, vector<8x384xf32> -> vector<72x384xf32>
    %c0_37 = arith.constant 0 : index
    %c0_38 = arith.constant 0 : index
    %56 = vector.load %arg14[%c0_37, %c0_38] : memref<8x72xf32, #tpu.memory_space<vmem>>, vector<8x72xf32>
    %cst_39 = arith.constant dense<0.000000e+00> : vector<8x384xf32>
    %57 = tpu.matmul %56, %55, %cst_39 {dimension_numbers = #tpu.dot_dimension_numbers<[1], [0], [0], [1], [0, 0, 1, 1], [], []>} : vector<8x72xf32>, vector<72x384xf32>, vector<8x384xf32> -> vector<8x384xf32>
    %c0_40 = arith.constant 0 : index
    %c0_41 = arith.constant 0 : index
    %58 = vector.load %arg34[%c0_40, %c0_41] : memref<384x128xf32, #tpu.memory_space<vmem>>, vector<384x128xf32>
    %cst_42 = arith.constant dense<0.000000e+00> : vector<8x128xf32>
    %59 = tpu.matmul %57, %58, %cst_42 {dimension_numbers = #tpu.dot_dimension_numbers<[1], [0], [0], [1], [0, 0, 1, 1], [], []>} : vector<8x384xf32>, vector<384x128xf32>, vector<8x128xf32> -> vector<8x128xf32>
    %c0_43 = arith.constant 0 : index
    %c0_44 = arith.constant 0 : index
    %60 = vector.load %arg11[%c0_43, %c0_44] : memref<8x1xf32, #tpu.memory_space<vmem>>, vector<8x1xf32>
    %61 = vector.broadcast %60 : vector<8x1xf32> to vector<8x128xf32>
    %62 = arith.mulf %59, %61 : vector<8x128xf32>
    %c0_45 = arith.constant 0 : index
    %c0_46 = arith.constant 0 : index
    %63 = vector.load %arg8[%c0_45, %c0_46] : memref<8x1xf32, #tpu.memory_space<vmem>>, vector<8x1xf32>
    %64 = vector.broadcast %63 : vector<8x1xf32> to vector<8x128xf32>
    %65 = arith.addf %62, %64 : vector<8x128xf32>
    %cst_47 = arith.constant 0.000000e+00 : f32
    %66 = vector.broadcast %cst_47 : f32 to vector<8x128xf32>
    %67 = arith.maximumf %65, %66 : vector<8x128xf32>
    %68 = vector.broadcast %3 : vector<1x128xf32> to vector<8x128xf32>
    %69 = arith.mulf %67, %68 : vector<8x128xf32>
    %c11_i32 = arith.constant 11 : i32
    %70 = tpu.dynamic_rotate %69 by %c11_i32 dim 1 : vector<8x128xf32>, i32 -> vector<8x128xf32>
    %c10_i32 = arith.constant 10 : i32
    %71 = tpu.dynamic_rotate %69 by %c10_i32 dim 1 : vector<8x128xf32>, i32 -> vector<8x128xf32>
    %c9_i32 = arith.constant 9 : i32
    %72 = tpu.dynamic_rotate %69 by %c9_i32 dim 1 : vector<8x128xf32>, i32 -> vector<8x128xf32>
    %c1_i32_48 = arith.constant 1 : i32
    %73 = tpu.dynamic_rotate %69 by %c1_i32_48 dim 1 : vector<8x128xf32>, i32 -> vector<8x128xf32>
    %c127_i32 = arith.constant 127 : i32
    %74 = tpu.dynamic_rotate %69 by %c127_i32 dim 1 : vector<8x128xf32>, i32 -> vector<8x128xf32>
    %c119_i32 = arith.constant 119 : i32
    %75 = tpu.dynamic_rotate %69 by %c119_i32 dim 1 : vector<8x128xf32>, i32 -> vector<8x128xf32>
    %c118_i32 = arith.constant 118 : i32
    %76 = tpu.dynamic_rotate %69 by %c118_i32 dim 1 : vector<8x128xf32>, i32 -> vector<8x128xf32>
    %c117_i32 = arith.constant 117 : i32
    %77 = tpu.dynamic_rotate %69 by %c117_i32 dim 1 : vector<8x128xf32>, i32 -> vector<8x128xf32>
    %78 = tpu.concatenate %70, %71, %72, %73, %69, %74, %75, %76, %77 in 0 : vector<8x128xf32>, vector<8x128xf32>, vector<8x128xf32>, vector<8x128xf32>, vector<8x128xf32>, vector<8x128xf32>, vector<8x128xf32>, vector<8x128xf32>, vector<8x128xf32> -> vector<72x128xf32>
    %c0_49 = arith.constant 0 : index
    %c0_50 = arith.constant 0 : index
    %79 = vector.load %arg15[%c0_49, %c0_50] : memref<8x72xf32, #tpu.memory_space<vmem>>, vector<8x72xf32>
    %cst_51 = arith.constant dense<0.000000e+00> : vector<8x128xf32>
    %80 = tpu.matmul %79, %78, %cst_51 {dimension_numbers = #tpu.dot_dimension_numbers<[1], [0], [0], [1], [0, 0, 1, 1], [], []>} : vector<8x72xf32>, vector<72x128xf32>, vector<8x128xf32> -> vector<8x128xf32>
    %c0_52 = arith.constant 0 : index
    %c0_53 = arith.constant 0 : index
    %81 = vector.load %arg16[%c0_52, %c0_53] : memref<8x8xf32, #tpu.memory_space<vmem>>, vector<8x8xf32>
    %cst_54 = arith.constant dense<0.000000e+00> : vector<8x384xf32>
    %82 = tpu.matmul %81, %1, %cst_54 {dimension_numbers = #tpu.dot_dimension_numbers<[1], [0], [0], [1], [0, 0, 1, 1], [], []>} : vector<8x8xf32>, vector<8x384xf32>, vector<8x384xf32> -> vector<8x384xf32>
    %c0_55 = arith.constant 0 : index
    %c0_56 = arith.constant 0 : index
    %83 = vector.load %arg34[%c0_55, %c0_56] : memref<384x128xf32, #tpu.memory_space<vmem>>, vector<384x128xf32>
    %cst_57 = arith.constant dense<0.000000e+00> : vector<8x128xf32>
    %84 = tpu.matmul %82, %83, %cst_57 {dimension_numbers = #tpu.dot_dimension_numbers<[1], [0], [0], [1], [0, 0, 1, 1], [], []>} : vector<8x384xf32>, vector<384x128xf32>, vector<8x128xf32> -> vector<8x128xf32>
    %c0_58 = arith.constant 0 : index
    %c0_59 = arith.constant 0 : index
    %85 = vector.load %arg13[%c0_58, %c0_59] : memref<8x1xf32, #tpu.memory_space<vmem>>, vector<8x1xf32>
    %86 = vector.broadcast %85 : vector<8x1xf32> to vector<8x128xf32>
    %87 = arith.mulf %84, %86 : vector<8x128xf32>
    %c0_60 = arith.constant 0 : index
    %c0_61 = arith.constant 0 : index
    %88 = vector.load %arg10[%c0_60, %c0_61] : memref<8x1xf32, #tpu.memory_space<vmem>>, vector<8x1xf32>
    %89 = vector.broadcast %88 : vector<8x1xf32> to vector<8x128xf32>
    %90 = arith.addf %87, %89 : vector<8x128xf32>
    %c0_62 = arith.constant 0 : index
    %c0_63 = arith.constant 0 : index
    %91 = vector.load %arg12[%c0_62, %c0_63] : memref<8x1xf32, #tpu.memory_space<vmem>>, vector<8x1xf32>
    %92 = vector.broadcast %91 : vector<8x1xf32> to vector<8x128xf32>
    %93 = arith.mulf %80, %92 : vector<8x128xf32>
    %c0_64 = arith.constant 0 : index
    %c0_65 = arith.constant 0 : index
    %94 = vector.load %arg9[%c0_64, %c0_65] : memref<8x1xf32, #tpu.memory_space<vmem>>, vector<8x1xf32>
    %95 = vector.broadcast %94 : vector<8x1xf32> to vector<8x128xf32>
    %96 = arith.addf %93, %95 : vector<8x128xf32>
    %97 = arith.addf %96, %90 : vector<8x128xf32>
    %cst_66 = arith.constant 0.000000e+00 : f32
    %98 = vector.broadcast %cst_66 : f32 to vector<8x128xf32>
    %99 = arith.maximumf %97, %98 : vector<8x128xf32>
    %100 = vector.broadcast %3 : vector<1x128xf32> to vector<8x128xf32>
    %101 = arith.mulf %99, %100 : vector<8x128xf32>
    %c11_i32_67 = arith.constant 11 : i32
    %102 = tpu.dynamic_rotate %101 by %c11_i32_67 dim 1 : vector<8x128xf32>, i32 -> vector<8x128xf32>
    %c10_i32_68 = arith.constant 10 : i32
    %103 = tpu.dynamic_rotate %101 by %c10_i32_68 dim 1 : vector<8x128xf32>, i32 -> vector<8x128xf32>
    %c9_i32_69 = arith.constant 9 : i32
    %104 = tpu.dynamic_rotate %101 by %c9_i32_69 dim 1 : vector<8x128xf32>, i32 -> vector<8x128xf32>
    %c1_i32_70 = arith.constant 1 : i32
    %105 = tpu.dynamic_rotate %101 by %c1_i32_70 dim 1 : vector<8x128xf32>, i32 -> vector<8x128xf32>
    %c127_i32_71 = arith.constant 127 : i32
    %106 = tpu.dynamic_rotate %101 by %c127_i32_71 dim 1 : vector<8x128xf32>, i32 -> vector<8x128xf32>
    %c119_i32_72 = arith.constant 119 : i32
    %107 = tpu.dynamic_rotate %101 by %c119_i32_72 dim 1 : vector<8x128xf32>, i32 -> vector<8x128xf32>
    %c118_i32_73 = arith.constant 118 : i32
    %108 = tpu.dynamic_rotate %101 by %c118_i32_73 dim 1 : vector<8x128xf32>, i32 -> vector<8x128xf32>
    %c117_i32_74 = arith.constant 117 : i32
    %109 = tpu.dynamic_rotate %101 by %c117_i32_74 dim 1 : vector<8x128xf32>, i32 -> vector<8x128xf32>
    %110 = tpu.concatenate %102, %103, %104, %105, %101, %106, %107, %108, %109 in 0 : vector<8x128xf32>, vector<8x128xf32>, vector<8x128xf32>, vector<8x128xf32>, vector<8x128xf32>, vector<8x128xf32>, vector<8x128xf32>, vector<8x128xf32>, vector<8x128xf32> -> vector<72x128xf32>
    %c0_75 = arith.constant 0 : index
    %c0_76 = arith.constant 0 : index
    %111 = vector.load %arg21[%c0_75, %c0_76] : memref<8x72xf32, #tpu.memory_space<vmem>>, vector<8x72xf32>
    %cst_77 = arith.constant dense<0.000000e+00> : vector<8x128xf32>
    %112 = tpu.matmul %111, %110, %cst_77 {dimension_numbers = #tpu.dot_dimension_numbers<[1], [0], [0], [1], [0, 0, 1, 1], [], []>} : vector<8x72xf32>, vector<72x128xf32>, vector<8x128xf32> -> vector<8x128xf32>
    %c0_78 = arith.constant 0 : index
    %c0_79 = arith.constant 0 : index
    %113 = vector.load %arg19[%c0_78, %c0_79] : memref<8x1xf32, #tpu.memory_space<vmem>>, vector<8x1xf32>
    %114 = vector.broadcast %113 : vector<8x1xf32> to vector<8x128xf32>
    %115 = arith.mulf %112, %114 : vector<8x128xf32>
    %c0_80 = arith.constant 0 : index
    %c0_81 = arith.constant 0 : index
    %116 = vector.load %arg17[%c0_80, %c0_81] : memref<8x1xf32, #tpu.memory_space<vmem>>, vector<8x1xf32>
    %117 = vector.broadcast %116 : vector<8x1xf32> to vector<8x128xf32>
    %118 = arith.addf %115, %117 : vector<8x128xf32>
    %cst_82 = arith.constant 0.000000e+00 : f32
    %119 = vector.broadcast %cst_82 : f32 to vector<8x128xf32>
    %120 = arith.maximumf %118, %119 : vector<8x128xf32>
    %121 = vector.broadcast %3 : vector<1x128xf32> to vector<8x128xf32>
    %122 = arith.mulf %120, %121 : vector<8x128xf32>
    %c11_i32_83 = arith.constant 11 : i32
    %123 = tpu.dynamic_rotate %122 by %c11_i32_83 dim 1 : vector<8x128xf32>, i32 -> vector<8x128xf32>
    %c10_i32_84 = arith.constant 10 : i32
    %124 = tpu.dynamic_rotate %122 by %c10_i32_84 dim 1 : vector<8x128xf32>, i32 -> vector<8x128xf32>
    %c9_i32_85 = arith.constant 9 : i32
    %125 = tpu.dynamic_rotate %122 by %c9_i32_85 dim 1 : vector<8x128xf32>, i32 -> vector<8x128xf32>
    %c1_i32_86 = arith.constant 1 : i32
    %126 = tpu.dynamic_rotate %122 by %c1_i32_86 dim 1 : vector<8x128xf32>, i32 -> vector<8x128xf32>
    %c127_i32_87 = arith.constant 127 : i32
    %127 = tpu.dynamic_rotate %122 by %c127_i32_87 dim 1 : vector<8x128xf32>, i32 -> vector<8x128xf32>
    %c119_i32_88 = arith.constant 119 : i32
    %128 = tpu.dynamic_rotate %122 by %c119_i32_88 dim 1 : vector<8x128xf32>, i32 -> vector<8x128xf32>
    %c118_i32_89 = arith.constant 118 : i32
    %129 = tpu.dynamic_rotate %122 by %c118_i32_89 dim 1 : vector<8x128xf32>, i32 -> vector<8x128xf32>
    %c117_i32_90 = arith.constant 117 : i32
    %130 = tpu.dynamic_rotate %122 by %c117_i32_90 dim 1 : vector<8x128xf32>, i32 -> vector<8x128xf32>
    %131 = tpu.concatenate %123, %124, %125, %126, %122, %127, %128, %129, %130 in 0 : vector<8x128xf32>, vector<8x128xf32>, vector<8x128xf32>, vector<8x128xf32>, vector<8x128xf32>, vector<8x128xf32>, vector<8x128xf32>, vector<8x128xf32>, vector<8x128xf32> -> vector<72x128xf32>
    %c0_91 = arith.constant 0 : index
    %c0_92 = arith.constant 0 : index
    %132 = vector.load %arg22[%c0_91, %c0_92] : memref<8x72xf32, #tpu.memory_space<vmem>>, vector<8x72xf32>
    %cst_93 = arith.constant dense<0.000000e+00> : vector<8x128xf32>
    %133 = tpu.matmul %132, %131, %cst_93 {dimension_numbers = #tpu.dot_dimension_numbers<[1], [0], [0], [1], [0, 0, 1, 1], [], []>} : vector<8x72xf32>, vector<72x128xf32>, vector<8x128xf32> -> vector<8x128xf32>
    %c0_94 = arith.constant 0 : index
    %c0_95 = arith.constant 0 : index
    %134 = vector.load %arg20[%c0_94, %c0_95] : memref<8x1xf32, #tpu.memory_space<vmem>>, vector<8x1xf32>
    %135 = vector.broadcast %134 : vector<8x1xf32> to vector<8x128xf32>
    %136 = arith.mulf %133, %135 : vector<8x128xf32>
    %c0_96 = arith.constant 0 : index
    %c0_97 = arith.constant 0 : index
    %137 = vector.load %arg18[%c0_96, %c0_97] : memref<8x1xf32, #tpu.memory_space<vmem>>, vector<8x1xf32>
    %138 = vector.broadcast %137 : vector<8x1xf32> to vector<8x128xf32>
    %139 = arith.addf %136, %138 : vector<8x128xf32>
    %140 = arith.addf %139, %101 : vector<8x128xf32>
    %cst_98 = arith.constant 0.000000e+00 : f32
    %141 = vector.broadcast %cst_98 : f32 to vector<8x128xf32>
    %142 = arith.maximumf %140, %141 : vector<8x128xf32>
    %143 = vector.broadcast %3 : vector<1x128xf32> to vector<8x128xf32>
    %144 = arith.mulf %142, %143 : vector<8x128xf32>
    %c11_i32_99 = arith.constant 11 : i32
    %145 = tpu.dynamic_rotate %144 by %c11_i32_99 dim 1 : vector<8x128xf32>, i32 -> vector<8x128xf32>
    %c10_i32_100 = arith.constant 10 : i32
    %146 = tpu.dynamic_rotate %144 by %c10_i32_100 dim 1 : vector<8x128xf32>, i32 -> vector<8x128xf32>
    %c9_i32_101 = arith.constant 9 : i32
    %147 = tpu.dynamic_rotate %144 by %c9_i32_101 dim 1 : vector<8x128xf32>, i32 -> vector<8x128xf32>
    %c1_i32_102 = arith.constant 1 : i32
    %148 = tpu.dynamic_rotate %144 by %c1_i32_102 dim 1 : vector<8x128xf32>, i32 -> vector<8x128xf32>
    %c127_i32_103 = arith.constant 127 : i32
    %149 = tpu.dynamic_rotate %144 by %c127_i32_103 dim 1 : vector<8x128xf32>, i32 -> vector<8x128xf32>
    %c119_i32_104 = arith.constant 119 : i32
    %150 = tpu.dynamic_rotate %144 by %c119_i32_104 dim 1 : vector<8x128xf32>, i32 -> vector<8x128xf32>
    %c118_i32_105 = arith.constant 118 : i32
    %151 = tpu.dynamic_rotate %144 by %c118_i32_105 dim 1 : vector<8x128xf32>, i32 -> vector<8x128xf32>
    %c117_i32_106 = arith.constant 117 : i32
    %152 = tpu.dynamic_rotate %144 by %c117_i32_106 dim 1 : vector<8x128xf32>, i32 -> vector<8x128xf32>
    %153 = tpu.concatenate %145, %146, %147, %148, %144, %149, %150, %151, %152 in 0 : vector<8x128xf32>, vector<8x128xf32>, vector<8x128xf32>, vector<8x128xf32>, vector<8x128xf32>, vector<8x128xf32>, vector<8x128xf32>, vector<8x128xf32>, vector<8x128xf32> -> vector<72x128xf32>
    %c0_107 = arith.constant 0 : index
    %c0_108 = arith.constant 0 : index
    %154 = vector.load %arg29[%c0_107, %c0_108] : memref<8x72xf32, #tpu.memory_space<vmem>>, vector<8x72xf32>
    %cst_109 = arith.constant dense<0.000000e+00> : vector<8x128xf32>
    %155 = tpu.matmul %154, %153, %cst_109 {dimension_numbers = #tpu.dot_dimension_numbers<[1], [0], [0], [1], [0, 0, 1, 1], [], []>} : vector<8x72xf32>, vector<72x128xf32>, vector<8x128xf32> -> vector<8x128xf32>
    %c0_110 = arith.constant 0 : index
    %c0_111 = arith.constant 0 : index
    %156 = vector.load %arg26[%c0_110, %c0_111] : memref<8x1xf32, #tpu.memory_space<vmem>>, vector<8x1xf32>
    %157 = vector.broadcast %156 : vector<8x1xf32> to vector<8x128xf32>
    %158 = arith.mulf %155, %157 : vector<8x128xf32>
    %c0_112 = arith.constant 0 : index
    %c0_113 = arith.constant 0 : index
    %159 = vector.load %arg23[%c0_112, %c0_113] : memref<8x1xf32, #tpu.memory_space<vmem>>, vector<8x1xf32>
    %160 = vector.broadcast %159 : vector<8x1xf32> to vector<8x128xf32>
    %161 = arith.addf %158, %160 : vector<8x128xf32>
    %cst_114 = arith.constant 0.000000e+00 : f32
    %162 = vector.broadcast %cst_114 : f32 to vector<8x128xf32>
    %163 = arith.maximumf %161, %162 : vector<8x128xf32>
    %164 = vector.broadcast %3 : vector<1x128xf32> to vector<8x128xf32>
    %165 = arith.mulf %163, %164 : vector<8x128xf32>
    %c11_i32_115 = arith.constant 11 : i32
    %166 = tpu.dynamic_rotate %165 by %c11_i32_115 dim 1 : vector<8x128xf32>, i32 -> vector<8x128xf32>
    %c10_i32_116 = arith.constant 10 : i32
    %167 = tpu.dynamic_rotate %165 by %c10_i32_116 dim 1 : vector<8x128xf32>, i32 -> vector<8x128xf32>
    %c9_i32_117 = arith.constant 9 : i32
    %168 = tpu.dynamic_rotate %165 by %c9_i32_117 dim 1 : vector<8x128xf32>, i32 -> vector<8x128xf32>
    %c1_i32_118 = arith.constant 1 : i32
    %169 = tpu.dynamic_rotate %165 by %c1_i32_118 dim 1 : vector<8x128xf32>, i32 -> vector<8x128xf32>
    %c127_i32_119 = arith.constant 127 : i32
    %170 = tpu.dynamic_rotate %165 by %c127_i32_119 dim 1 : vector<8x128xf32>, i32 -> vector<8x128xf32>
    %c119_i32_120 = arith.constant 119 : i32
    %171 = tpu.dynamic_rotate %165 by %c119_i32_120 dim 1 : vector<8x128xf32>, i32 -> vector<8x128xf32>
    %c118_i32_121 = arith.constant 118 : i32
    %172 = tpu.dynamic_rotate %165 by %c118_i32_121 dim 1 : vector<8x128xf32>, i32 -> vector<8x128xf32>
    %c117_i32_122 = arith.constant 117 : i32
    %173 = tpu.dynamic_rotate %165 by %c117_i32_122 dim 1 : vector<8x128xf32>, i32 -> vector<8x128xf32>
    %174 = tpu.concatenate %166, %167, %168, %169, %165, %170, %171, %172, %173 in 0 : vector<8x128xf32>, vector<8x128xf32>, vector<8x128xf32>, vector<8x128xf32>, vector<8x128xf32>, vector<8x128xf32>, vector<8x128xf32>, vector<8x128xf32>, vector<8x128xf32> -> vector<72x128xf32>
    %c0_123 = arith.constant 0 : index
    %c0_124 = arith.constant 0 : index
    %175 = vector.load %arg30[%c0_123, %c0_124] : memref<8x72xf32, #tpu.memory_space<vmem>>, vector<8x72xf32>
    %cst_125 = arith.constant dense<0.000000e+00> : vector<8x128xf32>
    %176 = tpu.matmul %175, %174, %cst_125 {dimension_numbers = #tpu.dot_dimension_numbers<[1], [0], [0], [1], [0, 0, 1, 1], [], []>} : vector<8x72xf32>, vector<72x128xf32>, vector<8x128xf32> -> vector<8x128xf32>
    %c0_126 = arith.constant 0 : index
    %c0_127 = arith.constant 0 : index
    %177 = vector.load %arg31[%c0_126, %c0_127] : memref<8x8xf32, #tpu.memory_space<vmem>>, vector<8x8xf32>
    %cst_128 = arith.constant dense<0.000000e+00> : vector<8x128xf32>
    %178 = tpu.matmul %177, %144, %cst_128 {dimension_numbers = #tpu.dot_dimension_numbers<[1], [0], [0], [1], [0, 0, 1, 1], [], []>} : vector<8x8xf32>, vector<8x128xf32>, vector<8x128xf32> -> vector<8x128xf32>
    %c0_129 = arith.constant 0 : index
    %c0_130 = arith.constant 0 : index
    %179 = vector.load %arg28[%c0_129, %c0_130] : memref<8x1xf32, #tpu.memory_space<vmem>>, vector<8x1xf32>
    %180 = vector.broadcast %179 : vector<8x1xf32> to vector<8x128xf32>
    %181 = arith.mulf %178, %180 : vector<8x128xf32>
    %c0_131 = arith.constant 0 : index
    %c0_132 = arith.constant 0 : index
    %182 = vector.load %arg25[%c0_131, %c0_132] : memref<8x1xf32, #tpu.memory_space<vmem>>, vector<8x1xf32>
    %183 = vector.broadcast %182 : vector<8x1xf32> to vector<8x128xf32>
    %184 = arith.addf %181, %183 : vector<8x128xf32>
    %c0_133 = arith.constant 0 : index
    %c0_134 = arith.constant 0 : index
    %185 = vector.load %arg27[%c0_133, %c0_134] : memref<8x1xf32, #tpu.memory_space<vmem>>, vector<8x1xf32>
    %186 = vector.broadcast %185 : vector<8x1xf32> to vector<8x128xf32>
    %187 = arith.mulf %176, %186 : vector<8x128xf32>
    %c0_135 = arith.constant 0 : index
    %c0_136 = arith.constant 0 : index
    %188 = vector.load %arg24[%c0_135, %c0_136] : memref<8x1xf32, #tpu.memory_space<vmem>>, vector<8x1xf32>
    %189 = vector.broadcast %188 : vector<8x1xf32> to vector<8x128xf32>
    %190 = arith.addf %187, %189 : vector<8x128xf32>
    %191 = arith.addf %190, %184 : vector<8x128xf32>
    %cst_137 = arith.constant 0.000000e+00 : f32
    %192 = vector.broadcast %cst_137 : f32 to vector<8x128xf32>
    %193 = arith.maximumf %191, %192 : vector<8x128xf32>
    %194 = vector.broadcast %3 : vector<1x128xf32> to vector<8x128xf32>
    %195 = arith.mulf %193, %194 : vector<8x128xf32>
    %c0_138 = arith.constant 0 : index
    %c0_139 = arith.constant 0 : index
    %196 = vector.load %arg35[%c0_138, %c0_139] : memref<128x384xf32, #tpu.memory_space<vmem>>, vector<128x384xf32>
    %cst_140 = arith.constant dense<0.000000e+00> : vector<8x384xf32>
    %197 = tpu.matmul %195, %196, %cst_140 {dimension_numbers = #tpu.dot_dimension_numbers<[1], [0], [0], [1], [0, 0, 1, 1], [], []>} : vector<8x128xf32>, vector<128x384xf32>, vector<8x384xf32> -> vector<8x384xf32>
    %198 = arith.addf %46, %197 : vector<8x384xf32>
    %c0_141 = arith.constant 0 : index
    %c0_142 = arith.constant 0 : index
    %c0_143 = arith.constant 0 : index
    %199 = vector.load %arg36[%c0_141, %c0_142, %c0_143] : memref<1x8x384xf32, #tpu.memory_space<vmem>>, vector<1x8x384xf32>
    %200 = vector.shape_cast %199 : vector<1x8x384xf32> to vector<8x384xf32>
    %201 = vector.shape_cast %198 : vector<8x384xf32> to vector<1x8x384xf32>
    tpu.vector_store %arg36[%c0_141, %c0_142, %c0_143], %201 {strides = array<i32>} : memref<1x8x384xf32, #tpu.memory_space<vmem>>, vector<1x8x384xf32>,
    return
  }
  func.func @transform_0(%arg0: i32) -> (i32, i32, i32) {
    %c0_i32 = arith.constant 0 : i32
    %c0_i32_0 = arith.constant 0 : i32
    %c0_i32_1 = arith.constant 0 : i32
    return %arg0, %c0_i32, %c0_i32_0 : i32, i32, i32
  }
  func.func @transform_1(%arg0: i32) -> (i32, i32) {
    %c0_i32 = arith.constant 0 : i32
    %c0_i32_0 = arith.constant 0 : i32
    %c0_i32_1 = arith.constant 0 : i32
    return %c0_i32, %c0_i32_0 : i32, i32
  }
  func.func @transform_2(%arg0: i32) -> (i32, i32) {
    %c0_i32 = arith.constant 0 : i32
    %c0_i32_0 = arith.constant 0 : i32
    %c0_i32_1 = arith.constant 0 : i32
    return %c0_i32, %c0_i32_0 : i32, i32
  }
  func.func @transform_3(%arg0: i32) -> (i32, i32) {
    %c0_i32 = arith.constant 0 : i32
    %c0_i32_0 = arith.constant 0 : i32
    %c0_i32_1 = arith.constant 0 : i32
    return %c0_i32, %c0_i32_0 : i32, i32
  }
  func.func @transform_4(%arg0: i32) -> (i32, i32) {
    %c0_i32 = arith.constant 0 : i32
    %c0_i32_0 = arith.constant 0 : i32
    %c0_i32_1 = arith.constant 0 : i32
    return %c0_i32, %c0_i32_0 : i32, i32
  }
  func.func @transform_5(%arg0: i32) -> (i32, i32) {
    %c0_i32 = arith.constant 0 : i32
    %c0_i32_0 = arith.constant 0 : i32
    %c0_i32_1 = arith.constant 0 : i32
    return %c0_i32, %c0_i32_0 : i32, i32
  }
  func.func @transform_6(%arg0: i32) -> (i32, i32) {
    %c0_i32 = arith.constant 0 : i32
    %c0_i32_0 = arith.constant 0 : i32
    %c0_i32_1 = arith.constant 0 : i32
    return %c0_i32, %c0_i32_0 : i32, i32
  }
  func.func @transform_7(%arg0: i32) -> (i32, i32) {
    %c0_i32 = arith.constant 0 : i32
    %c0_i32_0 = arith.constant 0 : i32
    %c0_i32_1 = arith.constant 0 : i32
    return %c0_i32, %c0_i32_0 : i32, i32
  }
  func.func @transform_8(%arg0: i32) -> (i32, i32) {
    %c0_i32 = arith.constant 0 : i32
    %c0_i32_0 = arith.constant 0 : i32
    %c0_i32_1 = arith.constant 0 : i32
    return %c0_i32, %c0_i32_0 : i32, i32
  }
  func.func @transform_9(%arg0: i32) -> (i32, i32) {
    %c0_i32 = arith.constant 0 : i32
    %c0_i32_0 = arith.constant 0 : i32
    %c0_i32_1 = arith.constant 0 : i32
    return %c0_i32, %c0_i32_0 : i32, i32
  }
  func.func @transform_10(%arg0: i32) -> (i32, i32) {
    %c0_i32 = arith.constant 0 : i32
    %c0_i32_0 = arith.constant 0 : i32
    %c0_i32_1 = arith.constant 0 : i32
    return %c0_i32, %c0_i32_0 : i32, i32
  }
  func.func @transform_11(%arg0: i32) -> (i32, i32) {
    %c0_i32 = arith.constant 0 : i32
    %c0_i32_0 = arith.constant 0 : i32
    %c0_i32_1 = arith.constant 0 : i32
    return %c0_i32, %c0_i32_0 : i32, i32
  }
  func.func @transform_12(%arg0: i32) -> (i32, i32) {
    %c0_i32 = arith.constant 0 : i32
    %c0_i32_0 = arith.constant 0 : i32
    %c0_i32_1 = arith.constant 0 : i32
    return %c0_i32, %c0_i32_0 : i32, i32
  }
  func.func @transform_13(%arg0: i32) -> (i32, i32) {
    %c0_i32 = arith.constant 0 : i32
    %c0_i32_0 = arith.constant 0 : i32
    %c0_i32_1 = arith.constant 0 : i32
    return %c0_i32, %c0_i32_0 : i32, i32
  }
  func.func @transform_14(%arg0: i32) -> (i32, i32) {
    %c0_i32 = arith.constant 0 : i32
    %c0_i32_0 = arith.constant 0 : i32
    %c0_i32_1 = arith.constant 0 : i32
    return %c0_i32, %c0_i32_0 : i32, i32
  }
  func.func @transform_15(%arg0: i32) -> (i32, i32) {
    %c0_i32 = arith.constant 0 : i32
    %c0_i32_0 = arith.constant 0 : i32
    %c0_i32_1 = arith.constant 0 : i32
    return %c0_i32, %c0_i32_0 : i32, i32
  }
  func.func @transform_16(%arg0: i32) -> (i32, i32) {
    %c0_i32 = arith.constant 0 : i32
    %c0_i32_0 = arith.constant 0 : i32
    %c0_i32_1 = arith.constant 0 : i32
    return %c0_i32, %c0_i32_0 : i32, i32
  }
  func.func @transform_17(%arg0: i32) -> (i32, i32) {
    %c0_i32 = arith.constant 0 : i32
    %c0_i32_0 = arith.constant 0 : i32
    %c0_i32_1 = arith.constant 0 : i32
    return %c0_i32, %c0_i32_0 : i32, i32
  }
  func.func @transform_18(%arg0: i32) -> (i32, i32) {
    %c0_i32 = arith.constant 0 : i32
    %c0_i32_0 = arith.constant 0 : i32
    %c0_i32_1 = arith.constant 0 : i32
    return %c0_i32, %c0_i32_0 : i32, i32
  }
  func.func @transform_19(%arg0: i32) -> (i32, i32) {
    %c0_i32 = arith.constant 0 : i32
    %c0_i32_0 = arith.constant 0 : i32
    %c0_i32_1 = arith.constant 0 : i32
    return %c0_i32, %c0_i32_0 : i32, i32
  }
  func.func @transform_20(%arg0: i32) -> (i32, i32) {
    %c0_i32 = arith.constant 0 : i32
    %c0_i32_0 = arith.constant 0 : i32
    %c0_i32_1 = arith.constant 0 : i32
    return %c0_i32, %c0_i32_0 : i32, i32
  }
  func.func @transform_21(%arg0: i32) -> (i32, i32) {
    %c0_i32 = arith.constant 0 : i32
    %c0_i32_0 = arith.constant 0 : i32
    %c0_i32_1 = arith.constant 0 : i32
    return %c0_i32, %c0_i32_0 : i32, i32
  }
  func.func @transform_22(%arg0: i32) -> (i32, i32) {
    %c0_i32 = arith.constant 0 : i32
    %c0_i32_0 = arith.constant 0 : i32
    %c0_i32_1 = arith.constant 0 : i32
    return %c0_i32, %c0_i32_0 : i32, i32
  }
  func.func @transform_23(%arg0: i32) -> (i32, i32) {
    %c0_i32 = arith.constant 0 : i32
    %c0_i32_0 = arith.constant 0 : i32
    %c0_i32_1 = arith.constant 0 : i32
    return %c0_i32, %c0_i32_0 : i32, i32
  }
  func.func @transform_24(%arg0: i32) -> (i32, i32) {
    %c0_i32 = arith.constant 0 : i32
    %c0_i32_0 = arith.constant 0 : i32
    %c0_i32_1 = arith.constant 0 : i32
    return %c0_i32, %c0_i32_0 : i32, i32
  }
  func.func @transform_25(%arg0: i32) -> (i32, i32) {
    %c0_i32 = arith.constant 0 : i32
    %c0_i32_0 = arith.constant 0 : i32
    %c0_i32_1 = arith.constant 0 : i32
    return %c0_i32, %c0_i32_0 : i32, i32
  }
  func.func @transform_26(%arg0: i32) -> (i32, i32) {
    %c0_i32 = arith.constant 0 : i32
    %c0_i32_0 = arith.constant 0 : i32
    %c0_i32_1 = arith.constant 0 : i32
    return %c0_i32, %c0_i32_0 : i32, i32
  }
  func.func @transform_27(%arg0: i32) -> (i32, i32) {
    %c0_i32 = arith.constant 0 : i32
    %c0_i32_0 = arith.constant 0 : i32
    %c0_i32_1 = arith.constant 0 : i32
    return %c0_i32, %c0_i32_0 : i32, i32
  }
  func.func @transform_28(%arg0: i32) -> (i32, i32) {
    %c0_i32 = arith.constant 0 : i32
    %c0_i32_0 = arith.constant 0 : i32
    %c0_i32_1 = arith.constant 0 : i32
    return %c0_i32, %c0_i32_0 : i32, i32
  }
  func.func @transform_29(%arg0: i32) -> (i32, i32) {
    %c0_i32 = arith.constant 0 : i32
    %c0_i32_0 = arith.constant 0 : i32
    %c0_i32_1 = arith.constant 0 : i32
    return %c0_i32, %c0_i32_0 : i32, i32
  }
  func.func @transform_30(%arg0: i32) -> (i32, i32) {
    %c0_i32 = arith.constant 0 : i32
    %c0_i32_0 = arith.constant 0 : i32
    %c0_i32_1 = arith.constant 0 : i32
    return %c0_i32, %c0_i32_0 : i32, i32
  }
  func.func @transform_31(%arg0: i32) -> (i32, i32) {
    %c0_i32 = arith.constant 0 : i32
    %c0_i32_0 = arith.constant 0 : i32
    %c0_i32_1 = arith.constant 0 : i32
    return %c0_i32, %c0_i32_0 : i32, i32
  }
  func.func @transform_32(%arg0: i32) -> (i32, i32) {
    %c0_i32 = arith.constant 0 : i32
    %c0_i32_0 = arith.constant 0 : i32
    %c0_i32_1 = arith.constant 0 : i32
    return %c0_i32, %c0_i32_0 : i32, i32
  }
  func.func @transform_33(%arg0: i32) -> (i32, i32) {
    %c0_i32 = arith.constant 0 : i32
    %c0_i32_0 = arith.constant 0 : i32
    %c0_i32_1 = arith.constant 0 : i32
    return %c0_i32, %c0_i32_0 : i32, i32
  }
  func.func @transform_34(%arg0: i32) -> (i32, i32) {
    %c0_i32 = arith.constant 0 : i32
    %c0_i32_0 = arith.constant 0 : i32
    %c0_i32_1 = arith.constant 0 : i32
    return %c0_i32, %c0_i32_0 : i32, i32
  }
  func.func @transform_35(%arg0: i32) -> (i32, i32, i32) {
    %c0_i32 = arith.constant 0 : i32
    %c0_i32_0 = arith.constant 0 : i32
    %c0_i32_1 = arith.constant 0 : i32
    return %arg0, %c0_i32, %c0_i32_0 : i32, i32, i32
  }
}

</mosaic_0001>

<llo_original>
// kernel: hourglass_forward.1
$region0: #{hourglass_forward.1}
  #allocation0 [shape = 'u32[]', space=smem, size = 0x4, offset = 0x4, fixed_abs, tag = 'smem constant byte address 0x4 - core index']
  #allocation1 [shape = 'u32[72,128]{1,0:T(1,128)}', space=vmem, size = 0x9000, scoped, tag = 'internal scratch']
  %s0 = inlined_call_operand.smem [shape: u32[36], index: -1, kind: input, shape index: {}]
  %s1 = sld [smem:[%s0]]
  %s2 = scalar_lea.smem %s0, 1
  %s3 = sld [smem:[%s2]]
  %s4 = scalar_lea.smem %s0, 2
  %s5 = sld [smem:[%s4]]
  %s6 = scalar_lea.smem %s0, 3
  %s7 = sld [smem:[%s6]]
  %s8 = scalar_lea.smem %s0, 4
  %s9 = sld [smem:[%s8]]
  %s10 = scalar_lea.smem %s0, 5
  %s11 = sld [smem:[%s10]]
  %s12 = scalar_lea.smem %s0, 6
  %s13 = sld [smem:[%s12]]
  %s14 = scalar_lea.smem %s0, 7
  %s15 = sld [smem:[%s14]]
  %s16 = scalar_lea.smem %s0, 8
  %s17 = sld [smem:[%s16]]
  %s18 = scalar_lea.smem %s0, 9
  %s19 = sld [smem:[%s18]]
  %s20 = scalar_lea.smem %s0, 10
  %s21 = sld [smem:[%s20]]
  %s22 = scalar_lea.smem %s0, 11
  %s23 = sld [smem:[%s22]]
  %s24 = scalar_lea.smem %s0, 12
  %s25 = sld [smem:[%s24]]
  %s26 = scalar_lea.smem %s0, 13
  %s27 = sld [smem:[%s26]]
  %s28 = scalar_lea.smem %s0, 14
  %s29 = sld [smem:[%s28]]
  %s30 = scalar_lea.smem %s0, 15
  %s31 = sld [smem:[%s30]]
  %s32 = scalar_lea.smem %s0, 16
  %s33 = sld [smem:[%s32]]
  %s34 = scalar_lea.smem %s0, 17
  %s35 = sld [smem:[%s34]]
  %s36 = scalar_lea.smem %s0, 18
  %s37 = sld [smem:[%s36]]
  %s38 = scalar_lea.smem %s0, 19
  %s39 = sld [smem:[%s38]]
  %s40 = scalar_lea.smem %s0, 20
  %s41 = sld [smem:[%s40]]
  %s42 = scalar_lea.smem %s0, 21
  %s43 = sld [smem:[%s42]]
  %s44 = scalar_lea.smem %s0, 22
  %s45 = sld [smem:[%s44]]
  %s46 = scalar_lea.smem %s0, 23
  %s47 = sld [smem:[%s46]]
  %s48 = scalar_lea.smem %s0, 24
  %s49 = sld [smem:[%s48]]
  %s50 = scalar_lea.smem %s0, 25
  %s51 = sld [smem:[%s50]]
  %s52 = scalar_lea.smem %s0, 26
  %s53 = sld [smem:[%s52]]
  %s54 = scalar_lea.smem %s0, 27
  %s55 = sld [smem:[%s54]]
  %s56 = scalar_lea.smem %s0, 28
  %s57 = sld [smem:[%s56]]
  %s58 = scalar_lea.smem %s0, 29
  %s59 = sld [smem:[%s58]]
  %s60 = scalar_lea.smem %s0, 30
  %s61 = sld [smem:[%s60]]
  %s62 = scalar_lea.smem %s0, 31
  %s63 = sld [smem:[%s62]]
  %s64 = scalar_lea.smem %s0, 32
  %s65 = sld [smem:[%s64]]
  %s66 = scalar_lea.smem %s0, 33
  %s67 = sld [smem:[%s66]]
  %s68 = scalar_lea.smem %s0, 34
  %s69 = sld [smem:[%s68]]
  %s70 = scalar_lea.smem %s0, 35
  %s71 = sld [smem:[%s70]]
  %s72 = sld [smem:[#allocation0]]
  $region173: #{hourglass_forward.1} parent=0
    _
  %s74 = ssub.s32 1, %s72
  %s75 = scalar_select 0, %s74, %s72
  loop: start=0, step=1, limit=4
  $region2: #{hourglass_forward.1} parent=0 // loop_pre_header
    _
  $region3: #{hourglass_forward.1} parent=0 // loop_header
    %s77 = sphi 0, %s81
    %p78 = scmp.ge.s32.totalorder %s77, 4
    %s87 = sphi 0, %s89
    %s90 = sphi 0, %s87
    %s91 = sphi 0, %s90
    %s107 = sphi 0, %s91
    %s111 = sphi 0, %s111
    %s113 = sphi 0, %s111
    %s114 = sphi 0, %s113
    %s128 = sphi 0, %s114
    %s132 = sphi 0, %s132
    %s134 = sphi 0, %s132
    %s135 = sphi 0, %s134
    %s149 = sphi 0, %s135
    %s153 = sphi 0, %s153
    %s155 = sphi 0, %s153
    %s156 = sphi 0, %s155
    %s170 = sphi 0, %s156
    %s174 = sphi 0, %s174
    %s176 = sphi 0, %s174
    %s177 = sphi 0, %s176
    %s191 = sphi 0, %s177
    %s195 = sphi 0, %s195
    %s197 = sphi 0, %s195
    %s198 = sphi 0, %s197
    %s212 = sphi 0, %s198
    %s216 = sphi 0, %s216
    %s218 = sphi 0, %s216
    %s219 = sphi 0, %s218
    %s233 = sphi 0, %s219
    %s237 = sphi 0, %s237
    %s239 = sphi 0, %s237
    %s240 = sphi 0, %s239
    %s254 = sphi 0, %s240
    %s258 = sphi 0, %s258
    %s260 = sphi 0, %s258
    %s261 = sphi 0, %s260
    %s275 = sphi 0, %s261
    %s279 = sphi 0, %s279
    %s281 = sphi 0, %s279
    %s282 = sphi 0, %s281
    %s296 = sphi 0, %s282
    %s300 = sphi 0, %s300
    %s302 = sphi 0, %s300
    %s303 = sphi 0, %s302
    %s317 = sphi 0, %s303
    %s321 = sphi 0, %s321
    %s323 = sphi 0, %s321
    %s324 = sphi 0, %s323
    %s338 = sphi 0, %s324
    %s342 = sphi 0, %s342
    %s344 = sphi 0, %s342
    %s345 = sphi 0, %s344
    %s359 = sphi 0, %s345
    %s363 = sphi 0, %s363
    %s365 = sphi 0, %s363
    %s366 = sphi 0, %s365
    %s380 = sphi 0, %s366
    %s384 = sphi 0, %s384
    %s386 = sphi 0, %s384
    %s387 = sphi 0, %s386
    %s401 = sphi 0, %s387
    %s405 = sphi 0, %s405
    %s407 = sphi 0, %s405
    %s408 = sphi 0, %s407
    %s422 = sphi 0, %s408
    %s426 = sphi 0, %s426
    %s428 = sphi 0, %s426
    %s429 = sphi 0, %s428
    %s443 = sphi 0, %s429
    %s447 = sphi 0, %s447
    %s449 = sphi 0, %s447
    %s450 = sphi 0, %s449
    %s464 = sphi 0, %s450
    %s468 = sphi 0, %s468
    %s470 = sphi 0, %s468
    %s471 = sphi 0, %s470
    %s485 = sphi 0, %s471
    %s489 = sphi 0, %s489
    %s491 = sphi 0, %s489
    %s492 = sphi 0, %s491
    %s506 = sphi 0, %s492
    %s510 = sphi 0, %s510
    %s512 = sphi 0, %s510
    %s513 = sphi 0, %s512
    %s527 = sphi 0, %s513
    %s531 = sphi 0, %s531
    %s533 = sphi 0, %s531
    %s534 = sphi 0, %s533
    %s548 = sphi 0, %s534
    %s552 = sphi 0, %s552
    %s554 = sphi 0, %s552
    %s555 = sphi 0, %s554
    %s569 = sphi 0, %s555
    %s573 = sphi 0, %s573
    %s575 = sphi 0, %s573
    %s576 = sphi 0, %s575
    %s590 = sphi 0, %s576
    %s594 = sphi 0, %s594
    %s596 = sphi 0, %s594
    %s597 = sphi 0, %s596
    %s611 = sphi 0, %s597
    %s615 = sphi 0, %s615
    %s617 = sphi 0, %s615
    %s618 = sphi 0, %s617
    %s632 = sphi 0, %s618
    %s636 = sphi 0, %s636
    %s638 = sphi 0, %s636
    %s639 = sphi 0, %s638
    %s653 = sphi 0, %s639
    %s657 = sphi 0, %s657
    %s659 = sphi 0, %s657
    %s660 = sphi 0, %s659
    %s674 = sphi 0, %s660
    %s678 = sphi 0, %s678
    %s680 = sphi 0, %s678
    %s681 = sphi 0, %s680
    %s695 = sphi 0, %s681
    %s699 = sphi 0, %s699
    %s701 = sphi 0, %s699
    %s702 = sphi 0, %s701
    %s716 = sphi 0, %s702
    %s720 = sphi 0, %s720
    %s722 = sphi 0, %s720
    %s723 = sphi 0, %s722
    %s737 = sphi 0, %s723
    %s741 = sphi 0, %s741
    %s743 = sphi 0, %s741
    %s744 = sphi 0, %s743
    %s758 = sphi 0, %s744
    %s762 = sphi 0, %s762
    %s764 = sphi 0, %s762
    %s765 = sphi 0, %s764
    %s779 = sphi 0, %s765
    %s783 = sphi 0, %s783
    %s785 = sphi 0, %s783
    %s786 = sphi 0, %s785
    %s800 = sphi 0, %s786
    %s804 = sphi 0, %s804
    %s806 = sphi 0, %s804
    %s807 = sphi 0, %s806
    %s821 = sphi 0, %s807
    %s827 = sphi 0, %s829
    %s830 = sphi 0, %s827
    %s831 = sphi 0, %s830
    %s847 = sphi 0, %s831
  $region4: #{hourglass_forward.1} parent=0 // loop_header_branch
    %80 = sbr.rel (%p78) target = $region8
  $region5: #{hourglass_forward.1} parent=0 // loop_body
    %s82 = ssub.s32 %s77, 1
    %s83 = ssub.s32 %s77, 2
    %s84 = sadd.s32 %s77, 1
    %s85 = ssub.s32 %s77, %s84
    %p86 = scmp.eq.s32.totalorder %s85, 0
    %s88 = sadd.s32 %s87, 1
    %s89 = scalar_select %p86, %s87, %s88
    %p92 = pneg %p86
    %p93 = scmp.eq.s32.totalorder %s77, 1
    %p94 = por %p92, %p93
    %p95 = scmp.ne.s32.totalorder %s87, %s90
    %p96 = scmp.eq.s32.totalorder %s77, 0
    %p97 = por %p95, %p96
    %p98 = scmp.ne.s32.totalorder %s87, %s90
    %p99 = scmp.eq.s32.totalorder %s82, 1
    %p100 = por %p98, %p99
    %p101 = scmp.ne.s32.totalorder %s90, %s91
    %p102 = scmp.eq.s32.totalorder %s82, 0
    %p103 = por %p101, %p102
    %p104 = scmp.ne.s32.totalorder %s90, %s91
    %p105 = scmp.eq.s32.totalorder %s83, 1
    %p106 = por %p104, %p105
    %p108 = scmp.ne.s32.totalorder %s91, %s107
    %p109 = scmp.eq.s32.totalorder %s83, 0
    %p110 = por %p108, %p109
    %s112 = sadd.s32 %s111, 1
    %p115 = scmp.eq.s32.totalorder %s77, 1
    %p116 = scmp.ne.s32.totalorder %s111, %s113
    %p117 = scmp.eq.s32.totalorder %s77, 0
    %p118 = por %p116, %p117
    %p119 = scmp.ne.s32.totalorder %s111, %s113
    %p120 = scmp.eq.s32.totalorder %s82, 1
    %p121 = por %p119, %p120
    %p122 = scmp.ne.s32.totalorder %s113, %s114
    %p123 = scmp.eq.s32.totalorder %s82, 0
    %p124 = por %p122, %p123
    %p125 = scmp.ne.s32.totalorder %s113, %s114
    %p126 = scmp.eq.s32.totalorder %s83, 1
    %p127 = por %p125, %p126
    %p129 = scmp.ne.s32.totalorder %s114, %s128
    %p130 = scmp.eq.s32.totalorder %s83, 0
    %p131 = por %p129, %p130
    %s133 = sadd.s32 %s132, 1
    %p136 = scmp.eq.s32.totalorder %s77, 1
    %p137 = scmp.ne.s32.totalorder %s132, %s134
    %p138 = scmp.eq.s32.totalorder %s77, 0
    %p139 = por %p137, %p138
    %p140 = scmp.ne.s32.totalorder %s132, %s134
    %p141 = scmp.eq.s32.totalorder %s82, 1
    %p142 = por %p140, %p141
    %p143 = scmp.ne.s32.totalorder %s134, %s135
    %p144 = scmp.eq.s32.totalorder %s82, 0
    %p145 = por %p143, %p144
    %p146 = scmp.ne.s32.totalorder %s134, %s135
    %p147 = scmp.eq.s32.totalorder %s83, 1
    %p148 = por %p146, %p147
    %p150 = scmp.ne.s32.totalorder %s135, %s149
    %p151 = scmp.eq.s32.totalorder %s83, 0
    %p152 = por %p150, %p151
    %s154 = sadd.s32 %s153, 1
    %p157 = scmp.eq.s32.totalorder %s77, 1
    %p158 = scmp.ne.s32.totalorder %s153, %s155
    %p159 = scmp.eq.s32.totalorder %s77, 0
    %p160 = por %p158, %p159
    %p161 = scmp.ne.s32.totalorder %s153, %s155
    %p162 = scmp.eq.s32.totalorder %s82, 1
    %p163 = por %p161, %p162
    %p164 = scmp.ne.s32.totalorder %s155, %s156
    %p165 = scmp.eq.s32.totalorder %s82, 0
    %p166 = por %p164, %p165
    %p167 = scmp.ne.s32.totalorder %s155, %s156
    %p168 = scmp.eq.s32.totalorder %s83, 1
    %p169 = por %p167, %p168
    %p171 = scmp.ne.s32.totalorder %s156, %s170
    %p172 = scmp.eq.s32.totalorder %s83, 0
    %p173 = por %p171, %p172
    %s175 = sadd.s32 %s174, 1
    %p178 = scmp.eq.s32.totalorder %s77, 1
    %p179 = scmp.ne.s32.totalorder %s174, %s176
    %p180 = scmp.eq.s32.totalorder %s77, 0
    %p181 = por %p179, %p180
    %p182 = scmp.ne.s32.totalorder %s174, %s176
    %p183 = scmp.eq.s32.totalorder %s82, 1
    %p184 = por %p182, %p183
    %p185 = scmp.ne.s32.totalorder %s176, %s177
    %p186 = scmp.eq.s32.totalorder %s82, 0
    %p187 = por %p185, %p186
    %p188 = scmp.ne.s32.totalorder %s176, %s177
    %p189 = scmp.eq.s32.totalorder %s83, 1
    %p190 = por %p188, %p189
    %p192 = scmp.ne.s32.totalorder %s177, %s191
    %p193 = scmp.eq.s32.totalorder %s83, 0
    %p194 = por %p192, %p193
    %s196 = sadd.s32 %s195, 1
    %p199 = scmp.eq.s32.totalorder %s77, 1
    %p200 = scmp.ne.s32.totalorder %s195, %s197
    %p201 = scmp.eq.s32.totalorder %s77, 0
    %p202 = por %p200, %p201
    %p203 = scmp.ne.s32.totalorder %s195, %s197
    %p204 = scmp.eq.s32.totalorder %s82, 1
    %p205 = por %p203, %p204
    %p206 = scmp.ne.s32.totalorder %s197, %s198
    %p207 = scmp.eq.s32.totalorder %s82, 0
    %p208 = por %p206, %p207
    %p209 = scmp.ne.s32.totalorder %s197, %s198
    %p210 = scmp.eq.s32.totalorder %s83, 1
    %p211 = por %p209, %p210
    %p213 = scmp.ne.s32.totalorder %s198, %s212
    %p214 = scmp.eq.s32.totalorder %s83, 0
    %p215 = por %p213, %p214
    %s217 = sadd.s32 %s216, 1
    %p220 = scmp.eq.s32.totalorder %s77, 1
    %p221 = scmp.ne.s32.totalorder %s216, %s218
    %p222 = scmp.eq.s32.totalorder %s77, 0
    %p223 = por %p221, %p222
    %p224 = scmp.ne.s32.totalorder %s216, %s218
    %p225 = scmp.eq.s32.totalorder %s82, 1
    %p226 = por %p224, %p225
    %p227 = scmp.ne.s32.totalorder %s218, %s219
    %p228 = scmp.eq.s32.totalorder %s82, 0
    %p229 = por %p227, %p228
    %p230 = scmp.ne.s32.totalorder %s218, %s219
    %p231 = scmp.eq.s32.totalorder %s83, 1
    %p232 = por %p230, %p231
    %p234 = scmp.ne.s32.totalorder %s219, %s233
    %p235 = scmp.eq.s32.totalorder %s83, 0
    %p236 = por %p234, %p235
    %s238 = sadd.s32 %s237, 1
    %p241 = scmp.eq.s32.totalorder %s77, 1
    %p242 = scmp.ne.s32.totalorder %s237, %s239
    %p243 = scmp.eq.s32.totalorder %s77, 0
    %p244 = por %p242, %p243
    %p245 = scmp.ne.s32.totalorder %s237, %s239
    %p246 = scmp.eq.s32.totalorder %s82, 1
    %p247 = por %p245, %p246
    %p248 = scmp.ne.s32.totalorder %s239, %s240
    %p249 = scmp.eq.s32.totalorder %s82, 0
    %p250 = por %p248, %p249
    %p251 = scmp.ne.s32.totalorder %s239, %s240
    %p252 = scmp.eq.s32.totalorder %s83, 1
    %p253 = por %p251, %p252
    %p255 = scmp.ne.s32.totalorder %s240, %s254
    %p256 = scmp.eq.s32.totalorder %s83, 0
    %p257 = por %p255, %p256
    %s259 = sadd.s32 %s258, 1
    %p262 = scmp.eq.s32.totalorder %s77, 1
    %p263 = scmp.ne.s32.totalorder %s258, %s260
    %p264 = scmp.eq.s32.totalorder %s77, 0
    %p265 = por %p263, %p264
    %p266 = scmp.ne.s32.totalorder %s258, %s260
    %p267 = scmp.eq.s32.totalorder %s82, 1
    %p268 = por %p266, %p267
    %p269 = scmp.ne.s32.totalorder %s260, %s261
    %p270 = scmp.eq.s32.totalorder %s82, 0
    %p271 = por %p269, %p270
    %p272 = scmp.ne.s32.totalorder %s260, %s261
    %p273 = scmp.eq.s32.totalorder %s83, 1
    %p274 = por %p272, %p273
    %p276 = scmp.ne.s32.totalorder %s261, %s275
    %p277 = scmp.eq.s32.totalorder %s83, 0
    %p278 = por %p276, %p277
    %s280 = sadd.s32 %s279, 1
    %p283 = scmp.eq.s32.totalorder %s77, 1
    %p284 = scmp.ne.s32.totalorder %s279, %s281
    %p285 = scmp.eq.s32.totalorder %s77, 0
    %p286 = por %p284, %p285
    %p287 = scmp.ne.s32.totalorder %s279, %s281
    %p288 = scmp.eq.s32.totalorder %s82, 1
    %p289 = por %p287, %p288
    %p290 = scmp.ne.s32.totalorder %s281, %s282
    %p291 = scmp.eq.s32.totalorder %s82, 0
    %p292 = por %p290, %p291
    %p293 = scmp.ne.s32.totalorder %s281, %s282
    %p294 = scmp.eq.s32.totalorder %s83, 1
    %p295 = por %p293, %p294
    %p297 = scmp.ne.s32.totalorder %s282, %s296
    %p298 = scmp.eq.s32.totalorder %s83, 0
    %p299 = por %p297, %p298
    %s301 = sadd.s32 %s300, 1
    %p304 = scmp.eq.s32.totalorder %s77, 1
    %p305 = scmp.ne.s32.totalorder %s300, %s302
    %p306 = scmp.eq.s32.totalorder %s77, 0
    %p307 = por %p305, %p306
    %p308 = scmp.ne.s32.totalorder %s300, %s302
    %p309 = scmp.eq.s32.totalorder %s82, 1
    %p310 = por %p308, %p309
    %p311 = scmp.ne.s32.totalorder %s302, %s303
    %p312 = scmp.eq.s32.totalorder %s82, 0
    %p313 = por %p311, %p312
    %p314 = scmp.ne.s32.totalorder %s302, %s303
    %p315 = scmp.eq.s32.totalorder %s83, 1
    %p316 = por %p314, %p315
    %p318 = scmp.ne.s32.totalorder %s303, %s317
    %p319 = scmp.eq.s32.totalorder %s83, 0
    %p320 = por %p318, %p319
    %s322 = sadd.s32 %s321, 1
    %p325 = scmp.eq.s32.totalorder %s77, 1
    %p326 = scmp.ne.s32.totalorder %s321, %s323
    %p327 = scmp.eq.s32.totalorder %s77, 0
    %p328 = por %p326, %p327
    %p329 = scmp.ne.s32.totalorder %s321, %s323
    %p330 = scmp.eq.s32.totalorder %s82, 1
    %p331 = por %p329, %p330
    %p332 = scmp.ne.s32.totalorder %s323, %s324
    %p333 = scmp.eq.s32.totalorder %s82, 0
    %p334 = por %p332, %p333
    %p335 = scmp.ne.s32.totalorder %s323, %s324
    %p336 = scmp.eq.s32.totalorder %s83, 1
    %p337 = por %p335, %p336
    %p339 = scmp.ne.s32.totalorder %s324, %s338
    %p340 = scmp.eq.s32.totalorder %s83, 0
    %p341 = por %p339, %p340
    %s343 = sadd.s32 %s342, 1
    %p346 = scmp.eq.s32.totalorder %s77, 1
    %p347 = scmp.ne.s32.totalorder %s342, %s344
    %p348 = scmp.eq.s32.totalorder %s77, 0
    %p349 = por %p347, %p348
    %p350 = scmp.ne.s32.totalorder %s342, %s344
    %p351 = scmp.eq.s32.totalorder %s82, 1
    %p352 = por %p350, %p351
    %p353 = scmp.ne.s32.totalorder %s344, %s345
    %p354 = scmp.eq.s32.totalorder %s82, 0
    %p355 = por %p353, %p354
    %p356 = scmp.ne.s32.totalorder %s344, %s345
    %p357 = scmp.eq.s32.totalorder %s83, 1
    %p358 = por %p356, %p357
    %p360 = scmp.ne.s32.totalorder %s345, %s359
    %p361 = scmp.eq.s32.totalorder %s83, 0
    %p362 = por %p360, %p361
    %s364 = sadd.s32 %s363, 1
    %p367 = scmp.eq.s32.totalorder %s77, 1
    %p368 = scmp.ne.s32.totalorder %s363, %s365
    %p369 = scmp.eq.s32.totalorder %s77, 0
    %p370 = por %p368, %p369
    %p371 = scmp.ne.s32.totalorder %s363, %s365
    %p372 = scmp.eq.s32.totalorder %s82, 1
    %p373 = por %p371, %p372
    %p374 = scmp.ne.s32.totalorder %s365, %s366
    %p375 = scmp.eq.s32.totalorder %s82, 0
    %p376 = por %p374, %p375
    %p377 = scmp.ne.s32.totalorder %s365, %s366
    %p378 = scmp.eq.s32.totalorder %s83, 1
    %p379 = por %p377, %p378
    %p381 = scmp.ne.s32.totalorder %s366, %s380
    %p382 = scmp.eq.s32.totalorder %s83, 0
    %p383 = por %p381, %p382
    %s385 = sadd.s32 %s384, 1
    %p388 = scmp.eq.s32.totalorder %s77, 1
    %p389 = scmp.ne.s32.totalorder %s384, %s386
    %p390 = scmp.eq.s32.totalorder %s77, 0
    %p391 = por %p389, %p390
    %p392 = scmp.ne.s32.totalorder %s384, %s386
    %p393 = scmp.eq.s32.totalorder %s82, 1
    %p394 = por %p392, %p393
    %p395 = scmp.ne.s32.totalorder %s386, %s387
    %p396 = scmp.eq.s32.totalorder %s82, 0
    %p397 = por %p395, %p396
    %p398 = scmp.ne.s32.totalorder %s386, %s387
    %p399 = scmp.eq.s32.totalorder %s83, 1
    %p400 = por %p398, %p399
    %p402 = scmp.ne.s32.totalorder %s387, %s401
    %p403 = scmp.eq.s32.totalorder %s83, 0
    %p404 = por %p402, %p403
    %s406 = sadd.s32 %s405, 1
    %p409 = scmp.eq.s32.totalorder %s77, 1
    %p410 = scmp.ne.s32.totalorder %s405, %s407
    %p411 = scmp.eq.s32.totalorder %s77, 0
    %p412 = por %p410, %p411
    %p413 = scmp.ne.s32.totalorder %s405, %s407
    %p414 = scmp.eq.s32.totalorder %s82, 1
    %p415 = por %p413, %p414
    %p416 = scmp.ne.s32.totalorder %s407, %s408
    %p417 = scmp.eq.s32.totalorder %s82, 0
    %p418 = por %p416, %p417
    %p419 = scmp.ne.s32.totalorder %s407, %s408
    %p420 = scmp.eq.s32.totalorder %s83, 1
    %p421 = por %p419, %p420
    %p423 = scmp.ne.s32.totalorder %s408, %s422
    %p424 = scmp.eq.s32.totalorder %s83, 0
    %p425 = por %p423, %p424
    %s427 = sadd.s32 %s426, 1
    %p430 = scmp.eq.s32.totalorder %s77, 1
    %p431 = scmp.ne.s32.totalorder %s426, %s428
    %p432 = scmp.eq.s32.totalorder %s77, 0
    %p433 = por %p431, %p432
    %p434 = scmp.ne.s32.totalorder %s426, %s428
    %p435 = scmp.eq.s32.totalorder %s82, 1
    %p436 = por %p434, %p435
    %p437 = scmp.ne.s32.totalorder %s428, %s429
    %p438 = scmp.eq.s32.totalorder %s82, 0
    %p439 = por %p437, %p438
    %p440 = scmp.ne.s32.totalorder %s428, %s429
    %p441 = scmp.eq.s32.totalorder %s83, 1
    %p442 = por %p440, %p441
    %p444 = scmp.ne.s32.totalorder %s429, %s443
    %p445 = scmp.eq.s32.totalorder %s83, 0
    %p446 = por %p444, %p445
    %s448 = sadd.s32 %s447, 1
    %p451 = scmp.eq.s32.totalorder %s77, 1
    %p452 = scmp.ne.s32.totalorder %s447, %s449
    %p453 = scmp.eq.s32.totalorder %s77, 0
    %p454 = por %p452, %p453
    %p455 = scmp.ne.s32.totalorder %s447, %s449
    %p456 = scmp.eq.s32.totalorder %s82, 1
    %p457 = por %p455, %p456
    %p458 = scmp.ne.s32.totalorder %s449, %s450
    %p459 = scmp.eq.s32.totalorder %s82, 0
    %p460 = por %p458, %p459
    %p461 = scmp.ne.s32.totalorder %s449, %s450
    %p462 = scmp.eq.s32.totalorder %s83, 1
    %p463 = por %p461, %p462
    %p465 = scmp.ne.s32.totalorder %s450, %s464
    %p466 = scmp.eq.s32.totalorder %s83, 0
    %p467 = por %p465, %p466
    %s469 = sadd.s32 %s468, 1
    %p472 = scmp.eq.s32.totalorder %s77, 1
    %p473 = scmp.ne.s32.totalorder %s468, %s470
    %p474 = scmp.eq.s32.totalorder %s77, 0
    %p475 = por %p473, %p474
    %p476 = scmp.ne.s32.totalorder %s468, %s470
    %p477 = scmp.eq.s32.totalorder %s82, 1
    %p478 = por %p476, %p477
    %p479 = scmp.ne.s32.totalorder %s470, %s471
    %p480 = scmp.eq.s32.totalorder %s82, 0
    %p481 = por %p479, %p480
    %p482 = scmp.ne.s32.totalorder %s470, %s471
    %p483 = scmp.eq.s32.totalorder %s83, 1
    %p484 = por %p482, %p483
    %p486 = scmp.ne.s32.totalorder %s471, %s485
    %p487 = scmp.eq.s32.totalorder %s83, 0
    %p488 = por %p486, %p487
    %s490 = sadd.s32 %s489, 1
    %p493 = scmp.eq.s32.totalorder %s77, 1
    %p494 = scmp.ne.s32.totalorder %s489, %s491
    %p495 = scmp.eq.s32.totalorder %s77, 0
    %p496 = por %p494, %p495
    %p497 = scmp.ne.s32.totalorder %s489, %s491
    %p498 = scmp.eq.s32.totalorder %s82, 1
    %p499 = por %p497, %p498
    %p500 = scmp.ne.s32.totalorder %s491, %s492
    %p501 = scmp.eq.s32.totalorder %s82, 0
    %p502 = por %p500, %p501
    %p503 = scmp.ne.s32.totalorder %s491, %s492
    %p504 = scmp.eq.s32.totalorder %s83, 1
    %p505 = por %p503, %p504
    %p507 = scmp.ne.s32.totalorder %s492, %s506
    %p508 = scmp.eq.s32.totalorder %s83, 0
    %p509 = por %p507, %p508
    %s511 = sadd.s32 %s510, 1
    %p514 = scmp.eq.s32.totalorder %s77, 1
    %p515 = scmp.ne.s32.totalorder %s510, %s512
    %p516 = scmp.eq.s32.totalorder %s77, 0
    %p517 = por %p515, %p516
    %p518 = scmp.ne.s32.totalorder %s510, %s512
    %p519 = scmp.eq.s32.totalorder %s82, 1
    %p520 = por %p518, %p519
    %p521 = scmp.ne.s32.totalorder %s512, %s513
    %p522 = scmp.eq.s32.totalorder %s82, 0
    %p523 = por %p521, %p522
    %p524 = scmp.ne.s32.totalorder %s512, %s513
    %p525 = scmp.eq.s32.totalorder %s83, 1
    %p526 = por %p524, %p525
    %p528 = scmp.ne.s32.totalorder %s513, %s527
    %p529 = scmp.eq.s32.totalorder %s83, 0
    %p530 = por %p528, %p529
    %s532 = sadd.s32 %s531, 1
    %p535 = scmp.eq.s32.totalorder %s77, 1
    %p536 = scmp.ne.s32.totalorder %s531, %s533
    %p537 = scmp.eq.s32.totalorder %s77, 0
    %p538 = por %p536, %p537
    %p539 = scmp.ne.s32.totalorder %s531, %s533
    %p540 = scmp.eq.s32.totalorder %s82, 1
    %p541 = por %p539, %p540
    %p542 = scmp.ne.s32.totalorder %s533, %s534
    %p543 = scmp.eq.s32.totalorder %s82, 0
    %p544 = por %p542, %p543
    %p545 = scmp.ne.s32.totalorder %s533, %s534
    %p546 = scmp.eq.s32.totalorder %s83, 1
    %p547 = por %p545, %p546
    %p549 = scmp.ne.s32.totalorder %s534, %s548
    %p550 = scmp.eq.s32.totalorder %s83, 0
    %p551 = por %p549, %p550
    %s553 = sadd.s32 %s552, 1
    %p556 = scmp.eq.s32.totalorder %s77, 1
    %p557 = scmp.ne.s32.totalorder %s552, %s554
    %p558 = scmp.eq.s32.totalorder %s77, 0
    %p559 = por %p557, %p558
    %p560 = scmp.ne.s32.totalorder %s552, %s554
    %p561 = scmp.eq.s32.totalorder %s82, 1
    %p562 = por %p560, %p561
    %p563 = scmp.ne.s32.totalorder %s554, %s555
    %p564 = scmp.eq.s32.totalorder %s82, 0
    %p565 = por %p563, %p564
    %p566 = scmp.ne.s32.totalorder %s554, %s555
    %p567 = scmp.eq.s32.totalorder %s83, 1
    %p568 = por %p566, %p567
    %p570 = scmp.ne.s32.totalorder %s555, %s569
    %p571 = scmp.eq.s32.totalorder %s83, 0
    %p572 = por %p570, %p571
    %s574 = sadd.s32 %s573, 1
    %p577 = scmp.eq.s32.totalorder %s77, 1
    %p578 = scmp.ne.s32.totalorder %s573, %s575
    %p579 = scmp.eq.s32.totalorder %s77, 0
    %p580 = por %p578, %p579
    %p581 = scmp.ne.s32.totalorder %s573, %s575
    %p582 = scmp.eq.s32.totalorder %s82, 1
    %p583 = por %p581, %p582
    %p584 = scmp.ne.s32.totalorder %s575, %s576
    %p585 = scmp.eq.s32.totalorder %s82, 0
    %p586 = por %p584, %p585
    %p587 = scmp.ne.s32.totalorder %s575, %s576
    %p588 = scmp.eq.s32.totalorder %s83, 1
    %p589 = por %p587, %p588
    %p591 = scmp.ne.s32.totalorder %s576, %s590
    %p592 = scmp.eq.s32.totalorder %s83, 0
    %p593 = por %p591, %p592
    %s595 = sadd.s32 %s594, 1
    %p598 = scmp.eq.s32.totalorder %s77, 1
    %p599 = scmp.ne.s32.totalorder %s594, %s596
    %p600 = scmp.eq.s32.totalorder %s77, 0
    %p601 = por %p599, %p600
    %p602 = scmp.ne.s32.totalorder %s594, %s596
    %p603 = scmp.eq.s32.totalorder %s82, 1
    %p604 = por %p602, %p603
    %p605 = scmp.ne.s32.totalorder %s596, %s597
    %p606 = scmp.eq.s32.totalorder %s82, 0
    %p607 = por %p605, %p606
    %p608 = scmp.ne.s32.totalorder %s596, %s597
    %p609 = scmp.eq.s32.totalorder %s83, 1
    %p610 = por %p608, %p609
    %p612 = scmp.ne.s32.totalorder %s597, %s611
    %p613 = scmp.eq.s32.totalorder %s83, 0
    %p614 = por %p612, %p613
    %s616 = sadd.s32 %s615, 1
    %p619 = scmp.eq.s32.totalorder %s77, 1
    %p620 = scmp.ne.s32.totalorder %s615, %s617
    %p621 = scmp.eq.s32.totalorder %s77, 0
    %p622 = por %p620, %p621
    %p623 = scmp.ne.s32.totalorder %s615, %s617
    %p624 = scmp.eq.s32.totalorder %s82, 1
    %p625 = por %p623, %p624
    %p626 = scmp.ne.s32.totalorder %s617, %s618
    %p627 = scmp.eq.s32.totalorder %s82, 0
    %p628 = por %p626, %p627
    %p629 = scmp.ne.s32.totalorder %s617, %s618
    %p630 = scmp.eq.s32.totalorder %s83, 1
    %p631 = por %p629, %p630
    %p633 = scmp.ne.s32.totalorder %s618, %s632
    %p634 = scmp.eq.s32.totalorder %s83, 0
    %p635 = por %p633, %p634
    %s637 = sadd.s32 %s636, 1
    %p640 = scmp.eq.s32.totalorder %s77, 1
    %p641 = scmp.ne.s32.totalorder %s636, %s638
    %p642 = scmp.eq.s32.totalorder %s77, 0
    %p643 = por %p641, %p642
    %p644 = scmp.ne.s32.totalorder %s636, %s638
    %p645 = scmp.eq.s32.totalorder %s82, 1
    %p646 = por %p644, %p645
    %p647 = scmp.ne.s32.totalorder %s638, %s639
    %p648 = scmp.eq.s32.totalorder %s82, 0
    %p649 = por %p647, %p648
    %p650 = scmp.ne.s32.totalorder %s638, %s639
    %p651 = scmp.eq.s32.totalorder %s83, 1
    %p652 = por %p650, %p651
    %p654 = scmp.ne.s32.totalorder %s639, %s653
    %p655 = scmp.eq.s32.totalorder %s83, 0
    %p656 = por %p654, %p655
    %s658 = sadd.s32 %s657, 1
    %p661 = scmp.eq.s32.totalorder %s77, 1
    %p662 = scmp.ne.s32.totalorder %s657, %s659
    %p663 = scmp.eq.s32.totalorder %s77, 0
    %p664 = por %p662, %p663
    %p665 = scmp.ne.s32.totalorder %s657, %s659
    %p666 = scmp.eq.s32.totalorder %s82, 1
    %p667 = por %p665, %p666
    %p668 = scmp.ne.s32.totalorder %s659, %s660
    %p669 = scmp.eq.s32.totalorder %s82, 0
    %p670 = por %p668, %p669
    %p671 = scmp.ne.s32.totalorder %s659, %s660
    %p672 = scmp.eq.s32.totalorder %s83, 1
    %p673 = por %p671, %p672
    %p675 = scmp.ne.s32.totalorder %s660, %s674
    %p676 = scmp.eq.s32.totalorder %s83, 0
    %p677 = por %p675, %p676
    %s679 = sadd.s32 %s678, 1
    %p682 = scmp.eq.s32.totalorder %s77, 1
    %p683 = scmp.ne.s32.totalorder %s678, %s680
    %p684 = scmp.eq.s32.totalorder %s77, 0
    %p685 = por %p683, %p684
    %p686 = scmp.ne.s32.totalorder %s678, %s680
    %p687 = scmp.eq.s32.totalorder %s82, 1
    %p688 = por %p686, %p687
    %p689 = scmp.ne.s32.totalorder %s680, %s681
    %p690 = scmp.eq.s32.totalorder %s82, 0
    %p691 = por %p689, %p690
    %p692 = scmp.ne.s32.totalorder %s680, %s681
    %p693 = scmp.eq.s32.totalorder %s83, 1
    %p694 = por %p692, %p693
    %p696 = scmp.ne.s32.totalorder %s681, %s695
    %p697 = scmp.eq.s32.totalorder %s83, 0
    %p698 = por %p696, %p697
    %s700 = sadd.s32 %s699, 1
    %p703 = scmp.eq.s32.totalorder %s77, 1
    %p704 = scmp.ne.s32.totalorder %s699, %s701
    %p705 = scmp.eq.s32.totalorder %s77, 0
    %p706 = por %p704, %p705
    %p707 = scmp.ne.s32.totalorder %s699, %s701
    %p708 = scmp.eq.s32.totalorder %s82, 1
    %p709 = por %p707, %p708
    %p710 = scmp.ne.s32.totalorder %s701, %s702
    %p711 = scmp.eq.s32.totalorder %s82, 0
    %p712 = por %p710, %p711
    %p713 = scmp.ne.s32.totalorder %s701, %s702
    %p714 = scmp.eq.s32.totalorder %s83, 1
    %p715 = por %p713, %p714
    %p717 = scmp.ne.s32.totalorder %s702, %s716
    %p718 = scmp.eq.s32.totalorder %s83, 0
    %p719 = por %p717, %p718
    %s721 = sadd.s32 %s720, 1
    %p724 = scmp.eq.s32.totalorder %s77, 1
    %p725 = scmp.ne.s32.totalorder %s720, %s722
    %p726 = scmp.eq.s32.totalorder %s77, 0
    %p727 = por %p725, %p726
    %p728 = scmp.ne.s32.totalorder %s720, %s722
    %p729 = scmp.eq.s32.totalorder %s82, 1
    %p730 = por %p728, %p729
    %p731 = scmp.ne.s32.totalorder %s722, %s723
    %p732 = scmp.eq.s32.totalorder %s82, 0
    %p733 = por %p731, %p732
    %p734 = scmp.ne.s32.totalorder %s722, %s723
    %p735 = scmp.eq.s32.totalorder %s83, 1
    %p736 = por %p734, %p735
    %p738 = scmp.ne.s32.totalorder %s723, %s737
    %p739 = scmp.eq.s32.totalorder %s83, 0
    %p740 = por %p738, %p739
    %s742 = sadd.s32 %s741, 1
    %p745 = scmp.eq.s32.totalorder %s77, 1
    %p746 = scmp.ne.s32.totalorder %s741, %s743
    %p747 = scmp.eq.s32.totalorder %s77, 0
    %p748 = por %p746, %p747
    %p749 = scmp.ne.s32.totalorder %s741, %s743
    %p750 = scmp.eq.s32.totalorder %s82, 1
    %p751 = por %p749, %p750
    %p752 = scmp.ne.s32.totalorder %s743, %s744
    %p753 = scmp.eq.s32.totalorder %s82, 0
    %p754 = por %p752, %p753
    %p755 = scmp.ne.s32.totalorder %s743, %s744
    %p756 = scmp.eq.s32.totalorder %s83, 1
    %p757 = por %p755, %p756
    %p759 = scmp.ne.s32.totalorder %s744, %s758
    %p760 = scmp.eq.s32.totalorder %s83, 0
    %p761 = por %p759, %p760
    %s763 = sadd.s32 %s762, 1
    %p766 = scmp.eq.s32.totalorder %s77, 1
    %p767 = scmp.ne.s32.totalorder %s762, %s764
    %p768 = scmp.eq.s32.totalorder %s77, 0
    %p769 = por %p767, %p768
    %p770 = scmp.ne.s32.totalorder %s762, %s764
    %p771 = scmp.eq.s32.totalorder %s82, 1
    %p772 = por %p770, %p771
    %p773 = scmp.ne.s32.totalorder %s764, %s765
    %p774 = scmp.eq.s32.totalorder %s82, 0
    %p775 = por %p773, %p774
    %p776 = scmp.ne.s32.totalorder %s764, %s765
    %p777 = scmp.eq.s32.totalorder %s83, 1
    %p778 = por %p776, %p777
    %p780 = scmp.ne.s32.totalorder %s765, %s779
    %p781 = scmp.eq.s32.totalorder %s83, 0
    %p782 = por %p780, %p781
    %s784 = sadd.s32 %s783, 1
    %p787 = scmp.eq.s32.totalorder %s77, 1
    %p788 = scmp.ne.s32.totalorder %s783, %s785
    %p789 = scmp.eq.s32.totalorder %s77, 0
    %p790 = por %p788, %p789
    %p791 = scmp.ne.s32.totalorder %s783, %s785
    %p792 = scmp.eq.s32.totalorder %s82, 1
    %p793 = por %p791, %p792
    %p794 = scmp.ne.s32.totalorder %s785, %s786
    %p795 = scmp.eq.s32.totalorder %s82, 0
    %p796 = por %p794, %p795
    %p797 = scmp.ne.s32.totalorder %s785, %s786
    %p798 = scmp.eq.s32.totalorder %s83, 1
    %p799 = por %p797, %p798
    %p801 = scmp.ne.s32.totalorder %s786, %s800
    %p802 = scmp.eq.s32.totalorder %s83, 0
    %p803 = por %p801, %p802
    %s805 = sadd.s32 %s804, 1
    %p808 = scmp.eq.s32.totalorder %s77, 1
    %p809 = scmp.ne.s32.totalorder %s804, %s806
    %p810 = scmp.eq.s32.totalorder %s77, 0
    %p811 = por %p809, %p810
    %p812 = scmp.ne.s32.totalorder %s804, %s806
    %p813 = scmp.eq.s32.totalorder %s82, 1
    %p814 = por %p812, %p813
    %p815 = scmp.ne.s32.totalorder %s806, %s807
    %p816 = scmp.eq.s32.totalorder %s82, 0
    %p817 = por %p815, %p816
    %p818 = scmp.ne.s32.totalorder %s806, %s807
    %p819 = scmp.eq.s32.totalorder %s83, 1
    %p820 = por %p818, %p819
    %p822 = scmp.ne.s32.totalorder %s807, %s821
    %p823 = scmp.eq.s32.totalorder %s83, 0
    %p824 = por %p822, %p823
    %s825 = ssub.s32 %s77, %s84
    %p826 = scmp.eq.s32.totalorder %s825, 0
    %s828 = sadd.s32 %s827, 1
    %s829 = scalar_select %p826, %s827, %s828
    %p832 = pneg %p826
    %p833 = scmp.eq.s32.totalorder %s77, 1
    %p834 = por %p832, %p833
    %p835 = scmp.ne.s32.totalorder %s827, %s830
    %p836 = scmp.eq.s32.totalorder %s77, 0
    %p837 = por %p835, %p836
    %p838 = scmp.ne.s32.totalorder %s827, %s830
    %p839 = scmp.eq.s32.totalorder %s82, 1
    %p840 = por %p838, %p839
    %p841 = scmp.ne.s32.totalorder %s830, %s831
    %p842 = scmp.eq.s32.totalorder %s82, 0
    %p843 = por %p841, %p842
    %p844 = scmp.ne.s32.totalorder %s830, %s831
    %p845 = scmp.eq.s32.totalorder %s83, 1
    %p846 = por %p844, %p845
    %p848 = scmp.ne.s32.totalorder %s831, %s847
    %p849 = scmp.eq.s32.totalorder %s83, 0
    %p850 = por %p848, %p849
    %p851 = scmp.le.s32.totalorder 1, %s77
    %p852 = scmp.lt.s32.totalorder %s77, 3
    %p853 = pnand %p851, %p852
    %p854 = pneg %p853
    // Predicated region
    $region9: #{hourglass_forward.1} parent=5 // pred_check
      _
    $region10: #{hourglass_forward.1} parent=5 // pred_check_branch
      %856 = sbr.rel (%p853) target = $region12
    $region11: #{hourglass_forward.1} parent=5 // pred_region
      %s857 = ssub.s32 %s77, 1
      // Predicated region
      $region13: #{hourglass_forward.1} parent=11 // pred_check
        %p858 = pneg %p124
      $region14: #{hourglass_forward.1} parent=11 // pred_check_branch
        %860 = sbr.rel (%p858) target = $region16
      $region15: #{hourglass_forward.1} parent=11 // pred_region
        _
      $region16: #{hourglass_forward.1} parent=11 // pred_fallthru
        _
      // Predicated region
      $region17: #{hourglass_forward.1} parent=11 // pred_check
        %p861 = pneg %p145
      $region18: #{hourglass_forward.1} parent=11 // pred_check_branch
        %863 = sbr.rel (%p861) target = $region20
      $region19: #{hourglass_forward.1} parent=11 // pred_region
        _
      $region20: #{hourglass_forward.1} parent=11 // pred_fallthru
        _
      // Predicated region
      $region21: #{hourglass_forward.1} parent=11 // pred_check
        %p864 = pneg %p166
      $region22: #{hourglass_forward.1} parent=11 // pred_check_branch
        %866 = sbr.rel (%p864) target = $region24
      $region23: #{hourglass_forward.1} parent=11 // pred_region
        _
      $region24: #{hourglass_forward.1} parent=11 // pred_fallthru
        _
      // Predicated region
      $region25: #{hourglass_forward.1} parent=11 // pred_check
        %p867 = pneg %p187
      $region26: #{hourglass_forward.1} parent=11 // pred_check_branch
        %869 = sbr.rel (%p867) target = $region28
      $region27: #{hourglass_forward.1} parent=11 // pred_region
        _
      $region28: #{hourglass_forward.1} parent=11 // pred_fallthru
        _
      // Predicated region
      $region29: #{hourglass_forward.1} parent=11 // pred_check
        %p870 = pneg %p208
      $region30: #{hourglass_forward.1} parent=11 // pred_check_branch
        %872 = sbr.rel (%p870) target = $region32
      $region31: #{hourglass_forward.1} parent=11 // pred_region
        _
      $region32: #{hourglass_forward.1} parent=11 // pred_fallthru
        _
      // Predicated region
      $region33: #{hourglass_forward.1} parent=11 // pred_check
        %p873 = pneg %p229
      $region34: #{hourglass_forward.1} parent=11 // pred_check_branch
        %875 = sbr.rel (%p873) target = $region36
      $region35: #{hourglass_forward.1} parent=11 // pred_region
        _
      $region36: #{hourglass_forward.1} parent=11 // pred_fallthru
        _
      // Predicated region
      $region37: #{hourglass_forward.1} parent=11 // pred_check
        %p876 = pneg %p250
      $region38: #{hourglass_forward.1} parent=11 // pred_check_branch
        %878 = sbr.rel (%p876) target = $region40
      $region39: #{hourglass_forward.1} parent=11 // pred_region
        _
      $region40: #{hourglass_forward.1} parent=11 // pred_fallthru
        _
      // Predicated region
      $region41: #{hourglass_forward.1} parent=11 // pred_check
        %p879 = pneg %p271
      $region42: #{hourglass_forward.1} parent=11 // pred_check_branch
        %881 = sbr.rel (%p879) target = $region44
      $region43: #{hourglass_forward.1} parent=11 // pred_region
        _
      $region44: #{hourglass_forward.1} parent=11 // pred_fallthru
        _
      // Predicated region
      $region45: #{hourglass_forward.1} parent=11 // pred_check
        %p882 = pneg %p292
      $region46: #{hourglass_forward.1} parent=11 // pred_check_branch
        %884 = sbr.rel (%p882) target = $region48
      $region47: #{hourglass_forward.1} parent=11 // pred_region
        _
      $region48: #{hourglass_forward.1} parent=11 // pred_fallthru
        _
      // Predicated region
      $region49: #{hourglass_forward.1} parent=11 // pred_check
        %p885 = pneg %p313
      $region50: #{hourglass_forward.1} parent=11 // pred_check_branch
        %887 = sbr.rel (%p885) target = $region52
      $region51: #{hourglass_forward.1} parent=11 // pred_region
        _
      $region52: #{hourglass_forward.1} parent=11 // pred_fallthru
        _
      // Predicated region
      $region53: #{hourglass_forward.1} parent=11 // pred_check
        %p888 = pneg %p334
      $region54: #{hourglass_forward.1} parent=11 // pred_check_branch
        %890 = sbr.rel (%p888) target = $region56
      $region55: #{hourglass_forward.1} parent=11 // pred_region
        _
      $region56: #{hourglass_forward.1} parent=11 // pred_fallthru
        _
      // Predicated region
      $region57: #{hourglass_forward.1} parent=11 // pred_check
        %p891 = pneg %p355
      $region58: #{hourglass_forward.1} parent=11 // pred_check_branch
        %893 = sbr.rel (%p891) target = $region60
      $region59: #{hourglass_forward.1} parent=11 // pred_region
        _
      $region60: #{hourglass_forward.1} parent=11 // pred_fallthru
        _
      // Predicated region
      $region61: #{hourglass_forward.1} parent=11 // pred_check
        %p894 = pneg %p376
      $region62: #{hourglass_forward.1} parent=11 // pred_check_branch
        %896 = sbr.rel (%p894) target = $region64
      $region63: #{hourglass_forward.1} parent=11 // pred_region
        _
      $region64: #{hourglass_forward.1} parent=11 // pred_fallthru
        _
      // Predicated region
      $region65: #{hourglass_forward.1} parent=11 // pred_check
        %p897 = pneg %p397
      $region66: #{hourglass_forward.1} parent=11 // pred_check_branch
        %899 = sbr.rel (%p897) target = $region68
      $region67: #{hourglass_forward.1} parent=11 // pred_region
        _
      $region68: #{hourglass_forward.1} parent=11 // pred_fallthru
        _
      // Predicated region
      $region69: #{hourglass_forward.1} parent=11 // pred_check
        %p900 = pneg %p418
      $region70: #{hourglass_forward.1} parent=11 // pred_check_branch
        %902 = sbr.rel (%p900) target = $region72
      $region71: #{hourglass_forward.1} parent=11 // pred_region
        _
      $region72: #{hourglass_forward.1} parent=11 // pred_fallthru
        _
      // Predicated region
      $region73: #{hourglass_forward.1} parent=11 // pred_check
        %p903 = pneg %p439
      $region74: #{hourglass_forward.1} parent=11 // pred_check_branch
        %905 = sbr.rel (%p903) target = $region76
      $region75: #{hourglass_forward.1} parent=11 // pred_region
        _
      $region76: #{hourglass_forward.1} parent=11 // pred_fallthru
        _
      // Predicated region
      $region77: #{hourglass_forward.1} parent=11 // pred_check
        %p906 = pneg %p460
      $region78: #{hourglass_forward.1} parent=11 // pred_check_branch
        %908 = sbr.rel (%p906) target = $region80
      $region79: #{hourglass_forward.1} parent=11 // pred_region
        _
      $region80: #{hourglass_forward.1} parent=11 // pred_fallthru
        _
      // Predicated region
      $region81: #{hourglass_forward.1} parent=11 // pred_check
        %p909 = pneg %p481
      $region82: #{hourglass_forward.1} parent=11 // pred_check_branch
        %911 = sbr.rel (%p909) target = $region84
      $region83: #{hourglass_forward.1} parent=11 // pred_region
        _
      $region84: #{hourglass_forward.1} parent=11 // pred_fallthru
        _
      // Predicated region
      $region85: #{hourglass_forward.1} parent=11 // pred_check
        %p912 = pneg %p502
      $region86: #{hourglass_forward.1} parent=11 // pred_check_branch
        %914 = sbr.rel (%p912) target = $region88
      $region87: #{hourglass_forward.1} parent=11 // pred_region
        _
      $region88: #{hourglass_forward.1} parent=11 // pred_fallthru
        _
      // Predicated region
      $region89: #{hourglass_forward.1} parent=11 // pred_check
        %p915 = pneg %p523
      $region90: #{hourglass_forward.1} parent=11 // pred_check_branch
        %917 = sbr.rel (%p915) target = $region92
      $region91: #{hourglass_forward.1} parent=11 // pred_region
        _
      $region92: #{hourglass_forward.1} parent=11 // pred_fallthru
        _
      // Predicated region
      $region93: #{hourglass_forward.1} parent=11 // pred_check
        %p918 = pneg %p544
      $region94: #{hourglass_forward.1} parent=11 // pred_check_branch
        %920 = sbr.rel (%p918) target = $region96
      $region95: #{hourglass_forward.1} parent=11 // pred_region
        _
      $region96: #{hourglass_forward.1} parent=11 // pred_fallthru
        _
      // Predicated region
      $region97: #{hourglass_forward.1} parent=11 // pred_check
        %p921 = pneg %p565
      $region98: #{hourglass_forward.1} parent=11 // pred_check_branch
        %923 = sbr.rel (%p921) target = $region100
      $region99: #{hourglass_forward.1} parent=11 // pred_region
        _
      $region100: #{hourglass_forward.1} parent=11 // pred_fallthru
        _
      // Predicated region
      $region101: #{hourglass_forward.1} parent=11 // pred_check
        %p924 = pneg %p586
      $region102: #{hourglass_forward.1} parent=11 // pred_check_branch
        %926 = sbr.rel (%p924) target = $region104
      $region103: #{hourglass_forward.1} parent=11 // pred_region
        _
      $region104: #{hourglass_forward.1} parent=11 // pred_fallthru
        _
      // Predicated region
      $region105: #{hourglass_forward.1} parent=11 // pred_check
        %p927 = pneg %p607
      $region106: #{hourglass_forward.1} parent=11 // pred_check_branch
        %929 = sbr.rel (%p927) target = $region108
      $region107: #{hourglass_forward.1} parent=11 // pred_region
        _
      $region108: #{hourglass_forward.1} parent=11 // pred_fallthru
        _
      // Predicated region
      $region109: #{hourglass_forward.1} parent=11 // pred_check
        %p930 = pneg %p628
      $region110: #{hourglass_forward.1} parent=11 // pred_check_branch
        %932 = sbr.rel (%p930) target = $region112
      $region111: #{hourglass_forward.1} parent=11 // pred_region
        _
      $region112: #{hourglass_forward.1} parent=11 // pred_fallthru
        _
      // Predicated region
      $region113: #{hourglass_forward.1} parent=11 // pred_check
        %p933 = pneg %p649
      $region114: #{hourglass_forward.1} parent=11 // pred_check_branch
        %935 = sbr.rel (%p933) target = $region116
      $region115: #{hourglass_forward.1} parent=11 // pred_region
        _
      $region116: #{hourglass_forward.1} parent=11 // pred_fallthru
        _
      // Predicated region
      $region117: #{hourglass_forward.1} parent=11 // pred_check
        %p936 = pneg %p670
      $region118: #{hourglass_forward.1} parent=11 // pred_check_branch
        %938 = sbr.rel (%p936) target = $region120
      $region119: #{hourglass_forward.1} parent=11 // pred_region
        _
      $region120: #{hourglass_forward.1} parent=11 // pred_fallthru
        _
      // Predicated region
      $region121: #{hourglass_forward.1} parent=11 // pred_check
        %p939 = pneg %p691
      $region122: #{hourglass_forward.1} parent=11 // pred_check_branch
        %941 = sbr.rel (%p939) target = $region124
      $region123: #{hourglass_forward.1} parent=11 // pred_region
        _
      $region124: #{hourglass_forward.1} parent=11 // pred_fallthru
        _
      // Predicated region
      $region125: #{hourglass_forward.1} parent=11 // pred_check
        %p942 = pneg %p712
      $region126: #{hourglass_forward.1} parent=11 // pred_check_branch
        %944 = sbr.rel (%p942) target = $region128
      $region127: #{hourglass_forward.1} parent=11 // pred_region
        _
      $region128: #{hourglass_forward.1} parent=11 // pred_fallthru
        _
      // Predicated region
      $region129: #{hourglass_forward.1} parent=11 // pred_check
        %p945 = pneg %p733
      $region130: #{hourglass_forward.1} parent=11 // pred_check_branch
        %947 = sbr.rel (%p945) target = $region132
      $region131: #{hourglass_forward.1} parent=11 // pred_region
        _
      $region132: #{hourglass_forward.1} parent=11 // pred_fallthru
        _
      // Predicated region
      $region133: #{hourglass_forward.1} parent=11 // pred_check
        %p948 = pneg %p754
      $region134: #{hourglass_forward.1} parent=11 // pred_check_branch
        %950 = sbr.rel (%p948) target = $region136
      $region135: #{hourglass_forward.1} parent=11 // pred_region
        _
      $region136: #{hourglass_forward.1} parent=11 // pred_fallthru
        _
      // Predicated region
      $region137: #{hourglass_forward.1} parent=11 // pred_check
        %p951 = pneg %p775
      $region138: #{hourglass_forward.1} parent=11 // pred_check_branch
        %953 = sbr.rel (%p951) target = $region140
      $region139: #{hourglass_forward.1} parent=11 // pred_region
        _
      $region140: #{hourglass_forward.1} parent=11 // pred_fallthru
        _
      // Predicated region
      $region141: #{hourglass_forward.1} parent=11 // pred_check
        %p954 = pneg %p796
      $region142: #{hourglass_forward.1} parent=11 // pred_check_branch
        %956 = sbr.rel (%p954) target = $region144
      $region143: #{hourglass_forward.1} parent=11 // pred_region
        _
      $region144: #{hourglass_forward.1} parent=11 // pred_fallthru
        _
      // Predicated region
      $region145: #{hourglass_forward.1} parent=11 // pred_check
        %p957 = pneg %p817
      $region146: #{hourglass_forward.1} parent=11 // pred_check_branch
        %959 = sbr.rel (%p957) target = $region148
      $region147: #{hourglass_forward.1} parent=11 // pred_region
        _
      $region148: #{hourglass_forward.1} parent=11 // pred_fallthru
        _
    $region12: #{hourglass_forward.1} parent=5 // pred_fallthru
      _
    %p960 = scmp.lt.s32.totalorder %s77, 2
    // Predicated region
    $region149: #{hourglass_forward.1} parent=5 // pred_check
      %p961 = pneg %p960
    $region150: #{hourglass_forward.1} parent=5 // pred_check_branch
      %963 = sbr.rel (%p961) target = $region152
    $region151: #{hourglass_forward.1} parent=5 // pred_region
      // Predicated region
      $region153: #{hourglass_forward.1} parent=151 // pred_check
        %p964 = pneg %p97
      $region154: #{hourglass_forward.1} parent=151 // pred_check_branch
        %966 = sbr.rel (%p964) target = $region156
      $region155: #{hourglass_forward.1} parent=151 // pred_region
        %p967 = scmp.lt.s32.totalorder %s77, 1
        %s968 = scalar_select %p967, %s77, 1
        %s969 = smul.addr %s968, 3
        %s970 = smul.addr %s969, 8
        %s971 = scalar_lea.vmem %s1, %s970
      $region156: #{hourglass_forward.1} parent=151 // pred_fallthru
        _
    $region152: #{hourglass_forward.1} parent=5 // pred_fallthru
      _
    %p972 = scmp.le.s32.totalorder 1, %s77
    %p973 = scmp.lt.s32.totalorder %s77, 3
    %p974 = pnand %p972, %p973
    %p975 = pneg %p974
    // Predicated region
    $region157: #{hourglass_forward.1} parent=5 // pred_check
      _
    $region158: #{hourglass_forward.1} parent=5 // pred_check_branch
      %977 = sbr.rel (%p974) target = $region160
    $region159: #{hourglass_forward.1} parent=5 // pred_region
      %s978 = ssub.s32 %s77, 1
      %p979 = scmp.lt.s32.totalorder %s82, 1
      %s980 = scalar_select %p979, %s82, 1
      %s981 = smul.addr %s980, 3
      %s982 = smul.addr %s981, 8
      %s983 = scalar_lea.vmem %s1, %s982
      %p984 = pneg %p103
      %p985 = pneg %p100
      %p986 = pneg %p124
      %p987 = pneg %p121
      %p988 = pneg %p145
      %p989 = pneg %p142
      %p990 = pneg %p166
      %p991 = pneg %p163
      %p992 = pneg %p187
      %p993 = pneg %p184
      %p994 = pneg %p208
      %p995 = pneg %p205
      %p996 = pneg %p229
      %p997 = pneg %p226
      %p998 = pneg %p250
      %p999 = pneg %p247
      %p1000 = pneg %p271
      %p1001 = pneg %p268
      %p1002 = pneg %p292
      %p1003 = pneg %p289
      %p1004 = pneg %p313
      %p1005 = pneg %p310
      %p1006 = pneg %p334
      %p1007 = pneg %p331
      %p1008 = pneg %p355
      %p1009 = pneg %p352
      %p1010 = pneg %p376
      %p1011 = pneg %p373
      %p1012 = pneg %p397
      %p1013 = pneg %p394
      %p1014 = pneg %p418
      %p1015 = pneg %p415
      %p1016 = pneg %p439
      %p1017 = pneg %p436
      %p1018 = pneg %p460
      %p1019 = pneg %p457
      %p1020 = pneg %p481
      %p1021 = pneg %p478
      %p1022 = pneg %p502
      %p1023 = pneg %p499
      %p1024 = pneg %p523
      %p1025 = pneg %p520
      %p1026 = pneg %p544
      %p1027 = pneg %p541
      %p1028 = pneg %p565
      %p1029 = pneg %p562
      %p1030 = pneg %p586
      %p1031 = pneg %p583
      %p1032 = pneg %p607
      %p1033 = pneg %p604
      %p1034 = pneg %p628
      %p1035 = pneg %p625
      %p1036 = pneg %p649
      %p1037 = pneg %p646
      %p1038 = pneg %p670
      %p1039 = pneg %p667
      %p1040 = pneg %p691
      %p1041 = pneg %p688
      %p1042 = pneg %p712
      %p1043 = pneg %p709
      %p1044 = pneg %p733
      %p1045 = pneg %p730
      %p1046 = pneg %p754
      %p1047 = pneg %p751
      %p1048 = pneg %p775
      %p1049 = pneg %p772
      %p1050 = pneg %p796
      %p1051 = pneg %p793
      %p1052 = pneg %p817
      %p1053 = pneg %p814
      %p1054 = pneg %p843
      %p1055 = pneg %p840
      %p1056 = scmp.lt.s32.totalorder %s82, 1
      %s1057 = scalar_select %p1056, %s82, 1
      %s1058 = smul.addr %s1057, 3
      %s1059 = smul.addr %s1058, 8
      %s1060 = scalar_lea.vmem %s71, %s1059
      %p1061 = scmp.lt.s32.totalorder %s82, 1
      %s1062 = scalar_select %p1061, %s82, 1
      %s1063 = smul.addr %s1062, 3
      %s1064 = smul.addr %s1063, 8
      %s1065 = scalar_lea.vmem %s1, %s1064
      %p1066 = scmp.lt.s32.totalorder %s82, 1
      %s1067 = scalar_select %p1066, %s82, 1
      %s1068 = smul.addr %s1067, 3
      %s1069 = smul.addr %s1068, 8
      %s1070 = scalar_lea.vmem %s71, %s1069
      %v1071 = vld [vmem:[%s1065] sm:$0xff]
      %v1072 = vld [vmem:[%s1065 + $0x8] sm:$0xff]
      %v1073 = vld [vmem:[%s1065 + $0x10] sm:$0xff]
      %v1074 = vld [vmem:[%s63] sm:$0x7]
      %v1075 = vld [vmem:[%s65] sm:$0x1]
      %1076 = vrot.lane.b32.xlu0 %v1071, 19
      %v1077 = vpop.permute.xlu0 %1076
      %1078 = vrot.lane.b32.xlu0 %v1072, 19
      %v1079 = vpop.permute.xlu0 %1078
      %1080 = vrot.lane.b32.xlu0 %v1073, 19
      %v1081 = vpop.permute.xlu0 %1080
      %v1082 = vlaneseq
      %v1083 = vand.u32 %v1082, 127
      %vm1084 = vcmp.lt.s32.totalorder %v1083, 19
      %v1085 = vsel %vm1084, %v1079, %v1081
      %v1086 = vsel %vm1084, %v1077, %v1079
      %v1087 = vsel %vm1084, %v1081, %v1077
      %1088 = vrot.lane.b32.xlu0 %v1071, 18
      %v1089 = vpop.permute.xlu0 %1088
      %1090 = vrot.lane.b32.xlu0 %v1072, 18
      %v1091 = vpop.permute.xlu0 %1090
      %1092 = vrot.lane.b32.xlu0 %v1073, 18
      %v1093 = vpop.permute.xlu0 %1092
      %vm1094 = vcmp.lt.s32.totalorder %v1083, 18
      %v1095 = vsel %vm1094, %v1091, %v1093
      %v1096 = vsel %vm1094, %v1089, %v1091
      %v1097 = vsel %vm1094, %v1093, %v1089
      %1098 = vrot.lane.b32.xlu0 %v1071, 17
      %v1099 = vpop.permute.xlu0 %1098
      %1100 = vrot.lane.b32.xlu0 %v1072, 17
      %v1101 = vpop.permute.xlu0 %1100
      %1102 = vrot.lane.b32.xlu0 %v1073, 17
      %v1103 = vpop.permute.xlu0 %1102
      %vm1104 = vcmp.lt.s32.totalorder %v1083, 17
      %v1105 = vsel %vm1104, %v1101, %v1103
      %v1106 = vsel %vm1104, %v1099, %v1101
      %v1107 = vsel %vm1104, %v1103, %v1099
      %1108 = vrot.lane.b32.xlu0 %v1071, 1
      %v1109 = vpop.permute.xlu0 %1108
      %1110 = vrot.lane.b32.xlu0 %v1072, 1
      %v1111 = vpop.permute.xlu0 %1110
      %1112 = vrot.lane.b32.xlu0 %v1073, 1
      %v1113 = vpop.permute.xlu0 %1112
      %vm1114 = vcmp.lt.s32.totalorder %v1083, 1
      %v1115 = vsel %vm1114, %v1111, %v1113
      %v1116 = vsel %vm1114, %v1109, %v1111
      %v1117 = vsel %vm1114, %v1113, %v1109
      %1118 = vrot.lane.b32.xlu0 %v1071, 127
      %v1119 = vpop.permute.xlu0 %1118
      %1120 = vrot.lane.b32.xlu0 %v1072, 127
      %v1121 = vpop.permute.xlu0 %1120
      %1122 = vrot.lane.b32.xlu0 %v1073, 127
      %v1123 = vpop.permute.xlu0 %1122
      %vm1124 = vcmp.lt.s32.totalorder %v1083, 127
      %v1125 = vsel %vm1124, %v1121, %v1123
      %v1126 = vsel %vm1124, %v1119, %v1121
      %v1127 = vsel %vm1124, %v1123, %v1119
      %1128 = vrot.lane.b32.xlu0 %v1071, 111
      %v1129 = vpop.permute.xlu0 %1128
      %1130 = vrot.lane.b32.xlu0 %v1072, 111
      %v1131 = vpop.permute.xlu0 %1130
      %1132 = vrot.lane.b32.xlu0 %v1073, 111
      %v1133 = vpop.permute.xlu0 %1132
      %vm1134 = vcmp.lt.s32.totalorder %v1083, 111
      %v1135 = vsel %vm1134, %v1131, %v1133
      %v1136 = vsel %vm1134, %v1129, %v1131
      %v1137 = vsel %vm1134, %v1133, %v1129
      %1138 = vrot.lane.b32.xlu0 %v1071, 110
      %v1139 = vpop.permute.xlu0 %1138
      %1140 = vrot.lane.b32.xlu0 %v1072, 110
      %v1141 = vpop.permute.xlu0 %1140
      %1142 = vrot.lane.b32.xlu0 %v1073, 110
      %v1143 = vpop.permute.xlu0 %1142
      %vm1144 = vcmp.lt.s32.totalorder %v1083, 110
      %v1145 = vsel %vm1144, %v1141, %v1143
      %v1146 = vsel %vm1144, %v1139, %v1141
      %v1147 = vsel %vm1144, %v1143, %v1139
      %1148 = vrot.lane.b32.xlu0 %v1071, 109
      %v1149 = vpop.permute.xlu0 %1148
      %1150 = vrot.lane.b32.xlu0 %v1072, 109
      %v1151 = vpop.permute.xlu0 %1150
      %1152 = vrot.lane.b32.xlu0 %v1073, 109
      %v1153 = vpop.permute.xlu0 %1152
      %vm1154 = vcmp.lt.s32.totalorder %v1083, 109
      %v1155 = vsel %vm1154, %v1151, %v1153
      %v1156 = vsel %vm1154, %v1149, %v1151
      %v1157 = vsel %vm1154, %v1153, %v1149
      %v1158 = vld [vmem:[%s11] sm:$0xff]
      %vm1159 = vcmask 588800
      %v1161 = vsel %vm1159, %v1158, 0
      %1163 = vmatpush.msra.mxu0 0.0
      %1164 = vmatpush.msra.mxu0 0.0
      %1165 = vmatpush.msra.mxu0 0.0
      %1166 = vmatpush.msra.mxu0 0.0
      %1167 = vmatpush.msra.mxu0 0.0
      %1168 = vmatpush.msra.mxu0 0.0
      %1169 = vmatpush.msra.mxu0 0.0
      %1170 = vmatpush.msra.mxu0 %v1156
      %1171 = vmatpush.msra.mxu0 %v1146
      %1172 = vmatpush.msra.mxu0 %v1136
      %1173 = vmatpush.msra.mxu0 %v1126
      %1174 = vmatpush.msra.mxu0 %v1071
      %1175 = vmatpush.msra.mxu0 %v1117
      %1176 = vmatpush.msra.mxu0 %v1107
      %1177 = vmatpush.msra.mxu0 %v1097
      %1178 = vmatpush.msra.mxu0 %v1087
      %1179 = vmatmul.f32.gmra.mxu0 %v1161
      %v1180 = vpop.f32.mrf.mxu0
      %v1181 = vadd.f32 0.0, %v1180
      %1182 = vdwg.mxu0
      %1183 = vmatpush.msra.mxu0 0.0
      %1184 = vmatpush.msra.mxu0 0.0
      %1185 = vmatpush.msra.mxu0 0.0
      %1186 = vmatpush.msra.mxu0 0.0
      %1187 = vmatpush.msra.mxu0 0.0
      %1188 = vmatpush.msra.mxu0 0.0
      %1189 = vmatpush.msra.mxu0 0.0
      %1190 = vmatpush.msra.mxu0 %v1155
      %1191 = vmatpush.msra.mxu0 %v1145
      %1192 = vmatpush.msra.mxu0 %v1135
      %1193 = vmatpush.msra.mxu0 %v1125
      %1194 = vmatpush.msra.mxu0 %v1072
      %1195 = vmatpush.msra.mxu0 %v1116
      %1196 = vmatpush.msra.mxu0 %v1106
      %1197 = vmatpush.msra.mxu0 %v1096
      %1198 = vmatpush.msra.mxu0 %v1086
      %1199 = vmatmul.f32.gmra.mxu0 %v1161
      %v1200 = vpop.f32.mrf.mxu0
      %v1201 = vadd.f32 0.0, %v1200
      %1202 = vdwg.mxu0
      %1203 = vmatpush.msra.mxu0 0.0
      %1204 = vmatpush.msra.mxu0 0.0
      %1205 = vmatpush.msra.mxu0 0.0
      %1206 = vmatpush.msra.mxu0 0.0
      %1207 = vmatpush.msra.mxu0 0.0
      %1208 = vmatpush.msra.mxu0 0.0
      %1209 = vmatpush.msra.mxu0 0.0
      %1210 = vmatpush.msra.mxu0 %v1157
      %1211 = vmatpush.msra.mxu0 %v1147
      %1212 = vmatpush.msra.mxu0 %v1137
      %1213 = vmatpush.msra.mxu0 %v1127
      %1214 = vmatpush.msra.mxu0 %v1073
      %1215 = vmatpush.msra.mxu0 %v1115
      %1216 = vmatpush.msra.mxu0 %v1105
      %1217 = vmatpush.msra.mxu0 %v1095
      %1218 = vmatpush.msra.mxu0 %v1085
      %1219 = vmatmul.f32.gmra.mxu0 %v1161
      %v1220 = vpop.f32.mrf.mxu0
      %v1221 = vadd.f32 0.0, %v1220
      %1222 = vdwg.mxu0
      %v1223 = vld [vmem:[%s7] sm:$0xff]
      %1225 = vset.pattern.permute.xlu0 0
      %1226 = vperm.xlu0 %1225, %v1223
      %v1227 = vpop.permute.xlu0 %1226
      %v1229 = vmul.f32 %v1181, %v1227
      %v1230 = vmul.f32 %v1201, %v1227
      %v1231 = vmul.f32 %v1221, %v1227
      %v1232 = vld [vmem:[%s3] sm:$0xff]
      %1234 = vset.pattern.permute.xlu0 0
      %1235 = vperm.xlu0 %1234, %v1232
      %v1236 = vpop.permute.xlu0 %1235
      %v1238 = vadd.f32 %v1229, %v1236
      %v1239 = vadd.f32 %v1230, %v1236
      %v1240 = vadd.f32 %v1231, %v1236
      %v1241 = vmax.f32 %v1238, 0.0
      %v1242 = vmax.f32 %v1239, 0.0
      %v1243 = vmax.f32 %v1240, 0.0
      %v1245 = vperm.slane %v1074, 0
      %v1246 = vperm.slane %v1074, 1
      %v1247 = vperm.slane %v1074, 2
      %v1251 = vmul.f32 %v1241, %v1245
      %v1252 = vmul.f32 %v1242, %v1246
      %v1253 = vmul.f32 %v1243, %v1247
      %1254 = vrot.lane.b32.xlu0 %v1251, 19
      %v1255 = vpop.permute.xlu0 %1254
      %1256 = vrot.lane.b32.xlu0 %v1252, 19
      %v1257 = vpop.permute.xlu0 %1256
      %1258 = vrot.lane.b32.xlu0 %v1253, 19
      %v1259 = vpop.permute.xlu0 %1258
      %v1260 = vsel %vm1084, %v1257, %v1259
      %v1261 = vsel %vm1084, %v1255, %v1257
      %v1262 = vsel %vm1084, %v1259, %v1255
      %1263 = vrot.lane.b32.xlu0 %v1251, 18
      %v1264 = vpop.permute.xlu0 %1263
      %1265 = vrot.lane.b32.xlu0 %v1252, 18
      %v1266 = vpop.permute.xlu0 %1265
      %1267 = vrot.lane.b32.xlu0 %v1253, 18
      %v1268 = vpop.permute.xlu0 %1267
      %v1269 = vsel %vm1094, %v1266, %v1268
      %v1270 = vsel %vm1094, %v1264, %v1266
      %v1271 = vsel %vm1094, %v1268, %v1264
      %1272 = vrot.lane.b32.xlu0 %v1251, 17
      %v1273 = vpop.permute.xlu0 %1272
      %1274 = vrot.lane.b32.xlu0 %v1252, 17
      %v1275 = vpop.permute.xlu0 %1274
      %1276 = vrot.lane.b32.xlu0 %v1253, 17
      %v1277 = vpop.permute.xlu0 %1276
      %v1278 = vsel %vm1104, %v1275, %v1277
      %v1279 = vsel %vm1104, %v1273, %v1275
      %v1280 = vsel %vm1104, %v1277, %v1273
      %1281 = vrot.lane.b32.xlu0 %v1251, 1
      %v1282 = vpop.permute.xlu0 %1281
      %1283 = vrot.lane.b32.xlu0 %v1252, 1
      %v1284 = vpop.permute.xlu0 %1283
      %1285 = vrot.lane.b32.xlu0 %v1253, 1
      %v1286 = vpop.permute.xlu0 %1285
      %v1287 = vsel %vm1114, %v1284, %v1286
      %v1288 = vsel %vm1114, %v1282, %v1284
      %v1289 = vsel %vm1114, %v1286, %v1282
      %1290 = vrot.lane.b32.xlu0 %v1251, 127
      %v1291 = vpop.permute.xlu0 %1290
      %1292 = vrot.lane.b32.xlu0 %v1252, 127
      %v1293 = vpop.permute.xlu0 %1292
      %1294 = vrot.lane.b32.xlu0 %v1253, 127
      %v1295 = vpop.permute.xlu0 %1294
      %v1296 = vsel %vm1124, %v1293, %v1295
      %v1297 = vsel %vm1124, %v1291, %v1293
      %v1298 = vsel %vm1124, %v1295, %v1291
      %1299 = vrot.lane.b32.xlu0 %v1251, 111
      %v1300 = vpop.permute.xlu0 %1299
      %1301 = vrot.lane.b32.xlu0 %v1252, 111
      %v1302 = vpop.permute.xlu0 %1301
      %1303 = vrot.lane.b32.xlu0 %v1253, 111
      %v1304 = vpop.permute.xlu0 %1303
      %v1305 = vsel %vm1134, %v1302, %v1304
      %v1306 = vsel %vm1134, %v1300, %v1302
      %v1307 = vsel %vm1134, %v1304, %v1300
      %1308 = vrot.lane.b32.xlu0 %v1251, 110
      %v1309 = vpop.permute.xlu0 %1308
      %1310 = vrot.lane.b32.xlu0 %v1252, 110
      %v1311 = vpop.permute.xlu0 %1310
      %1312 = vrot.lane.b32.xlu0 %v1253, 110
      %v1313 = vpop.permute.xlu0 %1312
      %v1314 = vsel %vm1144, %v1311, %v1313
      %v1315 = vsel %vm1144, %v1309, %v1311
      %v1316 = vsel %vm1144, %v1313, %v1309
      %1317 = vrot.lane.b32.xlu0 %v1251, 109
      %v1318 = vpop.permute.xlu0 %1317
      %1319 = vrot.lane.b32.xlu0 %v1252, 109
      %v1320 = vpop.permute.xlu0 %1319
      %1321 = vrot.lane.b32.xlu0 %v1253, 109
      %v1322 = vpop.permute.xlu0 %1321
      %v1323 = vsel %vm1154, %v1320, %v1322
      %v1324 = vsel %vm1154, %v1318, %v1320
      %v1325 = vsel %vm1154, %v1322, %v1318
      %v1326 = vld [vmem:[%s13] sm:$0xff]
      %v1328 = vsel %vm1159, %v1326, 0
      %1330 = vmatpush.msra.mxu0 0.0
      %1331 = vmatpush.msra.mxu0 0.0
      %1332 = vmatpush.msra.mxu0 0.0
      %1333 = vmatpush.msra.mxu0 0.0
      %1334 = vmatpush.msra.mxu0 0.0
      %1335 = vmatpush.msra.mxu0 0.0
      %1336 = vmatpush.msra.mxu0 0.0
      %1337 = vmatpush.msra.mxu0 %v1324
      %1338 = vmatpush.msra.mxu0 %v1315
      %1339 = vmatpush.msra.mxu0 %v1306
      %1340 = vmatpush.msra.mxu0 %v1297
      %1341 = vmatpush.msra.mxu0 %v1251
      %1342 = vmatpush.msra.mxu0 %v1289
      %1343 = vmatpush.msra.mxu0 %v1280
      %1344 = vmatpush.msra.mxu0 %v1271
      %1345 = vmatpush.msra.mxu0 %v1262
      %1346 = vmatmul.f32.gmra.mxu0 %v1328
      %v1347 = vpop.f32.mrf.mxu0
      %v1348 = vadd.f32 0.0, %v1347
      %1349 = vdwg.mxu0
      %1350 = vmatpush.msra.mxu0 0.0
      %1351 = vmatpush.msra.mxu0 0.0
      %1352 = vmatpush.msra.mxu0 0.0
      %1353 = vmatpush.msra.mxu0 0.0
      %1354 = vmatpush.msra.mxu0 0.0
      %1355 = vmatpush.msra.mxu0 0.0
      %1356 = vmatpush.msra.mxu0 0.0
      %1357 = vmatpush.msra.mxu0 %v1323
      %1358 = vmatpush.msra.mxu0 %v1314
      %1359 = vmatpush.msra.mxu0 %v1305
      %1360 = vmatpush.msra.mxu0 %v1296
      %1361 = vmatpush.msra.mxu0 %v1252
      %1362 = vmatpush.msra.mxu0 %v1288
      %1363 = vmatpush.msra.mxu0 %v1279
      %1364 = vmatpush.msra.mxu0 %v1270
      %1365 = vmatpush.msra.mxu0 %v1261
      %1366 = vmatmul.f32.gmra.mxu0 %v1328
      %v1367 = vpop.f32.mrf.mxu0
      %v1368 = vadd.f32 0.0, %v1367
      %1369 = vdwg.mxu0
      %1370 = vmatpush.msra.mxu0 0.0
      %1371 = vmatpush.msra.mxu0 0.0
      %1372 = vmatpush.msra.mxu0 0.0
      %1373 = vmatpush.msra.mxu0 0.0
      %1374 = vmatpush.msra.mxu0 0.0
      %1375 = vmatpush.msra.mxu0 0.0
      %1376 = vmatpush.msra.mxu0 0.0
      %1377 = vmatpush.msra.mxu0 %v1325
      %1378 = vmatpush.msra.mxu0 %v1316
      %1379 = vmatpush.msra.mxu0 %v1307
      %1380 = vmatpush.msra.mxu0 %v1298
      %1381 = vmatpush.msra.mxu0 %v1253
      %1382 = vmatpush.msra.mxu0 %v1287
      %1383 = vmatpush.msra.mxu0 %v1278
      %1384 = vmatpush.msra.mxu0 %v1269
      %1385 = vmatpush.msra.mxu0 %v1260
      %1386 = vmatmul.f32.gmra.mxu0 %v1328
      %v1387 = vpop.f32.mrf.mxu0
      %v1388 = vadd.f32 0.0, %v1387
      %1389 = vdwg.mxu0
      %v1390 = vld [vmem:[%s9] sm:$0xff]
      %1392 = vset.pattern.permute.xlu0 0
      %1393 = vperm.xlu0 %1392, %v1390
      %v1394 = vpop.permute.xlu0 %1393
      %v1396 = vmul.f32 %v1348, %v1394
      %v1397 = vmul.f32 %v1368, %v1394
      %v1398 = vmul.f32 %v1388, %v1394
      %v1399 = vld [vmem:[%s5] sm:$0xff]
      %1401 = vset.pattern.permute.xlu0 0
      %1402 = vperm.xlu0 %1401, %v1399
      %v1403 = vpop.permute.xlu0 %1402
      %v1405 = vadd.f32 %v1396, %v1403
      %v1406 = vadd.f32 %v1397, %v1403
      %v1407 = vadd.f32 %v1398, %v1403
      %v1408 = vadd.f32 %v1405, %v1071
      %v1409 = vadd.f32 %v1406, %v1072
      %v1410 = vadd.f32 %v1407, %v1073
      %v1411 = vmax.f32 %v1408, 0.0
      %v1412 = vmax.f32 %v1409, 0.0
      %v1413 = vmax.f32 %v1410, 0.0
      %v1414 = vmul.f32 %v1411, %v1245
      %v1415 = vmul.f32 %v1412, %v1246
      %v1416 = vmul.f32 %v1413, %v1247
      %v1417 = vld [vmem:[%s27] sm:$0xff]
      %v1419 = vsel %vm1159, %v1417, 0
      %1421 = vmatpush.msra.mxu0 0.0
      %1422 = vmatpush.msra.mxu0 0.0
      %1423 = vmatpush.msra.mxu0 0.0
      %1424 = vmatpush.msra.mxu0 0.0
      %1425 = vmatpush.msra.mxu0 0.0
      %1426 = vmatpush.msra.mxu0 0.0
      %1427 = vmatpush.msra.mxu0 0.0
      %1428 = vmatpush.msra.mxu0 %v1156
      %1429 = vmatpush.msra.mxu0 %v1146
      %1430 = vmatpush.msra.mxu0 %v1136
      %1431 = vmatpush.msra.mxu0 %v1126
      %1432 = vmatpush.msra.mxu0 %v1071
      %1433 = vmatpush.msra.mxu0 %v1117
      %1434 = vmatpush.msra.mxu0 %v1107
      %1435 = vmatpush.msra.mxu0 %v1097
      %1436 = vmatpush.msra.mxu0 %v1087
      %1437 = vmatmul.f32.gmra.mxu0 %v1419
      %v1438 = vpop.f32.mrf.mxu0
      %v1439 = vadd.f32 0.0, %v1438
      %1440 = vdwg.mxu0
      %1441 = vmatpush.msra.mxu0 0.0
      %1442 = vmatpush.msra.mxu0 0.0
      %1443 = vmatpush.msra.mxu0 0.0
      %1444 = vmatpush.msra.mxu0 0.0
      %1445 = vmatpush.msra.mxu0 0.0
      %1446 = vmatpush.msra.mxu0 0.0
      %1447 = vmatpush.msra.mxu0 0.0
      %1448 = vmatpush.msra.mxu0 %v1155
      %1449 = vmatpush.msra.mxu0 %v1145
      %1450 = vmatpush.msra.mxu0 %v1135
      %1451 = vmatpush.msra.mxu0 %v1125
      %1452 = vmatpush.msra.mxu0 %v1072
      %1453 = vmatpush.msra.mxu0 %v1116
      %1454 = vmatpush.msra.mxu0 %v1106
      %1455 = vmatpush.msra.mxu0 %v1096
      %1456 = vmatpush.msra.mxu0 %v1086
      %1457 = vmatmul.f32.gmra.mxu0 %v1419
      %v1458 = vpop.f32.mrf.mxu0
      %v1459 = vadd.f32 0.0, %v1458
      %1460 = vdwg.mxu0
      %1461 = vmatpush.msra.mxu0 0.0
      %1462 = vmatpush.msra.mxu0 0.0
      %1463 = vmatpush.msra.mxu0 0.0
      %1464 = vmatpush.msra.mxu0 0.0
      %1465 = vmatpush.msra.mxu0 0.0
      %1466 = vmatpush.msra.mxu0 0.0
      %1467 = vmatpush.msra.mxu0 0.0
      %1468 = vmatpush.msra.mxu0 %v1157
      %1469 = vmatpush.msra.mxu0 %v1147
      %1470 = vmatpush.msra.mxu0 %v1137
      %1471 = vmatpush.msra.mxu0 %v1127
      %1472 = vmatpush.msra.mxu0 %v1073
      %1473 = vmatpush.msra.mxu0 %v1115
      %1474 = vmatpush.msra.mxu0 %v1105
      %1475 = vmatpush.msra.mxu0 %v1095
      %1476 = vmatpush.msra.mxu0 %v1085
      %1477 = vmatmul.f32.gmra.mxu0 %v1419
      %v1478 = vpop.f32.mrf.mxu0
      %v1479 = vadd.f32 0.0, %v1478
      %1480 = vdwg.mxu0
      %v1481 = vld [vmem:[%s67] sm:$0xff]
      %v1482 = vld [vmem:[%s67 + $0x8] sm:$0xff]
      %v1483 = vld [vmem:[%s67 + $0x10] sm:$0xff]
      %v1484 = vld [vmem:[%s67 + $0x18] sm:$0xff]
      %v1485 = vld [vmem:[%s67 + $0x20] sm:$0xff]
      %v1486 = vld [vmem:[%s67 + $0x28] sm:$0xff]
      %v1487 = vld [vmem:[%s67 + $0x30] sm:$0xff]
      %v1488 = vld [vmem:[%s67 + $0x38] sm:$0xff]
      %v1489 = vld [vmem:[%s67 + $0x40] sm:$0xff]
      %v1490 = vld [vmem:[%s67 + $0x48] sm:$0xff]
      %v1491 = vld [vmem:[%s67 + $0x50] sm:$0xff]
      %v1492 = vld [vmem:[%s67 + $0x58] sm:$0xff]
      %v1493 = vld [vmem:[%s67 + $0x60] sm:$0xff]
      %v1494 = vld [vmem:[%s67 + $0x68] sm:$0xff]
      %v1495 = vld [vmem:[%s67 + $0x70] sm:$0xff]
      %v1496 = vld [vmem:[%s67 + $0x78] sm:$0xff]
      %v1497 = vld [vmem:[%s67 + $0x80] sm:$0xff]
      %v1498 = vld [vmem:[%s67 + $0x88] sm:$0xff]
      %v1499 = vld [vmem:[%s67 + $0x90] sm:$0xff]
      %v1500 = vld [vmem:[%s67 + $0x98] sm:$0xff]
      %v1501 = vld [vmem:[%s67 + $0xa0] sm:$0xff]
      %v1502 = vld [vmem:[%s67 + $0xa8] sm:$0xff]
      %v1503 = vld [vmem:[%s67 + $0xb0] sm:$0xff]
      %v1504 = vld [vmem:[%s67 + $0xb8] sm:$0xff]
      %v1505 = vld [vmem:[%s67 + $0xc0] sm:$0xff]
      %v1506 = vld [vmem:[%s67 + $0xc8] sm:$0xff]
      %v1507 = vld [vmem:[%s67 + $0xd0] sm:$0xff]
      %v1508 = vld [vmem:[%s67 + $0xd8] sm:$0xff]
      %v1509 = vld [vmem:[%s67 + $0xe0] sm:$0xff]
      %v1510 = vld [vmem:[%s67 + $0xe8] sm:$0xff]
      %v1511 = vld [vmem:[%s67 + $0xf0] sm:$0xff]
      %v1512 = vld [vmem:[%s67 + $0xf8] sm:$0xff]
      %v1513 = vld [vmem:[%s67 + $0x100] sm:$0xff]
      %v1514 = vld [vmem:[%s67 + $0x108] sm:$0xff]
      %v1515 = vld [vmem:[%s67 + $0x110] sm:$0xff]
      %v1516 = vld [vmem:[%s67 + $0x118] sm:$0xff]
      %v1517 = vld [vmem:[%s67 + $0x120] sm:$0xff]
      %v1518 = vld [vmem:[%s67 + $0x128] sm:$0xff]
      %v1519 = vld [vmem:[%s67 + $0x130] sm:$0xff]
      %v1520 = vld [vmem:[%s67 + $0x138] sm:$0xff]
      %v1521 = vld [vmem:[%s67 + $0x140] sm:$0xff]
      %v1522 = vld [vmem:[%s67 + $0x148] sm:$0xff]
      %v1523 = vld [vmem:[%s67 + $0x150] sm:$0xff]
      %v1524 = vld [vmem:[%s67 + $0x158] sm:$0xff]
      %v1525 = vld [vmem:[%s67 + $0x160] sm:$0xff]
      %v1526 = vld [vmem:[%s67 + $0x168] sm:$0xff]
      %v1527 = vld [vmem:[%s67 + $0x170] sm:$0xff]
      %v1528 = vld [vmem:[%s67 + $0x178] sm:$0xff]
      %1529 = vmatpush.msra.mxu0 %v1496
      %1530 = vmatpush.msra.mxu0 %v1495
      %1531 = vmatpush.msra.mxu0 %v1494
      %1532 = vmatpush.msra.mxu0 %v1493
      %1533 = vmatpush.msra.mxu0 %v1492
      %1534 = vmatpush.msra.mxu0 %v1491
      %1535 = vmatpush.msra.mxu0 %v1490
      %1536 = vmatpush.msra.mxu0 %v1489
      %1537 = vmatpush.msra.mxu0 %v1488
      %1538 = vmatpush.msra.mxu0 %v1487
      %1539 = vmatpush.msra.mxu0 %v1486
      %1540 = vmatpush.msra.mxu0 %v1485
      %1541 = vmatpush.msra.mxu0 %v1484
      %1542 = vmatpush.msra.mxu0 %v1483
      %1543 = vmatpush.msra.mxu0 %v1482
      %1544 = vmatpush.msra.mxu0 %v1481
      %1545 = vmatmul.f32.gmra.mxu0 %v1439
      %v1546 = vpop.f32.mrf.mxu0
      %v1547 = vadd.f32 0.0, %v1546
      %1548 = vdwg.mxu0
      %1549 = vmatpush.msra.mxu0 %v1512
      %1550 = vmatpush.msra.mxu0 %v1511
      %1551 = vmatpush.msra.mxu0 %v1510
      %1552 = vmatpush.msra.mxu0 %v1509
      %1553 = vmatpush.msra.mxu0 %v1508
      %1554 = vmatpush.msra.mxu0 %v1507
      %1555 = vmatpush.msra.mxu0 %v1506
      %1556 = vmatpush.msra.mxu0 %v1505
      %1557 = vmatpush.msra.mxu0 %v1504
      %1558 = vmatpush.msra.mxu0 %v1503
      %1559 = vmatpush.msra.mxu0 %v1502
      %1560 = vmatpush.msra.mxu0 %v1501
      %1561 = vmatpush.msra.mxu0 %v1500
      %1562 = vmatpush.msra.mxu0 %v1499
      %1563 = vmatpush.msra.mxu0 %v1498
      %1564 = vmatpush.msra.mxu0 %v1497
      %1565 = vmatmul.f32.gmra.mxu0 %v1459
      %v1566 = vpop.f32.mrf.mxu0
      %v1567 = vadd.f32 %v1547, %v1566
      %1568 = vdwg.mxu0
      %1569 = vmatpush.msra.mxu0 %v1528
      %1570 = vmatpush.msra.mxu0 %v1527
      %1571 = vmatpush.msra.mxu0 %v1526
      %1572 = vmatpush.msra.mxu0 %v1525
      %1573 = vmatpush.msra.mxu0 %v1524
      %1574 = vmatpush.msra.mxu0 %v1523
      %1575 = vmatpush.msra.mxu0 %v1522
      %1576 = vmatpush.msra.mxu0 %v1521
      %1577 = vmatpush.msra.mxu0 %v1520
      %1578 = vmatpush.msra.mxu0 %v1519
      %1579 = vmatpush.msra.mxu0 %v1518
      %1580 = vmatpush.msra.mxu0 %v1517
      %1581 = vmatpush.msra.mxu0 %v1516
      %1582 = vmatpush.msra.mxu0 %v1515
      %1583 = vmatpush.msra.mxu0 %v1514
      %1584 = vmatpush.msra.mxu0 %v1513
      %1585 = vmatmul.f32.gmra.mxu0 %v1479
      %v1586 = vpop.f32.mrf.mxu0
      %v1587 = vadd.f32 %v1567, %v1586
      %1588 = vdwg.mxu0
      %v1589 = vld [vmem:[%s21] sm:$0xff]
      %1591 = vset.pattern.permute.xlu0 0
      %1592 = vperm.xlu0 %1591, %v1589
      %v1593 = vpop.permute.xlu0 %1592
      %v1595 = vmul.f32 %v1587, %v1593
      %v1596 = vld [vmem:[%s15] sm:$0xff]
      %1598 = vset.pattern.permute.xlu0 0
      %1599 = vperm.xlu0 %1598, %v1596
      %v1600 = vpop.permute.xlu0 %1599
      %v1602 = vadd.f32 %v1595, %v1600
      %v1603 = vmax.f32 %v1602, 0.0
      %v1605 = vperm.slane %v1075, 0
      %v1607 = vmul.f32 %v1603, %v1605
      %1608 = vrot.lane.b32.xlu0 %v1607, 11
      %v1609 = vpop.permute.xlu0 %1608
      %1610 = vrot.lane.b32.xlu0 %v1607, 10
      %v1611 = vpop.permute.xlu0 %1610
      %1612 = vrot.lane.b32.xlu0 %v1607, 9
      %v1613 = vpop.permute.xlu0 %1612
      %1614 = vrot.lane.b32.xlu0 %v1607, 1
      %v1615 = vpop.permute.xlu0 %1614
      %1616 = vrot.lane.b32.xlu0 %v1607, 127
      %v1617 = vpop.permute.xlu0 %1616
      %1618 = vrot.lane.b32.xlu0 %v1607, 119
      %v1619 = vpop.permute.xlu0 %1618
      %1620 = vrot.lane.b32.xlu0 %v1607, 118
      %v1621 = vpop.permute.xlu0 %1620
      %1622 = vrot.lane.b32.xlu0 %v1607, 117
      %v1623 = vpop.permute.xlu0 %1622
      %v1624 = vld [vmem:[%s29] sm:$0xff]
      %v1626 = vsel %vm1159, %v1624, 0
      %1628 = vmatpush.msra.mxu0 0.0
      %1629 = vmatpush.msra.mxu0 0.0
      %1630 = vmatpush.msra.mxu0 0.0
      %1631 = vmatpush.msra.mxu0 0.0
      %1632 = vmatpush.msra.mxu0 0.0
      %1633 = vmatpush.msra.mxu0 0.0
      %1634 = vmatpush.msra.mxu0 0.0
      %1635 = vmatpush.msra.mxu0 %v1623
      %1636 = vmatpush.msra.mxu0 %v1621
      %1637 = vmatpush.msra.mxu0 %v1619
      %1638 = vmatpush.msra.mxu0 %v1617
      %1639 = vmatpush.msra.mxu0 %v1607
      %1640 = vmatpush.msra.mxu0 %v1615
      %1641 = vmatpush.msra.mxu0 %v1613
      %1642 = vmatpush.msra.mxu0 %v1611
      %1643 = vmatpush.msra.mxu0 %v1609
      %1644 = vmatmul.f32.gmra.mxu0 %v1626
      %v1645 = vpop.f32.mrf.mxu0
      %v1646 = vadd.f32 0.0, %v1645
      %1647 = vdwg.mxu0
      %v1648 = vld [vmem:[%s31] sm:$0xff]
      %vm1649 = vcmask 64512
      %v1651 = vsel %vm1649, %v1648, 0
      %1653 = vmatpush.msra.mxu0 0.0
      %1654 = vmatpush.msra.mxu0 0.0
      %1655 = vmatpush.msra.mxu0 0.0
      %1656 = vmatpush.msra.mxu0 0.0
      %1657 = vmatpush.msra.mxu0 0.0
      %1658 = vmatpush.msra.mxu0 0.0
      %1659 = vmatpush.msra.mxu0 0.0
      %1660 = vmatpush.msra.mxu0 0.0
      %1661 = vmatpush.msra.mxu0 0.0
      %1662 = vmatpush.msra.mxu0 0.0
      %1663 = vmatpush.msra.mxu0 0.0
      %1664 = vmatpush.msra.mxu0 0.0
      %1665 = vmatpush.msra.mxu0 0.0
      %1666 = vmatpush.msra.mxu0 0.0
      %1667 = vmatpush.msra.mxu0 0.0
      %1668 = vmatpush.msra.mxu0 %v1071
      %1669 = vmatmul.f32.gmra.mxu0 %v1651
      %v1670 = vpop.f32.mrf.mxu0
      %v1671 = vadd.f32 0.0, %v1670
      %1672 = vdwg.mxu0
      %1673 = vmatpush.msra.mxu0 0.0
      %1674 = vmatpush.msra.mxu0 0.0
      %1675 = vmatpush.msra.mxu0 0.0
      %1676 = vmatpush.msra.mxu0 0.0
      %1677 = vmatpush.msra.mxu0 0.0
      %1678 = vmatpush.msra.mxu0 0.0
      %1679 = vmatpush.msra.mxu0 0.0
      %1680 = vmatpush.msra.mxu0 0.0
      %1681 = vmatpush.msra.mxu0 0.0
      %1682 = vmatpush.msra.mxu0 0.0
      %1683 = vmatpush.msra.mxu0 0.0
      %1684 = vmatpush.msra.mxu0 0.0
      %1685 = vmatpush.msra.mxu0 0.0
      %1686 = vmatpush.msra.mxu0 0.0
      %1687 = vmatpush.msra.mxu0 0.0
      %1688 = vmatpush.msra.mxu0 %v1072
      %1689 = vmatmul.f32.gmra.mxu0 %v1651
      %v1690 = vpop.f32.mrf.mxu0
      %v1691 = vadd.f32 0.0, %v1690
      %1692 = vdwg.mxu0
      %1693 = vmatpush.msra.mxu0 0.0
      %1694 = vmatpush.msra.mxu0 0.0
      %1695 = vmatpush.msra.mxu0 0.0
      %1696 = vmatpush.msra.mxu0 0.0
      %1697 = vmatpush.msra.mxu0 0.0
      %1698 = vmatpush.msra.mxu0 0.0
      %1699 = vmatpush.msra.mxu0 0.0
      %1700 = vmatpush.msra.mxu0 0.0
      %1701 = vmatpush.msra.mxu0 0.0
      %1702 = vmatpush.msra.mxu0 0.0
      %1703 = vmatpush.msra.mxu0 0.0
      %1704 = vmatpush.msra.mxu0 0.0
      %1705 = vmatpush.msra.mxu0 0.0
      %1706 = vmatpush.msra.mxu0 0.0
      %1707 = vmatpush.msra.mxu0 0.0
      %1708 = vmatpush.msra.mxu0 %v1073
      %1709 = vmatmul.f32.gmra.mxu0 %v1651
      %v1710 = vpop.f32.mrf.mxu0
      %v1711 = vadd.f32 0.0, %v1710
      %1712 = vdwg.mxu0
      %1713 = vmatpush.msra.mxu0 %v1496
      %1714 = vmatpush.msra.mxu0 %v1495
      %1715 = vmatpush.msra.mxu0 %v1494
      %1716 = vmatpush.msra.mxu0 %v1493
      %1717 = vmatpush.msra.mxu0 %v1492
      %1718 = vmatpush.msra.mxu0 %v1491
      %1719 = vmatpush.msra.mxu0 %v1490
      %1720 = vmatpush.msra.mxu0 %v1489
      %1721 = vmatpush.msra.mxu0 %v1488
      %1722 = vmatpush.msra.mxu0 %v1487
      %1723 = vmatpush.msra.mxu0 %v1486
      %1724 = vmatpush.msra.mxu0 %v1485
      %1725 = vmatpush.msra.mxu0 %v1484
      %1726 = vmatpush.msra.mxu0 %v1483
      %1727 = vmatpush.msra.mxu0 %v1482
      %1728 = vmatpush.msra.mxu0 %v1481
      %1729 = vmatmul.f32.gmra.mxu0 %v1671
      %v1730 = vpop.f32.mrf.mxu0
      %v1731 = vadd.f32 0.0, %v1730
      %1732 = vdwg.mxu0
      %1733 = vmatpush.msra.mxu0 %v1512
      %1734 = vmatpush.msra.mxu0 %v1511
      %1735 = vmatpush.msra.mxu0 %v1510
      %1736 = vmatpush.msra.mxu0 %v1509
      %1737 = vmatpush.msra.mxu0 %v1508
      %1738 = vmatpush.msra.mxu0 %v1507
      %1739 = vmatpush.msra.mxu0 %v1506
      %1740 = vmatpush.msra.mxu0 %v1505
      %1741 = vmatpush.msra.mxu0 %v1504
      %1742 = vmatpush.msra.mxu0 %v1503
      %1743 = vmatpush.msra.mxu0 %v1502
      %1744 = vmatpush.msra.mxu0 %v1501
      %1745 = vmatpush.msra.mxu0 %v1500
      %1746 = vmatpush.msra.mxu0 %v1499
      %1747 = vmatpush.msra.mxu0 %v1498
      %1748 = vmatpush.msra.mxu0 %v1497
      %1749 = vmatmul.f32.gmra.mxu0 %v1691
      %v1750 = vpop.f32.mrf.mxu0
      %v1751 = vadd.f32 %v1731, %v1750
      %1752 = vdwg.mxu0
      %1753 = vmatpush.msra.mxu0 %v1528
      %1754 = vmatpush.msra.mxu0 %v1527
      %1755 = vmatpush.msra.mxu0 %v1526
      %1756 = vmatpush.msra.mxu0 %v1525
      %1757 = vmatpush.msra.mxu0 %v1524
      %1758 = vmatpush.msra.mxu0 %v1523
      %1759 = vmatpush.msra.mxu0 %v1522
      %1760 = vmatpush.msra.mxu0 %v1521
      %1761 = vmatpush.msra.mxu0 %v1520
      %1762 = vmatpush.msra.mxu0 %v1519
      %1763 = vmatpush.msra.mxu0 %v1518
      %1764 = vmatpush.msra.mxu0 %v1517
      %1765 = vmatpush.msra.mxu0 %v1516
      %1766 = vmatpush.msra.mxu0 %v1515
      %1767 = vmatpush.msra.mxu0 %v1514
      %1768 = vmatpush.msra.mxu0 %v1513
      %1769 = vmatmul.f32.gmra.mxu0 %v1711
      %v1770 = vpop.f32.mrf.mxu0
      %v1771 = vadd.f32 %v1751, %v1770
      %1772 = vdwg.mxu0
      %v1773 = vld [vmem:[%s25] sm:$0xff]
      %1775 = vset.pattern.permute.xlu0 0
      %1776 = vperm.xlu0 %1775, %v1773
      %v1777 = vpop.permute.xlu0 %1776
      %v1779 = vmul.f32 %v1771, %v1777
      %v1780 = vld [vmem:[%s19] sm:$0xff]
      %1782 = vset.pattern.permute.xlu0 0
      %1783 = vperm.xlu0 %1782, %v1780
      %v1784 = vpop.permute.xlu0 %1783
      %v1786 = vadd.f32 %v1779, %v1784
      %v1787 = vld [vmem:[%s23] sm:$0xff]
      %1789 = vset.pattern.permute.xlu0 0
      %1790 = vperm.xlu0 %1789, %v1787
      %v1791 = vpop.permute.xlu0 %1790
      %v1793 = vmul.f32 %v1646, %v1791
      %v1794 = vld [vmem:[%s17] sm:$0xff]
      %1796 = vset.pattern.permute.xlu0 0
      %1797 = vperm.xlu0 %1796, %v1794
      %v1798 = vpop.permute.xlu0 %1797
      %v1800 = vadd.f32 %v1793, %v1798
      %v1801 = vadd.f32 %v1800, %v1786
      %v1802 = vmax.f32 %v1801, 0.0
      %v1803 = vmul.f32 %v1802, %v1605
      %1804 = vrot.lane.b32.xlu0 %v1803, 11
      %v1805 = vpop.permute.xlu0 %1804
      %1806 = vrot.lane.b32.xlu0 %v1803, 10
      %v1807 = vpop.permute.xlu0 %1806
      %1808 = vrot.lane.b32.xlu0 %v1803, 9
      %v1809 = vpop.permute.xlu0 %1808
      %1810 = vrot.lane.b32.xlu0 %v1803, 1
      %v1811 = vpop.permute.xlu0 %1810
      %1812 = vrot.lane.b32.xlu0 %v1803, 127
      %v1813 = vpop.permute.xlu0 %1812
      %1814 = vrot.lane.b32.xlu0 %v1803, 119
      %v1815 = vpop.permute.xlu0 %1814
      %1816 = vrot.lane.b32.xlu0 %v1803, 118
      %v1817 = vpop.permute.xlu0 %1816
      %1818 = vrot.lane.b32.xlu0 %v1803, 117
      %v1819 = vpop.permute.xlu0 %1818
      %v1820 = vld [vmem:[%s41] sm:$0xff]
      %v1822 = vsel %vm1159, %v1820, 0
      %1824 = vmatpush.msra.mxu0 0.0
      %1825 = vmatpush.msra.mxu0 0.0
      %1826 = vmatpush.msra.mxu0 0.0
      %1827 = vmatpush.msra.mxu0 0.0
      %1828 = vmatpush.msra.mxu0 0.0
      %1829 = vmatpush.msra.mxu0 0.0
      %1830 = vmatpush.msra.mxu0 0.0
      %1831 = vmatpush.msra.mxu0 %v1819
      %1832 = vmatpush.msra.mxu0 %v1817
      %1833 = vmatpush.msra.mxu0 %v1815
      %1834 = vmatpush.msra.mxu0 %v1813
      %1835 = vmatpush.msra.mxu0 %v1803
      %1836 = vmatpush.msra.mxu0 %v1811
      %1837 = vmatpush.msra.mxu0 %v1809
      %1838 = vmatpush.msra.mxu0 %v1807
      %1839 = vmatpush.msra.mxu0 %v1805
      %1840 = vmatmul.f32.gmra.mxu0 %v1822
      %v1841 = vpop.f32.mrf.mxu0
      %v1842 = vadd.f32 0.0, %v1841
      %1843 = vdwg.mxu0
      %v1844 = vld [vmem:[%s37] sm:$0xff]
      %1846 = vset.pattern.permute.xlu0 0
      %1847 = vperm.xlu0 %1846, %v1844
      %v1848 = vpop.permute.xlu0 %1847
      %v1850 = vmul.f32 %v1842, %v1848
      %v1851 = vld [vmem:[%s33] sm:$0xff]
      %1853 = vset.pattern.permute.xlu0 0
      %1854 = vperm.xlu0 %1853, %v1851
      %v1855 = vpop.permute.xlu0 %1854
      %v1857 = vadd.f32 %v1850, %v1855
      %v1858 = vmax.f32 %v1857, 0.0
      %v1859 = vmul.f32 %v1858, %v1605
      %1860 = vrot.lane.b32.xlu0 %v1859, 11
      %v1861 = vpop.permute.xlu0 %1860
      %1862 = vrot.lane.b32.xlu0 %v1859, 10
      %v1863 = vpop.permute.xlu0 %1862
      %1864 = vrot.lane.b32.xlu0 %v1859, 9
      %v1865 = vpop.permute.xlu0 %1864
      %1866 = vrot.lane.b32.xlu0 %v1859, 1
      %v1867 = vpop.permute.xlu0 %1866
      %1868 = vrot.lane.b32.xlu0 %v1859, 127
      %v1869 = vpop.permute.xlu0 %1868
      %1870 = vrot.lane.b32.xlu0 %v1859, 119
      %v1871 = vpop.permute.xlu0 %1870
      %1872 = vrot.lane.b32.xlu0 %v1859, 118
      %v1873 = vpop.permute.xlu0 %1872
      %1874 = vrot.lane.b32.xlu0 %v1859, 117
      %v1875 = vpop.permute.xlu0 %1874
      %v1876 = vld [vmem:[%s43] sm:$0xff]
      %v1878 = vsel %vm1159, %v1876, 0
      %1880 = vmatpush.msra.mxu0 0.0
      %1881 = vmatpush.msra.mxu0 0.0
      %1882 = vmatpush.msra.mxu0 0.0
      %1883 = vmatpush.msra.mxu0 0.0
      %1884 = vmatpush.msra.mxu0 0.0
      %1885 = vmatpush.msra.mxu0 0.0
      %1886 = vmatpush.msra.mxu0 0.0
      %1887 = vmatpush.msra.mxu0 %v1875
      %1888 = vmatpush.msra.mxu0 %v1873
      %1889 = vmatpush.msra.mxu0 %v1871
      %1890 = vmatpush.msra.mxu0 %v1869
      %1891 = vmatpush.msra.mxu0 %v1859
      %1892 = vmatpush.msra.mxu0 %v1867
      %1893 = vmatpush.msra.mxu0 %v1865
      %1894 = vmatpush.msra.mxu0 %v1863
      %1895 = vmatpush.msra.mxu0 %v1861
      %1896 = vmatmul.f32.gmra.mxu0 %v1878
      %v1897 = vpop.f32.mrf.mxu0
      %v1898 = vadd.f32 0.0, %v1897
      %1899 = vdwg.mxu0
      %v1900 = vld [vmem:[%s39] sm:$0xff]
      %1902 = vset.pattern.permute.xlu0 0
      %1903 = vperm.xlu0 %1902, %v1900
      %v1904 = vpop.permute.xlu0 %1903
      %v1906 = vmul.f32 %v1898, %v1904
      %v1907 = vld [vmem:[%s35] sm:$0xff]
      %1909 = vset.pattern.permute.xlu0 0
      %1910 = vperm.xlu0 %1909, %v1907
      %v1911 = vpop.permute.xlu0 %1910
      %v1913 = vadd.f32 %v1906, %v1911
      %v1914 = vadd.f32 %v1913, %v1803
      %v1915 = vmax.f32 %v1914, 0.0
      %v1916 = vmul.f32 %v1915, %v1605
      %1917 = vrot.lane.b32.xlu0 %v1916, 11
      %v1918 = vpop.permute.xlu0 %1917
      %1919 = vrot.lane.b32.xlu0 %v1916, 10
      %v1920 = vpop.permute.xlu0 %1919
      %1921 = vrot.lane.b32.xlu0 %v1916, 9
      %v1922 = vpop.permute.xlu0 %1921
      %1923 = vrot.lane.b32.xlu0 %v1916, 1
      %v1924 = vpop.permute.xlu0 %1923
      %1925 = vrot.lane.b32.xlu0 %v1916, 127
      %v1926 = vpop.permute.xlu0 %1925
      %1927 = vrot.lane.b32.xlu0 %v1916, 119
      %v1928 = vpop.permute.xlu0 %1927
      %1929 = vrot.lane.b32.xlu0 %v1916, 118
      %v1930 = vpop.permute.xlu0 %1929
      %1931 = vrot.lane.b32.xlu0 %v1916, 117
      %v1932 = vpop.permute.xlu0 %1931
      %v1933 = vld [vmem:[%s57] sm:$0xff]
      %v1935 = vsel %vm1159, %v1933, 0
      %1937 = vmatpush.msra.mxu0 0.0
      %1938 = vmatpush.msra.mxu0 0.0
      %1939 = vmatpush.msra.mxu0 0.0
      %1940 = vmatpush.msra.mxu0 0.0
      %1941 = vmatpush.msra.mxu0 0.0
      %1942 = vmatpush.msra.mxu0 0.0
      %1943 = vmatpush.msra.mxu0 0.0
      %1944 = vmatpush.msra.mxu0 %v1932
      %1945 = vmatpush.msra.mxu0 %v1930
      %1946 = vmatpush.msra.mxu0 %v1928
      %1947 = vmatpush.msra.mxu0 %v1926
      %1948 = vmatpush.msra.mxu0 %v1916
      %1949 = vmatpush.msra.mxu0 %v1924
      %1950 = vmatpush.msra.mxu0 %v1922
      %1951 = vmatpush.msra.mxu0 %v1920
      %1952 = vmatpush.msra.mxu0 %v1918
      %1953 = vmatmul.f32.gmra.mxu0 %v1935
      %v1954 = vpop.f32.mrf.mxu0
      %v1955 = vadd.f32 0.0, %v1954
      %1956 = vdwg.mxu0
      %v1957 = vld [vmem:[%s51] sm:$0xff]
      %1959 = vset.pattern.permute.xlu0 0
      %1960 = vperm.xlu0 %1959, %v1957
      %v1961 = vpop.permute.xlu0 %1960
      %v1963 = vmul.f32 %v1955, %v1961
      %v1964 = vld [vmem:[%s45] sm:$0xff]
      %1966 = vset.pattern.permute.xlu0 0
      %1967 = vperm.xlu0 %1966, %v1964
      %v1968 = vpop.permute.xlu0 %1967
      %v1970 = vadd.f32 %v1963, %v1968
      %v1971 = vmax.f32 %v1970, 0.0
      %v1972 = vmul.f32 %v1971, %v1605
      %1973 = vrot.lane.b32.xlu0 %v1972, 11
      %v1974 = vpop.permute.xlu0 %1973
      %1975 = vrot.lane.b32.xlu0 %v1972, 10
      %v1976 = vpop.permute.xlu0 %1975
      %1977 = vrot.lane.b32.xlu0 %v1972, 9
      %v1978 = vpop.permute.xlu0 %1977
      %1979 = vrot.lane.b32.xlu0 %v1972, 1
      %v1980 = vpop.permute.xlu0 %1979
      %1981 = vrot.lane.b32.xlu0 %v1972, 127
      %v1982 = vpop.permute.xlu0 %1981
      %1983 = vrot.lane.b32.xlu0 %v1972, 119
      %v1984 = vpop.permute.xlu0 %1983
      %1985 = vrot.lane.b32.xlu0 %v1972, 118
      %v1986 = vpop.permute.xlu0 %1985
      %1987 = vrot.lane.b32.xlu0 %v1972, 117
      %v1988 = vpop.permute.xlu0 %1987
      %v1989 = vld [vmem:[%s59] sm:$0xff]
      %v1991 = vsel %vm1159, %v1989, 0
      %1993 = vmatpush.msra.mxu0 0.0
      %1994 = vmatpush.msra.mxu0 0.0
      %1995 = vmatpush.msra.mxu0 0.0
      %1996 = vmatpush.msra.mxu0 0.0
      %1997 = vmatpush.msra.mxu0 0.0
      %1998 = vmatpush.msra.mxu0 0.0
      %1999 = vmatpush.msra.mxu0 0.0
      %2000 = vmatpush.msra.mxu0 %v1988
      %2001 = vmatpush.msra.mxu0 %v1986
      %2002 = vmatpush.msra.mxu0 %v1984
      %2003 = vmatpush.msra.mxu0 %v1982
      %2004 = vmatpush.msra.mxu0 %v1972
      %2005 = vmatpush.msra.mxu0 %v1980
      %2006 = vmatpush.msra.mxu0 %v1978
      %2007 = vmatpush.msra.mxu0 %v1976
      %2008 = vmatpush.msra.mxu0 %v1974
      %2009 = vmatmul.f32.gmra.mxu0 %v1991
      %v2010 = vpop.f32.mrf.mxu0
      %v2011 = vadd.f32 0.0, %v2010
      %2012 = vdwg.mxu0
      %v2013 = vld [vmem:[%s61] sm:$0xff]
      %v2015 = vsel %vm1649, %v2013, 0
      %2017 = vmatpush.msra.mxu0 0.0
      %2018 = vmatpush.msra.mxu0 0.0
      %2019 = vmatpush.msra.mxu0 0.0
      %2020 = vmatpush.msra.mxu0 0.0
      %2021 = vmatpush.msra.mxu0 0.0
      %2022 = vmatpush.msra.mxu0 0.0
      %2023 = vmatpush.msra.mxu0 0.0
      %2024 = vmatpush.msra.mxu0 0.0
      %2025 = vmatpush.msra.mxu0 0.0
      %2026 = vmatpush.msra.mxu0 0.0
      %2027 = vmatpush.msra.mxu0 0.0
      %2028 = vmatpush.msra.mxu0 0.0
      %2029 = vmatpush.msra.mxu0 0.0
      %2030 = vmatpush.msra.mxu0 0.0
      %2031 = vmatpush.msra.mxu0 0.0
      %2032 = vmatpush.msra.mxu0 %v1916
      %2033 = vmatmul.f32.gmra.mxu0 %v2015
      %v2034 = vpop.f32.mrf.mxu0
      %v2035 = vadd.f32 0.0, %v2034
      %2036 = vdwg.mxu0
      %v2037 = vld [vmem:[%s55] sm:$0xff]
      %2039 = vset.pattern.permute.xlu0 0
      %2040 = vperm.xlu0 %2039, %v2037
      %v2041 = vpop.permute.xlu0 %2040
      %v2043 = vmul.f32 %v2035, %v2041
      %v2044 = vld [vmem:[%s49] sm:$0xff]
      %2046 = vset.pattern.permute.xlu0 0
      %2047 = vperm.xlu0 %2046, %v2044
      %v2048 = vpop.permute.xlu0 %2047
      %v2050 = vadd.f32 %v2043, %v2048
      %v2051 = vld [vmem:[%s53] sm:$0xff]
      %2053 = vset.pattern.permute.xlu0 0
      %2054 = vperm.xlu0 %2053, %v2051
      %v2055 = vpop.permute.xlu0 %2054
      %v2057 = vmul.f32 %v2011, %v2055
      %v2058 = vld [vmem:[%s47] sm:$0xff]
      %2060 = vset.pattern.permute.xlu0 0
      %2061 = vperm.xlu0 %2060, %v2058
      %v2062 = vpop.permute.xlu0 %2061
      %v2064 = vadd.f32 %v2057, %v2062
      %v2065 = vadd.f32 %v2064, %v2050
      %v2066 = vmax.f32 %v2065, 0.0
      %v2067 = vmul.f32 %v2066, %v1605
      %v2068 = vld [vmem:[%s69] sm:$0xff]
      %v2069 = vld [vmem:[%s69 + $0x8] sm:$0xff]
      %v2070 = vld [vmem:[%s69 + $0x10] sm:$0xff]
      %v2071 = vld [vmem:[%s69 + $0x18] sm:$0xff]
      %v2072 = vld [vmem:[%s69 + $0x20] sm:$0xff]
      %v2073 = vld [vmem:[%s69 + $0x28] sm:$0xff]
      %v2074 = vld [vmem:[%s69 + $0x30] sm:$0xff]
      %v2075 = vld [vmem:[%s69 + $0x38] sm:$0xff]
      %v2076 = vld [vmem:[%s69 + $0x40] sm:$0xff]
      %v2077 = vld [vmem:[%s69 + $0x48] sm:$0xff]
      %v2078 = vld [vmem:[%s69 + $0x50] sm:$0xff]
      %v2079 = vld [vmem:[%s69 + $0x58] sm:$0xff]
      %v2080 = vld [vmem:[%s69 + $0x60] sm:$0xff]
      %v2081 = vld [vmem:[%s69 + $0x68] sm:$0xff]
      %v2082 = vld [vmem:[%s69 + $0x70] sm:$0xff]
      %v2083 = vld [vmem:[%s69 + $0x78] sm:$0xff]
      %v2084 = vld [vmem:[%s69 + $0x80] sm:$0xff]
      %v2085 = vld [vmem:[%s69 + $0x88] sm:$0xff]
      %v2086 = vld [vmem:[%s69 + $0x90] sm:$0xff]
      %v2087 = vld [vmem:[%s69 + $0x98] sm:$0xff]
      %v2088 = vld [vmem:[%s69 + $0xa0] sm:$0xff]
      %v2089 = vld [vmem:[%s69 + $0xa8] sm:$0xff]
      %v2090 = vld [vmem:[%s69 + $0xb0] sm:$0xff]
      %v2091 = vld [vmem:[%s69 + $0xb8] sm:$0xff]
      %v2092 = vld [vmem:[%s69 + $0xc0] sm:$0xff]
      %v2093 = vld [vmem:[%s69 + $0xc8] sm:$0xff]
      %v2094 = vld [vmem:[%s69 + $0xd0] sm:$0xff]
      %v2095 = vld [vmem:[%s69 + $0xd8] sm:$0xff]
      %v2096 = vld [vmem:[%s69 + $0xe0] sm:$0xff]
      %v2097 = vld [vmem:[%s69 + $0xe8] sm:$0xff]
      %v2098 = vld [vmem:[%s69 + $0xf0] sm:$0xff]
      %v2099 = vld [vmem:[%s69 + $0xf8] sm:$0xff]
      %v2100 = vld [vmem:[%s69 + $0x100] sm:$0xff]
      %v2101 = vld [vmem:[%s69 + $0x108] sm:$0xff]
      %v2102 = vld [vmem:[%s69 + $0x110] sm:$0xff]
      %v2103 = vld [vmem:[%s69 + $0x118] sm:$0xff]
      %v2104 = vld [vmem:[%s69 + $0x120] sm:$0xff]
      %v2105 = vld [vmem:[%s69 + $0x128] sm:$0xff]
      %v2106 = vld [vmem:[%s69 + $0x130] sm:$0xff]
      %v2107 = vld [vmem:[%s69 + $0x138] sm:$0xff]
      %v2108 = vld [vmem:[%s69 + $0x140] sm:$0xff]
      %v2109 = vld [vmem:[%s69 + $0x148] sm:$0xff]
      %v2110 = vld [vmem:[%s69 + $0x150] sm:$0xff]
      %v2111 = vld [vmem:[%s69 + $0x158] sm:$0xff]
      %v2112 = vld [vmem:[%s69 + $0x160] sm:$0xff]
      %v2113 = vld [vmem:[%s69 + $0x168] sm:$0xff]
      %v2114 = vld [vmem:[%s69 + $0x170] sm:$0xff]
      %v2115 = vld [vmem:[%s69 + $0x178] sm:$0xff]
      %2116 = vmatpush.msra.mxu0 %v2113
      %2117 = vmatpush.msra.mxu0 %v2110
      %2118 = vmatpush.msra.mxu0 %v2107
      %2119 = vmatpush.msra.mxu0 %v2104
      %2120 = vmatpush.msra.mxu0 %v2101
      %2121 = vmatpush.msra.mxu0 %v2098
      %2122 = vmatpush.msra.mxu0 %v2095
      %2123 = vmatpush.msra.mxu0 %v2092
      %2124 = vmatpush.msra.mxu0 %v2089
      %2125 = vmatpush.msra.mxu0 %v2086
      %2126 = vmatpush.msra.mxu0 %v2083
      %2127 = vmatpush.msra.mxu0 %v2080
      %2128 = vmatpush.msra.mxu0 %v2077
      %2129 = vmatpush.msra.mxu0 %v2074
      %2130 = vmatpush.msra.mxu0 %v2071
      %2131 = vmatpush.msra.mxu0 %v2068
      %2132 = vmatmul.f32.gmra.mxu0 %v2067
      %v2133 = vpop.f32.mrf.mxu0
      %v2134 = vadd.f32 0.0, %v2133
      %2135 = vdwg.mxu0
      %2136 = vmatpush.msra.mxu0 %v2114
      %2137 = vmatpush.msra.mxu0 %v2111
      %2138 = vmatpush.msra.mxu0 %v2108
      %2139 = vmatpush.msra.mxu0 %v2105
      %2140 = vmatpush.msra.mxu0 %v2102
      %2141 = vmatpush.msra.mxu0 %v2099
      %2142 = vmatpush.msra.mxu0 %v2096
      %2143 = vmatpush.msra.mxu0 %v2093
      %2144 = vmatpush.msra.mxu0 %v2090
      %2145 = vmatpush.msra.mxu0 %v2087
      %2146 = vmatpush.msra.mxu0 %v2084
      %2147 = vmatpush.msra.mxu0 %v2081
      %2148 = vmatpush.msra.mxu0 %v2078
      %2149 = vmatpush.msra.mxu0 %v2075
      %2150 = vmatpush.msra.mxu0 %v2072
      %2151 = vmatpush.msra.mxu0 %v2069
      %2152 = vmatmul.f32.gmra.mxu0 %v2067
      %v2153 = vpop.f32.mrf.mxu0
      %v2154 = vadd.f32 0.0, %v2153
      %2155 = vdwg.mxu0
      %2156 = vmatpush.msra.mxu0 %v2115
      %2157 = vmatpush.msra.mxu0 %v2112
      %2158 = vmatpush.msra.mxu0 %v2109
      %2159 = vmatpush.msra.mxu0 %v2106
      %2160 = vmatpush.msra.mxu0 %v2103
      %2161 = vmatpush.msra.mxu0 %v2100
      %2162 = vmatpush.msra.mxu0 %v2097
      %2163 = vmatpush.msra.mxu0 %v2094
      %2164 = vmatpush.msra.mxu0 %v2091
      %2165 = vmatpush.msra.mxu0 %v2088
      %2166 = vmatpush.msra.mxu0 %v2085
      %2167 = vmatpush.msra.mxu0 %v2082
      %2168 = vmatpush.msra.mxu0 %v2079
      %2169 = vmatpush.msra.mxu0 %v2076
      %2170 = vmatpush.msra.mxu0 %v2073
      %2171 = vmatpush.msra.mxu0 %v2070
      %2172 = vmatmul.f32.gmra.mxu0 %v2067
      %v2173 = vpop.f32.mrf.mxu0
      %v2174 = vadd.f32 0.0, %v2173
      %2175 = vdwg.mxu0
      %v2176 = vadd.f32 %v1414, %v2134
      %v2177 = vadd.f32 %v1415, %v2154
      %v2178 = vadd.f32 %v1416, %v2174
      %2179 = vst [vmem:[%s1070] sm:$0xff] %v2176
      %2180 = vst [vmem:[%s1070 + $0x8] sm:$0xff] %v2177
      %2181 = vst [vmem:[%s1070 + $0x10] sm:$0xff] %v2178
      %p2182 = scmp.lt.s32.totalorder %s82, 1
      %s2183 = scalar_select %p2182, %s82, 1
      %s2184 = smul.addr %s2183, 3
      %s2185 = smul.addr %s2184, 8
      %s2186 = scalar_lea.vmem %s71, %s2185
      // Predicated region
      $region161: #{hourglass_forward.1} parent=159 // pred_check
        %p2187 = pneg %p840
      $region162: #{hourglass_forward.1} parent=159 // pred_check_branch
        %2189 = sbr.rel (%p2187) target = $region164
      $region163: #{hourglass_forward.1} parent=159 // pred_region
        _
      $region164: #{hourglass_forward.1} parent=159 // pred_fallthru
        _
    $region160: #{hourglass_forward.1} parent=5 // pred_fallthru
      _
    %p2190 = scmp.le.s32.totalorder 2, %s77
    // Predicated region
    $region165: #{hourglass_forward.1} parent=5 // pred_check
      %p2191 = pneg %p2190
    $region166: #{hourglass_forward.1} parent=5 // pred_check_branch
      %2193 = sbr.rel (%p2191) target = $region168
    $region167: #{hourglass_forward.1} parent=5 // pred_region
      %s2194 = ssub.s32 %s77, 2
      // Predicated region
      $region169: #{hourglass_forward.1} parent=167 // pred_check
        %p2195 = pneg %p846
      $region170: #{hourglass_forward.1} parent=167 // pred_check_branch
        %2197 = sbr.rel (%p2195) target = $region172
      $region171: #{hourglass_forward.1} parent=167 // pred_region
        %p2198 = scmp.lt.s32.totalorder %s83, 1
        %s2199 = scalar_select %p2198, %s83, 1
        %s2200 = smul.addr %s2199, 3
        %s2201 = smul.addr %s2200, 8
        %s2202 = scalar_lea.vmem %s71, %s2201
      $region172: #{hourglass_forward.1} parent=167 // pred_fallthru
        _
    $region168: #{hourglass_forward.1} parent=5 // pred_fallthru
      _
  $region6: #{hourglass_forward.1} parent=0 // loop_footer
    %s81 = sadd.s32 1, %s77
  $region7: #{hourglass_forward.1} parent=0 // loop_footer_branch
    %76 = sbr.rel target = $region3
  $region8: #{hourglass_forward.1} parent=0 // loop_exit
    _

</llo_original>
